<compile_context>
chip_gen: v7x
topology: tpu7x:2x2x1
jax: 0.10.0
libtpu: 0.0.40
codegen_flags: <defaults>
</compile_context>

<pallas_src>
import jax
import jax.numpy as jnp
from jax.experimental import pallas as pl
from jax.experimental.pallas import tpu as pltpu

NUM_RES = 6
WIDTH = 256
IN_DIM = 2
OUT_DIM = 3
PE_DIM = 4 * NUM_RES + IN_DIM   # 26
PE_PAD = 32                     # PE features zero-padded to a clean K
OUT_PAD = 128                   # output padded to a full vreg lane width


def fcnet_kernel(x_ref, w1_ref, b1_ref, w2_ref, b2_ref, w3_ref, b3_ref,
                 wo_ref, bo_ref, o_ref):
    x = x_ref[...]                      # (tm, 2) float32

    # Positional encoding via the angle-doubling recurrence:
    #   sin(2a) = 2 sin(a) cos(a),  cos(2a) = 2 cos(a)^2 - 1
    # -> one sin/cos pair instead of NUM_RES of each (all on the EUP).
    s = jnp.sin(x)
    c = jnp.cos(x)
    feats = [x]
    for r in range(NUM_RES):
        feats.append(s)                 # sin(x * 2**r)
        feats.append(c)                 # cos(x * 2**r)
        if r + 1 < NUM_RES:
            s, c = 2.0 * s * c, 2.0 * c * c - 1.0
    # Zero-pad feature columns to PE_PAD; w1 rows are zero-padded to match.
    feats.append(jnp.zeros((x.shape[0], PE_PAD - PE_DIM), jnp.float32))
    h = jnp.concatenate(feats, axis=-1)  # (tm, PE_PAD) float32

    def linear(h, w_ref, b_ref):
        # bf16 operands, f32 accumulation on the MXU; bias add in f32.
        return jnp.dot(h.astype(jnp.bfloat16), w_ref[...],
                       preferred_element_type=jnp.float32) + b_ref[...]

    h = jnp.maximum(linear(h, w1_ref, b1_ref), 0.0)   # Linear(32->256) + ReLU
    h = jnp.maximum(linear(h, w2_ref, b2_ref), 0.0)   # Linear(256->256) + ReLU
    h = jnp.maximum(linear(h, w3_ref, b3_ref), 0.0)   # Linear(256->256) + ReLU
    o_ref[...] = jax.nn.sigmoid(linear(h, wo_ref, bo_ref))  # Linear(256->128pad)


def _choose_tm(n):
    # Big tiles amortize per-grid-step overhead; keep >= 2 grid steps when
    # possible so both v7x TensorCores get work.
    for tm in (2048, 1024, 512, 256, 128):
        if n % tm == 0 and n // tm >= 2:
            return tm
    if n % 128 == 0:
        return 128
    return n


def fcnet_forward(x, params, *, tm=None):
    N = x.shape[0]
    if tm is None:
        tm = _choose_tm(N)
    assert N % tm == 0, "batch must be a multiple of the row tile"
    w1, b1, w2, b2, w3, b3, wo, bo = params

    # bf16 matmul weights (zero-padded where needed); biases stay f32.
    w1p = jnp.zeros((PE_PAD, WIDTH), jnp.bfloat16)
    w1p = w1p.at[:PE_DIM, :].set(w1.astype(jnp.bfloat16))
    w2b = w2.astype(jnp.bfloat16)
    w3b = w3.astype(jnp.bfloat16)
    wop = jnp.zeros((WIDTH, OUT_PAD), jnp.bfloat16)
    wop = wop.at[:, :OUT_DIM].set(wo.astype(jnp.bfloat16))
    bop = jnp.zeros((1, OUT_PAD), jnp.float32).at[:, :OUT_DIM].set(bo)

    full = lambda a: pl.BlockSpec(a.shape, lambda i: (0, 0))
    out_pad = pl.pallas_call(
        fcnet_kernel,
        out_shape=jax.ShapeDtypeStruct((N, OUT_PAD), jnp.float32),
        grid_spec=pltpu.PrefetchScalarGridSpec(
            num_scalar_prefetch=0,
            grid=(N // tm,),
            in_specs=[
                pl.BlockSpec((tm, IN_DIM), lambda i: (i, 0)),
                full(w1p), full(b1),
                full(w2b), full(b2),
                full(w3b), full(b3),
                full(wop), full(bop),
            ],
            out_specs=pl.BlockSpec((tm, OUT_PAD), lambda i: (i, 0)),
        ),
        compiler_params=pltpu.CompilerParams(
            dimension_semantics=("parallel",),
            vmem_limit_bytes=48 * 1024 * 1024,
        ),
    )(x, w1p, b1, w2b, b2, w3b, b3, wop, bop)
    # Padded columns hold sigmoid(0) = 0.5; drop them here.
    return out_pad[:, :OUT_DIM]


def init_params(key):
    """Deterministic init mimicking PyTorch Linear default (U[-1/sqrt(fan_in), +])."""
    def linear(key, fan_in, fan_out):
        kw, kb = jax.random.split(key)
        bound = 1.0 / jnp.sqrt(fan_in)
        w = jax.random.uniform(kw, (fan_in, fan_out), jnp.float32, -bound, bound)
        b = jax.random.uniform(kb, (1, fan_out), jnp.float32, -bound, bound)
        return w, b

    k1, k2, k3, k4 = jax.random.split(key, 4)
    w1, b1 = linear(k1, PE_DIM, WIDTH)
    w2, b2 = linear(k2, WIDTH, WIDTH)
    w3, b3 = linear(k3, WIDTH, WIDTH)
    wo, bo = linear(k4, WIDTH, OUT_DIM)
    return (w1, b1, w2, b2, w3, b3, wo, bo)


def fcnet_ref(x, params):
    """Full-precision reference matching the PyTorch module exactly."""
    w1, b1, w2, b2, w3, b3, wo, bo = params
    feats = [x]
    for r in range(NUM_RES):
        feats.append(jnp.sin(x * 2.0 ** r))
        feats.append(jnp.cos(x * 2.0 ** r))
    h = jnp.concatenate(feats, axis=-1)
    h = jnp.maximum(h @ w1 + b1, 0.0)
    h = jnp.maximum(h @ w2 + b2, 0.0)
    h = jnp.maximum(h @ w3 + b3, 0.0)
    return jax.nn.sigmoid(h @ wo + bo)


if __name__ == "__main__":
    key = jax.random.PRNGKey(0)
    kx, kp = jax.random.split(key)

    N = 256  # number of 2-D input points (e.g. pixel coordinates)
    x = jax.random.uniform(kx, (N, IN_DIM), jnp.float32, -1.0, 1.0)
    params = init_params(kp)

    out = fcnet_forward(x, params)  # picks tm=128 -> 2 grid steps
    out = jax.block_until_ready(out)

    ref = fcnet_ref(x, params)
    assert out.shape == (N, OUT_DIM)
    # bf16 matmul operands + sin/cos doubling recurrence change numerics
    # slightly; sigmoid output is in [0, 1] so an absolute tolerance is apt.
    assert jnp.allclose(out, ref, atol=2e-2), float(jnp.max(jnp.abs(out - ref)))

    print("KERNEL_OK")
</pallas_src>

<mosaic_0001>
module attributes {stable_mosaic.version = 11 : i64} {
  func.func @fcnet_kernel(%arg0: i32, %arg1: memref<128x2xf32, #tpu.memory_space<vmem>>, %arg2: memref<32x256xbf16, #tpu.memory_space<vmem>>, %arg3: memref<1x256xf32, #tpu.memory_space<vmem>>, %arg4: memref<256x256xbf16, #tpu.memory_space<vmem>>, %arg5: memref<1x256xf32, #tpu.memory_space<vmem>>, %arg6: memref<256x256xbf16, #tpu.memory_space<vmem>>, %arg7: memref<1x256xf32, #tpu.memory_space<vmem>>, %arg8: memref<256x128xbf16, #tpu.memory_space<vmem>>, %arg9: memref<1x128xf32, #tpu.memory_space<vmem>>, %arg10: memref<128x128xf32, #tpu.memory_space<vmem>>) attributes {dimension_semantics = [#tpu.dimension_semantics<parallel>], iteration_bounds = array<i64: 2>, scalar_prefetch = 0 : i64, scratch_operands = 0 : i64, tpu.core_type = #tpu.core_type<tc>, window_params = [{transform_indices = @transform_0, window_bounds = array<i64: 128, 2>}, {pipeline_mode = #tpu.pipeline_mode<synchronous>, transform_indices = @transform_1, window_bounds = array<i64: 32, 256>}, {pipeline_mode = #tpu.pipeline_mode<synchronous>, transform_indices = @transform_2, window_bounds = array<i64: 1, 256>}, {pipeline_mode = #tpu.pipeline_mode<synchronous>, transform_indices = @transform_3, window_bounds = array<i64: 256, 256>}, {pipeline_mode = #tpu.pipeline_mode<synchronous>, transform_indices = @transform_4, window_bounds = array<i64: 1, 256>}, {pipeline_mode = #tpu.pipeline_mode<synchronous>, transform_indices = @transform_5, window_bounds = array<i64: 256, 256>}, {pipeline_mode = #tpu.pipeline_mode<synchronous>, transform_indices = @transform_6, window_bounds = array<i64: 1, 256>}, {pipeline_mode = #tpu.pipeline_mode<synchronous>, transform_indices = @transform_7, window_bounds = array<i64: 256, 128>}, {pipeline_mode = #tpu.pipeline_mode<synchronous>, transform_indices = @transform_8, window_bounds = array<i64: 1, 128>}, {transform_indices = @transform_9, window_bounds = array<i64: 128, 128>}]} {
    %c0 = arith.constant 0 : index
    %c0_0 = arith.constant 0 : index
    %0 = vector.load %arg1[%c0, %c0_0] : memref<128x2xf32, #tpu.memory_space<vmem>>, vector<128x2xf32>
    %1 = math.sin %0 : vector<128x2xf32>
    %2 = math.cos %0 : vector<128x2xf32>
    %cst = arith.constant 2.000000e+00 : f32
    %3 = vector.broadcast %cst : f32 to vector<128x2xf32>
    %4 = arith.mulf %3, %1 : vector<128x2xf32>
    %5 = arith.mulf %4, %2 : vector<128x2xf32>
    %cst_1 = arith.constant 2.000000e+00 : f32
    %6 = vector.broadcast %cst_1 : f32 to vector<128x2xf32>
    %7 = arith.mulf %6, %2 : vector<128x2xf32>
    %8 = arith.mulf %7, %2 : vector<128x2xf32>
    %cst_2 = arith.constant 1.000000e+00 : f32
    %9 = vector.broadcast %cst_2 : f32 to vector<128x2xf32>
    %10 = arith.subf %8, %9 : vector<128x2xf32>
    %cst_3 = arith.constant 2.000000e+00 : f32
    %11 = vector.broadcast %cst_3 : f32 to vector<128x2xf32>
    %12 = arith.mulf %11, %5 : vector<128x2xf32>
    %13 = arith.mulf %12, %10 : vector<128x2xf32>
    %cst_4 = arith.constant 2.000000e+00 : f32
    %14 = vector.broadcast %cst_4 : f32 to vector<128x2xf32>
    %15 = arith.mulf %14, %10 : vector<128x2xf32>
    %16 = arith.mulf %15, %10 : vector<128x2xf32>
    %cst_5 = arith.constant 1.000000e+00 : f32
    %17 = vector.broadcast %cst_5 : f32 to vector<128x2xf32>
    %18 = arith.subf %16, %17 : vector<128x2xf32>
    %cst_6 = arith.constant 2.000000e+00 : f32
    %19 = vector.broadcast %cst_6 : f32 to vector<128x2xf32>
    %20 = arith.mulf %19, %13 : vector<128x2xf32>
    %21 = arith.mulf %20, %18 : vector<128x2xf32>
    %cst_7 = arith.constant 2.000000e+00 : f32
    %22 = vector.broadcast %cst_7 : f32 to vector<128x2xf32>
    %23 = arith.mulf %22, %18 : vector<128x2xf32>
    %24 = arith.mulf %23, %18 : vector<128x2xf32>
    %cst_8 = arith.constant 1.000000e+00 : f32
    %25 = vector.broadcast %cst_8 : f32 to vector<128x2xf32>
    %26 = arith.subf %24, %25 : vector<128x2xf32>
    %cst_9 = arith.constant 2.000000e+00 : f32
    %27 = vector.broadcast %cst_9 : f32 to vector<128x2xf32>
    %28 = arith.mulf %27, %21 : vector<128x2xf32>
    %29 = arith.mulf %28, %26 : vector<128x2xf32>
    %cst_10 = arith.constant 2.000000e+00 : f32
    %30 = vector.broadcast %cst_10 : f32 to vector<128x2xf32>
    %31 = arith.mulf %30, %26 : vector<128x2xf32>
    %32 = arith.mulf %31, %26 : vector<128x2xf32>
    %cst_11 = arith.constant 1.000000e+00 : f32
    %33 = vector.broadcast %cst_11 : f32 to vector<128x2xf32>
    %34 = arith.subf %32, %33 : vector<128x2xf32>
    %cst_12 = arith.constant 2.000000e+00 : f32
    %35 = vector.broadcast %cst_12 : f32 to vector<128x2xf32>
    %36 = arith.mulf %35, %29 : vector<128x2xf32>
    %37 = arith.mulf %36, %34 : vector<128x2xf32>
    %cst_13 = arith.constant 2.000000e+00 : f32
    %38 = vector.broadcast %cst_13 : f32 to vector<128x2xf32>
    %39 = arith.mulf %38, %34 : vector<128x2xf32>
    %40 = arith.mulf %39, %34 : vector<128x2xf32>
    %cst_14 = arith.constant 1.000000e+00 : f32
    %41 = vector.broadcast %cst_14 : f32 to vector<128x2xf32>
    %42 = arith.subf %40, %41 : vector<128x2xf32>
    %cst_15 = arith.constant 0.000000e+00 : f32
    %43 = vector.broadcast %cst_15 : f32 to vector<128x6xf32>
    %44 = tpu.concatenate %0, %1, %2, %5, %10, %13, %18, %21, %26, %29, %34, %37, %42, %43 in 1 : vector<128x2xf32>, vector<128x2xf32>, vector<128x2xf32>, vector<128x2xf32>, vector<128x2xf32>, vector<128x2xf32>, vector<128x2xf32>, vector<128x2xf32>, vector<128x2xf32>, vector<128x2xf32>, vector<128x2xf32>, vector<128x2xf32>, vector<128x2xf32>, vector<128x6xf32> -> vector<128x32xf32>
    %45 = arith.truncf %44 : vector<128x32xf32> to vector<128x32xbf16>
    %c0_16 = arith.constant 0 : index
    %c0_17 = arith.constant 0 : index
    %46 = vector.load %arg2[%c0_16, %c0_17] : memref<32x256xbf16, #tpu.memory_space<vmem>>, vector<32x256xbf16>
    %cst_18 = arith.constant dense<0.000000e+00> : vector<128x256xf32>
    %47 = tpu.matmul %45, %46, %cst_18 {dimension_numbers = #tpu.dot_dimension_numbers<[1], [0], [0], [1], [0, 0, 1, 1], [], []>} : vector<128x32xbf16>, vector<32x256xbf16>, vector<128x256xf32> -> vector<128x256xf32>
    %c0_19 = arith.constant 0 : index
    %c0_20 = arith.constant 0 : index
    %48 = vector.load %arg3[%c0_19, %c0_20] : memref<1x256xf32, #tpu.memory_space<vmem>>, vector<1x256xf32>
    %49 = vector.broadcast %48 : vector<1x256xf32> to vector<128x256xf32>
    %50 = arith.addf %47, %49 : vector<128x256xf32>
    %cst_21 = arith.constant 0.000000e+00 : f32
    %51 = vector.broadcast %cst_21 : f32 to vector<128x256xf32>
    %52 = arith.maximumf %50, %51 : vector<128x256xf32>
    %53 = arith.truncf %52 : vector<128x256xf32> to vector<128x256xbf16>
    %c0_22 = arith.constant 0 : index
    %c0_23 = arith.constant 0 : index
    %54 = vector.load %arg4[%c0_22, %c0_23] : memref<256x256xbf16, #tpu.memory_space<vmem>>, vector<256x256xbf16>
    %cst_24 = arith.constant dense<0.000000e+00> : vector<128x256xf32>
    %55 = tpu.matmul %53, %54, %cst_24 {dimension_numbers = #tpu.dot_dimension_numbers<[1], [0], [0], [1], [0, 0, 1, 1], [], []>} : vector<128x256xbf16>, vector<256x256xbf16>, vector<128x256xf32> -> vector<128x256xf32>
    %c0_25 = arith.constant 0 : index
    %c0_26 = arith.constant 0 : index
    %56 = vector.load %arg5[%c0_25, %c0_26] : memref<1x256xf32, #tpu.memory_space<vmem>>, vector<1x256xf32>
    %57 = vector.broadcast %56 : vector<1x256xf32> to vector<128x256xf32>
    %58 = arith.addf %55, %57 : vector<128x256xf32>
    %cst_27 = arith.constant 0.000000e+00 : f32
    %59 = vector.broadcast %cst_27 : f32 to vector<128x256xf32>
    %60 = arith.maximumf %58, %59 : vector<128x256xf32>
    %61 = arith.truncf %60 : vector<128x256xf32> to vector<128x256xbf16>
    %c0_28 = arith.constant 0 : index
    %c0_29 = arith.constant 0 : index
    %62 = vector.load %arg6[%c0_28, %c0_29] : memref<256x256xbf16, #tpu.memory_space<vmem>>, vector<256x256xbf16>
    %cst_30 = arith.constant dense<0.000000e+00> : vector<128x256xf32>
    %63 = tpu.matmul %61, %62, %cst_30 {dimension_numbers = #tpu.dot_dimension_numbers<[1], [0], [0], [1], [0, 0, 1, 1], [], []>} : vector<128x256xbf16>, vector<256x256xbf16>, vector<128x256xf32> -> vector<128x256xf32>
    %c0_31 = arith.constant 0 : index
    %c0_32 = arith.constant 0 : index
    %64 = vector.load %arg7[%c0_31, %c0_32] : memref<1x256xf32, #tpu.memory_space<vmem>>, vector<1x256xf32>
    %65 = vector.broadcast %64 : vector<1x256xf32> to vector<128x256xf32>
    %66 = arith.addf %63, %65 : vector<128x256xf32>
    %cst_33 = arith.constant 0.000000e+00 : f32
    %67 = vector.broadcast %cst_33 : f32 to vector<128x256xf32>
    %68 = arith.maximumf %66, %67 : vector<128x256xf32>
    %69 = arith.truncf %68 : vector<128x256xf32> to vector<128x256xbf16>
    %c0_34 = arith.constant 0 : index
    %c0_35 = arith.constant 0 : index
    %70 = vector.load %arg8[%c0_34, %c0_35] : memref<256x128xbf16, #tpu.memory_space<vmem>>, vector<256x128xbf16>
    %cst_36 = arith.constant dense<0.000000e+00> : vector<128x128xf32>
    %71 = tpu.matmul %69, %70, %cst_36 {dimension_numbers = #tpu.dot_dimension_numbers<[1], [0], [0], [1], [0, 0, 1, 1], [], []>} : vector<128x256xbf16>, vector<256x128xbf16>, vector<128x128xf32> -> vector<128x128xf32>
    %c0_37 = arith.constant 0 : index
    %c0_38 = arith.constant 0 : index
    %72 = vector.load %arg9[%c0_37, %c0_38] : memref<1x128xf32, #tpu.memory_space<vmem>>, vector<1x128xf32>
    %73 = vector.broadcast %72 : vector<1x128xf32> to vector<128x128xf32>
    %74 = arith.addf %71, %73 : vector<128x128xf32>
    %75 = arith.negf %74 : vector<128x128xf32>
    %76 = math.exp %75 : vector<128x128xf32>
    %cst_39 = arith.constant 1.000000e+00 : f32
    %77 = vector.broadcast %cst_39 : f32 to vector<128x128xf32>
    %78 = arith.addf %77, %76 : vector<128x128xf32>
    %79 = arith.divf %77, %78 : vector<128x128xf32>
    %c0_40 = arith.constant 0 : index
    %c0_41 = arith.constant 0 : index
    %80 = vector.load %arg10[%c0_40, %c0_41] : memref<128x128xf32, #tpu.memory_space<vmem>>, vector<128x128xf32>
    tpu.vector_store %arg10[%c0_40, %c0_41], %79 {strides = array<i32>} : memref<128x128xf32, #tpu.memory_space<vmem>>, vector<128x128xf32>,
    return
  }
  func.func @transform_0(%arg0: i32) -> (i32, i32) {
    %c0_i32 = arith.constant 0 : i32
    %c0_i32_0 = arith.constant 0 : i32
    return %arg0, %c0_i32 : i32, i32
  }
  func.func @transform_1(%arg0: i32) -> (i32, i32) {
    %c0_i32 = arith.constant 0 : i32
    %c0_i32_0 = arith.constant 0 : i32
    %c0_i32_1 = arith.constant 0 : i32
    return %c0_i32, %c0_i32_0 : i32, i32
  }
  func.func @transform_2(%arg0: i32) -> (i32, i32) {
    %c0_i32 = arith.constant 0 : i32
    %c0_i32_0 = arith.constant 0 : i32
    %c0_i32_1 = arith.constant 0 : i32
    return %c0_i32, %c0_i32_0 : i32, i32
  }
  func.func @transform_3(%arg0: i32) -> (i32, i32) {
    %c0_i32 = arith.constant 0 : i32
    %c0_i32_0 = arith.constant 0 : i32
    %c0_i32_1 = arith.constant 0 : i32
    return %c0_i32, %c0_i32_0 : i32, i32
  }
  func.func @transform_4(%arg0: i32) -> (i32, i32) {
    %c0_i32 = arith.constant 0 : i32
    %c0_i32_0 = arith.constant 0 : i32
    %c0_i32_1 = arith.constant 0 : i32
    return %c0_i32, %c0_i32_0 : i32, i32
  }
  func.func @transform_5(%arg0: i32) -> (i32, i32) {
    %c0_i32 = arith.constant 0 : i32
    %c0_i32_0 = arith.constant 0 : i32
    %c0_i32_1 = arith.constant 0 : i32
    return %c0_i32, %c0_i32_0 : i32, i32
  }
  func.func @transform_6(%arg0: i32) -> (i32, i32) {
    %c0_i32 = arith.constant 0 : i32
    %c0_i32_0 = arith.constant 0 : i32
    %c0_i32_1 = arith.constant 0 : i32
    return %c0_i32, %c0_i32_0 : i32, i32
  }
  func.func @transform_7(%arg0: i32) -> (i32, i32) {
    %c0_i32 = arith.constant 0 : i32
    %c0_i32_0 = arith.constant 0 : i32
    %c0_i32_1 = arith.constant 0 : i32
    return %c0_i32, %c0_i32_0 : i32, i32
  }
  func.func @transform_8(%arg0: i32) -> (i32, i32) {
    %c0_i32 = arith.constant 0 : i32
    %c0_i32_0 = arith.constant 0 : i32
    %c0_i32_1 = arith.constant 0 : i32
    return %c0_i32, %c0_i32_0 : i32, i32
  }
  func.func @transform_9(%arg0: i32) -> (i32, i32) {
    %c0_i32 = arith.constant 0 : i32
    %c0_i32_0 = arith.constant 0 : i32
    return %arg0, %c0_i32 : i32, i32
  }
}

</mosaic_0001>

<llo_original>
// kernel: tpu_custom_call.1
$region0: #{tpu_custom_call.1}
  #allocation0 [shape = 'u32[]', space=smem, size = 0x4, offset = 0x4, fixed_abs, tag = 'smem constant byte address 0x4 - core index']
  #allocation1 [shape = 'u32[144,128]{1,0:T(1,128)}', space=vmem, size = 0x12000, scoped, tag = 'internal scratch']
  %s0 = inlined_call_operand.vmem [shape: f32[256,2], index: 0, kind: input, shape index: {}]
  %s1 = inlined_call_operand.hbm [shape: bf16[32,256], index: 1, kind: input, shape index: {}]
  %s2 = inlined_call_operand.vmem [shape: f32[1,256], index: 2, kind: input, shape index: {}]
  %s3 = inlined_call_operand.vmem [shape: bf16[256,256], index: 3, kind: input, shape index: {}]
  %s4 = inlined_call_operand.vmem [shape: f32[1,256], index: 4, kind: input, shape index: {}]
  %s5 = inlined_call_operand.hbm [shape: bf16[256,256], index: 5, kind: input, shape index: {}]
  %s6 = inlined_call_operand.vmem [shape: f32[1,256], index: 6, kind: input, shape index: {}]
  %s7 = inlined_call_operand.hbm [shape: bf16[256,128], index: 7, kind: input, shape index: {}]
  %s8 = inlined_call_operand.vmem [shape: f32[1,128], index: 8, kind: input, shape index: {}]
  %s9 = inlined_call_operand.hbm [shape: f32[256,128], index: 9, kind: output, shape index: {}]
  %s10 = sld [smem:[#allocation0]]
  $region81: #{tpu_custom_call.1} parent=0
    _
  %s12 = ssub.s32 1, %s10
  %s13 = scalar_select 0, %s12, %s10
  $region1: #{tpu_custom_call.1} parent=0
    #allocation2 [shape = 'u8[16384]{0}', space=vmem, size = 0x4000, scoped, tag = 'input window, operand 1, single buffered']
    #allocation3 [shape = 's32[2]{0}', space=sflag, size = 0x8, scoped, tag = 'scoped memory for tpu_custom_call.1']
    #allocation4 [shape = 's32[2]{0}', space=sflag, size = 0x8, scoped, tag = 'scoped memory for tpu_custom_call.1']
    #allocation5 [shape = 'u8[131072]{0}', space=vmem, size = 0x20000, scoped, tag = 'input window, operand 5, single buffered']
    #allocation6 [shape = 's32[1]{0}', space=sflag, size = 0x4, scoped, tag = 'scoped memory for tpu_custom_call.1']
    #allocation7 [shape = 'u8[65536]{0}', space=vmem, size = 0x10000, scoped, tag = 'input window, operand 7, single buffered']
    #allocation8 [shape = 'u8[131072]{0}', space=vmem, size = 0x20000, scoped, tag = 'output window, operand 0']
    %14 = vsyncpa [#allocation3], 0
    %15 = vsyncpa [#allocation6], 0
    %16 = vsyncpa [#allocation4], 0
    %s17 = scalar_lea.sflag [#allocation4], 1
    %18 = vsyncpa %s17, 0
    loop: start=0, step=1, limit=4
    $region2: #{tpu_custom_call.1} parent=1 // loop_pre_header
      _
    $region3: #{tpu_custom_call.1} parent=1 // loop_header
      %s20 = sphi 0, %s24
      %p21 = scmp.ge.s32.totalorder %s20, 4
      %s30 = sphi 0, %s32
      %s33 = sphi 0, %s30
      %s34 = sphi 0, %s33
      %s50 = sphi 0, %s34
      %s54 = sphi 0, %s54
      %s56 = sphi 0, %s54
      %s57 = sphi 0, %s56
      %s71 = sphi 0, %s57
      %s75 = sphi 0, %s75
      %s77 = sphi 0, %s75
      %s78 = sphi 0, %s77
      %s92 = sphi 0, %s78
      %s96 = sphi 0, %s96
      %s98 = sphi 0, %s96
      %s99 = sphi 0, %s98
      %s113 = sphi 0, %s99
      %s117 = sphi 0, %s117
      %s119 = sphi 0, %s117
      %s120 = sphi 0, %s119
      %s134 = sphi 0, %s120
      %s138 = sphi 0, %s138
      %s140 = sphi 0, %s138
      %s141 = sphi 0, %s140
      %s155 = sphi 0, %s141
      %s159 = sphi 0, %s159
      %s161 = sphi 0, %s159
      %s162 = sphi 0, %s161
      %s176 = sphi 0, %s162
      %s180 = sphi 0, %s180
      %s182 = sphi 0, %s180
      %s183 = sphi 0, %s182
      %s197 = sphi 0, %s183
      %s201 = sphi 0, %s201
      %s203 = sphi 0, %s201
      %s204 = sphi 0, %s203
      %s218 = sphi 0, %s204
      %s224 = sphi 0, %s226
      %s227 = sphi 0, %s224
      %s228 = sphi 0, %s227
      %s244 = sphi 0, %s228
    $region4: #{tpu_custom_call.1} parent=1 // loop_header_branch
      %23 = sbr.rel (%p21) target = $region8
    $region5: #{tpu_custom_call.1} parent=1 // loop_body
      %s25 = ssub.s32 %s20, 1
      %s26 = ssub.s32 %s20, 2
      %s27 = sadd.s32 %s20, 1
      %s28 = ssub.s32 %s20, %s27
      %p29 = scmp.eq.s32.totalorder %s28, 0
      %s31 = sadd.s32 %s30, 1
      %s32 = scalar_select %p29, %s30, %s31
      %p35 = pneg %p29
      %p36 = scmp.eq.s32.totalorder %s20, 1
      %p37 = por %p35, %p36
      %p38 = scmp.ne.s32.totalorder %s30, %s33
      %p39 = scmp.eq.s32.totalorder %s20, 0
      %p40 = por %p38, %p39
      %p41 = scmp.ne.s32.totalorder %s30, %s33
      %p42 = scmp.eq.s32.totalorder %s25, 1
      %p43 = por %p41, %p42
      %p44 = scmp.ne.s32.totalorder %s33, %s34
      %p45 = scmp.eq.s32.totalorder %s25, 0
      %p46 = por %p44, %p45
      %p47 = scmp.ne.s32.totalorder %s33, %s34
      %p48 = scmp.eq.s32.totalorder %s26, 1
      %p49 = por %p47, %p48
      %p51 = scmp.ne.s32.totalorder %s34, %s50
      %p52 = scmp.eq.s32.totalorder %s26, 0
      %p53 = por %p51, %p52
      %s55 = sadd.s32 %s54, 1
      %p58 = scmp.eq.s32.totalorder %s20, 1
      %p59 = scmp.ne.s32.totalorder %s54, %s56
      %p60 = scmp.eq.s32.totalorder %s20, 0
      %p61 = por %p59, %p60
      %p62 = scmp.ne.s32.totalorder %s54, %s56
      %p63 = scmp.eq.s32.totalorder %s25, 1
      %p64 = por %p62, %p63
      %p65 = scmp.ne.s32.totalorder %s56, %s57
      %p66 = scmp.eq.s32.totalorder %s25, 0
      %p67 = por %p65, %p66
      %p68 = scmp.ne.s32.totalorder %s56, %s57
      %p69 = scmp.eq.s32.totalorder %s26, 1
      %p70 = por %p68, %p69
      %p72 = scmp.ne.s32.totalorder %s57, %s71
      %p73 = scmp.eq.s32.totalorder %s26, 0
      %p74 = por %p72, %p73
      %s76 = sadd.s32 %s75, 1
      %p79 = scmp.eq.s32.totalorder %s20, 1
      %p80 = scmp.ne.s32.totalorder %s75, %s77
      %p81 = scmp.eq.s32.totalorder %s20, 0
      %p82 = por %p80, %p81
      %p83 = scmp.ne.s32.totalorder %s75, %s77
      %p84 = scmp.eq.s32.totalorder %s25, 1
      %p85 = por %p83, %p84
      %p86 = scmp.ne.s32.totalorder %s77, %s78
      %p87 = scmp.eq.s32.totalorder %s25, 0
      %p88 = por %p86, %p87
      %p89 = scmp.ne.s32.totalorder %s77, %s78
      %p90 = scmp.eq.s32.totalorder %s26, 1
      %p91 = por %p89, %p90
      %p93 = scmp.ne.s32.totalorder %s78, %s92
      %p94 = scmp.eq.s32.totalorder %s26, 0
      %p95 = por %p93, %p94
      %s97 = sadd.s32 %s96, 1
      %p100 = scmp.eq.s32.totalorder %s20, 1
      %p101 = scmp.ne.s32.totalorder %s96, %s98
      %p102 = scmp.eq.s32.totalorder %s20, 0
      %p103 = por %p101, %p102
      %p104 = scmp.ne.s32.totalorder %s96, %s98
      %p105 = scmp.eq.s32.totalorder %s25, 1
      %p106 = por %p104, %p105
      %p107 = scmp.ne.s32.totalorder %s98, %s99
      %p108 = scmp.eq.s32.totalorder %s25, 0
      %p109 = por %p107, %p108
      %p110 = scmp.ne.s32.totalorder %s98, %s99
      %p111 = scmp.eq.s32.totalorder %s26, 1
      %p112 = por %p110, %p111
      %p114 = scmp.ne.s32.totalorder %s99, %s113
      %p115 = scmp.eq.s32.totalorder %s26, 0
      %p116 = por %p114, %p115
      %s118 = sadd.s32 %s117, 1
      %p121 = scmp.eq.s32.totalorder %s20, 1
      %p122 = scmp.ne.s32.totalorder %s117, %s119
      %p123 = scmp.eq.s32.totalorder %s20, 0
      %p124 = por %p122, %p123
      %p125 = scmp.ne.s32.totalorder %s117, %s119
      %p126 = scmp.eq.s32.totalorder %s25, 1
      %p127 = por %p125, %p126
      %p128 = scmp.ne.s32.totalorder %s119, %s120
      %p129 = scmp.eq.s32.totalorder %s25, 0
      %p130 = por %p128, %p129
      %p131 = scmp.ne.s32.totalorder %s119, %s120
      %p132 = scmp.eq.s32.totalorder %s26, 1
      %p133 = por %p131, %p132
      %p135 = scmp.ne.s32.totalorder %s120, %s134
      %p136 = scmp.eq.s32.totalorder %s26, 0
      %p137 = por %p135, %p136
      %s139 = sadd.s32 %s138, 1
      %p142 = scmp.eq.s32.totalorder %s20, 1
      %p143 = scmp.ne.s32.totalorder %s138, %s140
      %p144 = scmp.eq.s32.totalorder %s20, 0
      %p145 = por %p143, %p144
      %p146 = scmp.ne.s32.totalorder %s138, %s140
      %p147 = scmp.eq.s32.totalorder %s25, 1
      %p148 = por %p146, %p147
      %p149 = scmp.ne.s32.totalorder %s140, %s141
      %p150 = scmp.eq.s32.totalorder %s25, 0
      %p151 = por %p149, %p150
      %p152 = scmp.ne.s32.totalorder %s140, %s141
      %p153 = scmp.eq.s32.totalorder %s26, 1
      %p154 = por %p152, %p153
      %p156 = scmp.ne.s32.totalorder %s141, %s155
      %p157 = scmp.eq.s32.totalorder %s26, 0
      %p158 = por %p156, %p157
      %s160 = sadd.s32 %s159, 1
      %p163 = scmp.eq.s32.totalorder %s20, 1
      %p164 = scmp.ne.s32.totalorder %s159, %s161
      %p165 = scmp.eq.s32.totalorder %s20, 0
      %p166 = por %p164, %p165
      %p167 = scmp.ne.s32.totalorder %s159, %s161
      %p168 = scmp.eq.s32.totalorder %s25, 1
      %p169 = por %p167, %p168
      %p170 = scmp.ne.s32.totalorder %s161, %s162
      %p171 = scmp.eq.s32.totalorder %s25, 0
      %p172 = por %p170, %p171
      %p173 = scmp.ne.s32.totalorder %s161, %s162
      %p174 = scmp.eq.s32.totalorder %s26, 1
      %p175 = por %p173, %p174
      %p177 = scmp.ne.s32.totalorder %s162, %s176
      %p178 = scmp.eq.s32.totalorder %s26, 0
      %p179 = por %p177, %p178
      %s181 = sadd.s32 %s180, 1
      %p184 = scmp.eq.s32.totalorder %s20, 1
      %p185 = scmp.ne.s32.totalorder %s180, %s182
      %p186 = scmp.eq.s32.totalorder %s20, 0
      %p187 = por %p185, %p186
      %p188 = scmp.ne.s32.totalorder %s180, %s182
      %p189 = scmp.eq.s32.totalorder %s25, 1
      %p190 = por %p188, %p189
      %p191 = scmp.ne.s32.totalorder %s182, %s183
      %p192 = scmp.eq.s32.totalorder %s25, 0
      %p193 = por %p191, %p192
      %p194 = scmp.ne.s32.totalorder %s182, %s183
      %p195 = scmp.eq.s32.totalorder %s26, 1
      %p196 = por %p194, %p195
      %p198 = scmp.ne.s32.totalorder %s183, %s197
      %p199 = scmp.eq.s32.totalorder %s26, 0
      %p200 = por %p198, %p199
      %s202 = sadd.s32 %s201, 1
      %p205 = scmp.eq.s32.totalorder %s20, 1
      %p206 = scmp.ne.s32.totalorder %s201, %s203
      %p207 = scmp.eq.s32.totalorder %s20, 0
      %p208 = por %p206, %p207
      %p209 = scmp.ne.s32.totalorder %s201, %s203
      %p210 = scmp.eq.s32.totalorder %s25, 1
      %p211 = por %p209, %p210
      %p212 = scmp.ne.s32.totalorder %s203, %s204
      %p213 = scmp.eq.s32.totalorder %s25, 0
      %p214 = por %p212, %p213
      %p215 = scmp.ne.s32.totalorder %s203, %s204
      %p216 = scmp.eq.s32.totalorder %s26, 1
      %p217 = por %p215, %p216
      %p219 = scmp.ne.s32.totalorder %s204, %s218
      %p220 = scmp.eq.s32.totalorder %s26, 0
      %p221 = por %p219, %p220
      %s222 = ssub.s32 %s20, %s27
      %p223 = scmp.eq.s32.totalorder %s222, 0
      %s225 = sadd.s32 %s224, 1
      %s226 = scalar_select %p223, %s224, %s225
      %p229 = pneg %p223
      %p230 = scmp.eq.s32.totalorder %s20, 1
      %p231 = por %p229, %p230
      %p232 = scmp.ne.s32.totalorder %s224, %s227
      %p233 = scmp.eq.s32.totalorder %s20, 0
      %p234 = por %p232, %p233
      %p235 = scmp.ne.s32.totalorder %s224, %s227
      %p236 = scmp.eq.s32.totalorder %s25, 1
      %p237 = por %p235, %p236
      %p238 = scmp.ne.s32.totalorder %s227, %s228
      %p239 = scmp.eq.s32.totalorder %s25, 0
      %p240 = por %p238, %p239
      %p241 = scmp.ne.s32.totalorder %s227, %s228
      %p242 = scmp.eq.s32.totalorder %s26, 1
      %p243 = por %p241, %p242
      %p245 = scmp.ne.s32.totalorder %s228, %s244
      %p246 = scmp.eq.s32.totalorder %s26, 0
      %p247 = por %p245, %p246
      %p248 = scmp.le.s32.totalorder 1, %s20
      %p249 = scmp.lt.s32.totalorder %s20, 3
      %p250 = pnand %p248, %p249
      %p251 = pneg %p250
      // Predicated region
      $region9: #{tpu_custom_call.1} parent=5 // pred_check
        _
      $region10: #{tpu_custom_call.1} parent=5 // pred_check_branch
        %253 = sbr.rel (%p250) target = $region12
      $region11: #{tpu_custom_call.1} parent=5 // pred_region
        %s254 = ssub.s32 %s20, 1
        // Predicated region
        $region13: #{tpu_custom_call.1} parent=11 // pred_check
          %p255 = pneg %p67
        $region14: #{tpu_custom_call.1} parent=11 // pred_check_branch
          %257 = sbr.rel (%p255) target = $region16
        $region15: #{tpu_custom_call.1} parent=11 // pred_region
          %s259 = ssub.s32 512, 512
          %260 = vsyncadd [#allocation3], %s259
          %s261 = sshll.u32 [#allocation2], 4
          %s262 = int_to_ptr.vmem [resolvable:$true] %s261
          %267 = dma.hbm_to_vmem [thread:$0]  %s1, 512, %s262, [#allocation3], 128, 128, 8
        $region16: #{tpu_custom_call.1} parent=11 // pred_fallthru
          _
        // Predicated region
        $region17: #{tpu_custom_call.1} parent=11 // pred_check
          %p268 = pneg %p88
        $region18: #{tpu_custom_call.1} parent=11 // pred_check_branch
          %270 = sbr.rel (%p268) target = $region20
        $region19: #{tpu_custom_call.1} parent=11 // pred_region
          _
        $region20: #{tpu_custom_call.1} parent=11 // pred_fallthru
          _
        // Predicated region
        $region21: #{tpu_custom_call.1} parent=11 // pred_check
          %p271 = pneg %p109
        $region22: #{tpu_custom_call.1} parent=11 // pred_check_branch
          %273 = sbr.rel (%p271) target = $region24
        $region23: #{tpu_custom_call.1} parent=11 // pred_region
          _
        $region24: #{tpu_custom_call.1} parent=11 // pred_fallthru
          _
        // Predicated region
        $region25: #{tpu_custom_call.1} parent=11 // pred_check
          %p274 = pneg %p130
        $region26: #{tpu_custom_call.1} parent=11 // pred_check_branch
          %276 = sbr.rel (%p274) target = $region28
        $region27: #{tpu_custom_call.1} parent=11 // pred_region
          _
        $region28: #{tpu_custom_call.1} parent=11 // pred_fallthru
          _
        // Predicated region
        $region29: #{tpu_custom_call.1} parent=11 // pred_check
          %p277 = pneg %p151
        $region30: #{tpu_custom_call.1} parent=11 // pred_check_branch
          %279 = sbr.rel (%p277) target = $region32
        $region31: #{tpu_custom_call.1} parent=11 // pred_region
          %s281 = ssub.s32 4096, 4096
          %282 = vsyncadd [#allocation6], %s281
          %s283 = sshll.u32 [#allocation5], 4
          %s284 = int_to_ptr.vmem [resolvable:$true] %s283
          %289 = dma.hbm_to_vmem [thread:$0]  %s5, 4096, %s284, [#allocation6], 128, 128, 8
        $region32: #{tpu_custom_call.1} parent=11 // pred_fallthru
          _
        // Predicated region
        $region33: #{tpu_custom_call.1} parent=11 // pred_check
          %p290 = pneg %p172
        $region34: #{tpu_custom_call.1} parent=11 // pred_check_branch
          %292 = sbr.rel (%p290) target = $region36
        $region35: #{tpu_custom_call.1} parent=11 // pred_region
          _
        $region36: #{tpu_custom_call.1} parent=11 // pred_fallthru
          _
        // Predicated region
        $region37: #{tpu_custom_call.1} parent=11 // pred_check
          %p293 = pneg %p193
        $region38: #{tpu_custom_call.1} parent=11 // pred_check_branch
          %295 = sbr.rel (%p293) target = $region40
        $region39: #{tpu_custom_call.1} parent=11 // pred_region
          %s297 = ssub.s32 2048, 2048
          %298 = vsyncadd [#allocation6], %s297
          %s299 = sshll.u32 [#allocation7], 4
          %s300 = int_to_ptr.vmem [resolvable:$true] %s299
          %305 = dma.hbm_to_vmem [thread:$0]  %s7, 2048, %s300, [#allocation6], 64, 64, 4
        $region40: #{tpu_custom_call.1} parent=11 // pred_fallthru
          _
        // Predicated region
        $region41: #{tpu_custom_call.1} parent=11 // pred_check
          %p306 = pneg %p214
        $region42: #{tpu_custom_call.1} parent=11 // pred_check_branch
          %308 = sbr.rel (%p306) target = $region44
        $region43: #{tpu_custom_call.1} parent=11 // pred_region
          _
        $region44: #{tpu_custom_call.1} parent=11 // pred_fallthru
          _
      $region12: #{tpu_custom_call.1} parent=5 // pred_fallthru
        _
      %p309 = scmp.lt.s32.totalorder %s20, 2
      // Predicated region
      $region45: #{tpu_custom_call.1} parent=5 // pred_check
        %p310 = pneg %p309
      $region46: #{tpu_custom_call.1} parent=5 // pred_check_branch
        %312 = sbr.rel (%p310) target = $region48
      $region47: #{tpu_custom_call.1} parent=5 // pred_region
        // Predicated region
        $region49: #{tpu_custom_call.1} parent=47 // pred_check
          %p313 = pneg %p40
        $region50: #{tpu_custom_call.1} parent=47 // pred_check_branch
          %315 = sbr.rel (%p313) target = $region52
        $region51: #{tpu_custom_call.1} parent=47 // pred_region
          %s316 = smul.u32 16, %s20
          %p317 = scmp.lt.s32.totalorder %s316, 31
          %s318 = scalar_select %p317, %s316, 31
          %s319 = smul.addr %s318, 8
          %s320 = scalar_lea.vmem %s0, %s319
          %s321 = smul.u32 16, %s20
        $region52: #{tpu_custom_call.1} parent=47 // pred_fallthru
          _
      $region48: #{tpu_custom_call.1} parent=5 // pred_fallthru
        _
      %p322 = scmp.le.s32.totalorder 1, %s20
      %p323 = scmp.lt.s32.totalorder %s20, 3
      %p324 = pnand %p322, %p323
      %p325 = pneg %p324
      // Predicated region
      $region53: #{tpu_custom_call.1} parent=5 // pred_check
        _
      $region54: #{tpu_custom_call.1} parent=5 // pred_check_branch
        %327 = sbr.rel (%p324) target = $region56
      $region55: #{tpu_custom_call.1} parent=5 // pred_region
        %s328 = ssub.s32 %s20, 1
        // Predicated region
        $region57: #{tpu_custom_call.1} parent=55 // pred_check
          %p329 = pneg %p67
        $region58: #{tpu_custom_call.1} parent=55 // pred_check_branch
          %331 = sbr.rel (%p329) target = $region60
        $region59: #{tpu_custom_call.1} parent=55 // pred_region
          %332 = dma.done [#allocation3], 512
        $region60: #{tpu_custom_call.1} parent=55 // pred_fallthru
          _
        // Predicated region
        $region61: #{tpu_custom_call.1} parent=55 // pred_check
          %p333 = pneg %p151
        $region62: #{tpu_custom_call.1} parent=55 // pred_check_branch
          %335 = sbr.rel (%p333) target = $region64
        $region63: #{tpu_custom_call.1} parent=55 // pred_region
          %336 = dma.done [#allocation6], 4096
        $region64: #{tpu_custom_call.1} parent=55 // pred_fallthru
          _
        // Predicated region
        $region65: #{tpu_custom_call.1} parent=55 // pred_check
          %p337 = pneg %p193
        $region66: #{tpu_custom_call.1} parent=55 // pred_check_branch
          %339 = sbr.rel (%p337) target = $region68
        $region67: #{tpu_custom_call.1} parent=55 // pred_region
          %340 = dma.done [#allocation6], 2048
        $region68: #{tpu_custom_call.1} parent=55 // pred_fallthru
          _
        %s341 = smul.u32 16, %s25
        %p342 = scmp.lt.s32.totalorder %s341, 31
        %s343 = scalar_select %p342, %s341, 31
        %s344 = smul.addr %s343, 8
        %s345 = scalar_lea.vmem %s0, %s344
        %p346 = pneg %p46
        %p347 = pneg %p43
        %p348 = pneg %p67
        %p349 = pneg %p64
        %p350 = pneg %p88
        %p351 = pneg %p85
        %p352 = pneg %p109
        %p353 = pneg %p106
        %p354 = pneg %p130
        %p355 = pneg %p127
        %p356 = pneg %p151
        %p357 = pneg %p148
        %p358 = pneg %p172
        %p359 = pneg %p169
        %p360 = pneg %p193
        %p361 = pneg %p190
        %p362 = pneg %p214
        %p363 = pneg %p211
        %p364 = pneg %p240
        %p365 = pneg %p237
        %s366 = sand.u32 %s227, 1
        %s367 = scalar_lea.sflag [#allocation4], %s366
        %s368 = sand.u32 %s227, 1
        %s369 = smul.addr %s368, 128
        %s370 = scalar_lea.vmem [#allocation8], %s369
        %s371 = smul.u32 16, %s25
        %p372 = scmp.lt.s32.totalorder %s371, 31
        %s373 = scalar_select %p372, %s371, 31
        %s374 = smul.addr %s373, 8
        %s375 = scalar_lea.vmem %s0, %s374
        %s376 = smul.u32 16, %s25
        %s377 = smul.u32 16, %s25
        %v379 = vld [vmem:[%s375] sm:$0xff]
        %v380 = vld [vmem:[%s375 + $0x8] sm:$0xff]
        %v381 = vld [vmem:[%s375 + $0x10] sm:$0xff]
        %v382 = vld [vmem:[%s375 + $0x18] sm:$0xff]
        %v383 = vld [vmem:[%s375 + $0x20] sm:$0xff]
        %v384 = vld [vmem:[%s375 + $0x28] sm:$0xff]
        %v385 = vld [vmem:[%s375 + $0x30] sm:$0xff]
        %v386 = vld [vmem:[%s375 + $0x38] sm:$0xff]
        %v387 = vld [vmem:[%s375 + $0x40] sm:$0xff]
        %v388 = vld [vmem:[%s375 + $0x48] sm:$0xff]
        %v389 = vld [vmem:[%s375 + $0x50] sm:$0xff]
        %v390 = vld [vmem:[%s375 + $0x58] sm:$0xff]
        %v391 = vld [vmem:[%s375 + $0x60] sm:$0xff]
        %v392 = vld [vmem:[%s375 + $0x68] sm:$0xff]
        %v393 = vld [vmem:[%s375 + $0x70] sm:$0xff]
        %v394 = vld [vmem:[%s375 + $0x78] sm:$0xff]
        %v395 = vand.u32 2147483647, %v379
        %vm396 = vcmp.le.f32.partialorder %v395, 0.7853982
        %vm397 = vcmp.lt.s32.totalorder %v379, 0
        %v398 = vand.u32 %v379, 2139095040
        %v399 = vshrl.u32 %v398, 23
        %v400 = vsub.s32 %v399, 127
        %v401 = vand.u32 2147483647, %v379
        %v402 = vand.u32 %v401, 8388607
        %v403 = vor.u32 %v402, 8388608
        %v404 = vsub.s32 0, %v403
        %v405 = vadd.s32 %v400, 1
        %vm406 = vcmp.gt.s32.totalorder %v405, 0
        %v407 = vsel %vm406, %v405, 0
        %v408 = vshrl.u32 %v407, 5
        %v409 = vand.u32 %v407, 31
        %v410 = vsub.s32 32, %v409
        %v411 = vshrl.u32 683565275, %v410
        %v412 = vshll.u32 683565275, %v409
        %v413 = vshrl.u32 2475754826, %v410
        %v414 = vor.u32 %v412, %v413
        %v415 = vshll.u32 2475754826, %v409
        %v416 = vshrl.u32 2131351028, %v410
        %v417 = vor.u32 %v415, %v416
        %v418 = vshll.u32 2131351028, %v409
        %v419 = vshrl.u32 2102212464, %v410
        %v420 = vor.u32 %v418, %v419
        %v421 = vshll.u32 2102212464, %v409
        %v422 = vshrl.u32 920167782, %v410
        %v423 = vor.u32 %v421, %v422
        %v424 = vshll.u32 920167782, %v409
        %v425 = vshrl.u32 1326507024, %v410
        %v426 = vor.u32 %v424, %v425
        %vm427 = vcmp.lt.s32.totalorder %v408, 1
        %vm428 = vcmp.lt.s32.totalorder %v408, 2
        %vm429 = vcmp.lt.s32.totalorder %v408, 3
        %vm430 = vcmp.lt.s32.totalorder %v408, 4
        %v431 = vsel %vm427, %v411, %v414
        %v432 = vsel %vm430, %v420, 2102212464
        %v433 = vsel %vm429, %v417, %v432
        %v434 = vsel %vm428, %v431, %v433
        %v435 = vsel %vm427, %v414, %v417
        %v436 = vsel %vm430, %v423, 920167782
        %v437 = vsel %vm429, %v420, %v436
        %v438 = vsel %vm428, %v435, %v437
        %v439 = vsel %vm427, %v417, %v420
        %v440 = vsel %vm430, %v426, 1326507024
        %v441 = vsel %vm429, %v423, %v440
        %v442 = vsel %vm428, %v439, %v441
        %v443 = vshll.u32 %v403, 8
        %v444 = vmul.u32.u64.compose %v443, %v442
        %v445 = vextract.low.u32 %v444
        %v446 = vextract.high.u32 %v444
        %v447 = vmul.u32.u64.compose %v443, %v438
        %v448 = vextract.low.u32 %v447
        %v449 = vextract.high.u32 %v447
        %v450 = vmul.u32 %v443, %v434
        %v451 = vadd.s32 %v446, %v448
        %vm452 = vc.u32 %v446, %v448
        %v453 = vadd.s32 %v449, 1
        %v454 = vsel %vm452, %v453, %v449
        %v455 = vadd.s32 %v450, %v454
        %v456 = vadd.s32 %v455, 536870912
        %v457 = vshrl.u32 %v456, 30
        %v458 = vshll.u32 %v457, 30
        %v459 = vsub.s32 %v455, %v458
        %vm460 = vcmp.lt.s32.totalorder %v459, 0
        %v461 = vsub.s32 0, %v459
        %v462 = vsel %vm460, %v461, %v459
        %v463 = vclz %v462
        %v464 = vsub.s32 %v463, 2
        %vm465 = vcmp.gt.s32.totalorder 0, %v464
        %v466 = vsel %vm465, 0, %v464
        %v467 = vsub.s32 32, %v466
        %v468 = vshll.u32 %v459, %v466
        %v469 = vshrl.u32 %v451, %v467
        %v470 = vor.u32 %v468, %v469
        %v471 = vsub.s32 4294967266, %v466
        %v472 = vadd.s32 %v471, 127
        %v473 = vshll.u32 %v472, 23
        %v474 = vor.u32 4788187, %v473
        %v475 = vand.u32 2147483647, %v474
        %v477 = vcvt.s32.f32 %v470
        %v478 = vmul.f32 %v477, %v475
        %v479 = vxor.u32 %v478, 2147483648
        %v480 = vsel %vm397, %v479, %v478
        %v481 = vsub.s32 4, %v457
        %v482 = vsel %vm397, %v481, %v457
        %v483 = vsel %vm396, %v379, %v480
        %v484 = vsel %vm396, 0, %v482
        %v485 = vcosq.f32.pop %v483
        %v486 = vsinq.f32.pop %v483
        %vm487 = vweird.f32 %v379
        %v488 = vadd.s32 %v484, 3
        %v489 = vand.u32 %v488, 3
        %vm490 = vcmp.lt.s32.totalorder %v489, 2
        %vm491 = vcmp.eq.s32.totalorder %v489, 0
        %v492 = vxor.u32 %v486, 2147483648
        %v493 = vsel %vm491, %v485, %v492
        %vm494 = vcmp.eq.s32.totalorder %v489, 2
        %v495 = vxor.u32 %v485, 2147483648
        %v496 = vsel %vm494, %v495, %v486
        %v497 = vsel %vm490, %v493, %v496
        %v498 = vsel %vm487, nan, %v497
        %v499 = vand.u32 2147483647, %v380
        %vm500 = vcmp.le.f32.partialorder %v499, 0.7853982
        %vm501 = vcmp.lt.s32.totalorder %v380, 0
        %v502 = vand.u32 %v380, 2139095040
        %v503 = vshrl.u32 %v502, 23
        %v504 = vsub.s32 %v503, 127
        %v505 = vand.u32 2147483647, %v380
        %v506 = vand.u32 %v505, 8388607
        %v507 = vor.u32 %v506, 8388608
        %v508 = vsub.s32 0, %v507
        %v509 = vadd.s32 %v504, 1
        %vm510 = vcmp.gt.s32.totalorder %v509, 0
        %v511 = vsel %vm510, %v509, 0
        %v512 = vshrl.u32 %v511, 5
        %v513 = vand.u32 %v511, 31
        %v514 = vsub.s32 32, %v513
        %v515 = vshrl.u32 683565275, %v514
        %v516 = vshll.u32 683565275, %v513
        %v517 = vshrl.u32 2475754826, %v514
        %v518 = vor.u32 %v516, %v517
        %v519 = vshll.u32 2475754826, %v513
        %v520 = vshrl.u32 2131351028, %v514
        %v521 = vor.u32 %v519, %v520
        %v522 = vshll.u32 2131351028, %v513
        %v523 = vshrl.u32 2102212464, %v514
        %v524 = vor.u32 %v522, %v523
        %v525 = vshll.u32 2102212464, %v513
        %v526 = vshrl.u32 920167782, %v514
        %v527 = vor.u32 %v525, %v526
        %v528 = vshll.u32 920167782, %v513
        %v529 = vshrl.u32 1326507024, %v514
        %v530 = vor.u32 %v528, %v529
        %vm531 = vcmp.lt.s32.totalorder %v512, 1
        %vm532 = vcmp.lt.s32.totalorder %v512, 2
        %vm533 = vcmp.lt.s32.totalorder %v512, 3
        %vm534 = vcmp.lt.s32.totalorder %v512, 4
        %v535 = vsel %vm531, %v515, %v518
        %v536 = vsel %vm534, %v524, 2102212464
        %v537 = vsel %vm533, %v521, %v536
        %v538 = vsel %vm532, %v535, %v537
        %v539 = vsel %vm531, %v518, %v521
        %v540 = vsel %vm534, %v527, 920167782
        %v541 = vsel %vm533, %v524, %v540
        %v542 = vsel %vm532, %v539, %v541
        %v543 = vsel %vm531, %v521, %v524
        %v544 = vsel %vm534, %v530, 1326507024
        %v545 = vsel %vm533, %v527, %v544
        %v546 = vsel %vm532, %v543, %v545
        %v547 = vshll.u32 %v507, 8
        %v548 = vmul.u32.u64.compose %v547, %v546
        %v549 = vextract.low.u32 %v548
        %v550 = vextract.high.u32 %v548
        %v551 = vmul.u32.u64.compose %v547, %v542
        %v552 = vextract.low.u32 %v551
        %v553 = vextract.high.u32 %v551
        %v554 = vmul.u32 %v547, %v538
        %v555 = vadd.s32 %v550, %v552
        %vm556 = vc.u32 %v550, %v552
        %v557 = vadd.s32 %v553, 1
        %v558 = vsel %vm556, %v557, %v553
        %v559 = vadd.s32 %v554, %v558
        %v560 = vadd.s32 %v559, 536870912
        %v561 = vshrl.u32 %v560, 30
        %v562 = vshll.u32 %v561, 30
        %v563 = vsub.s32 %v559, %v562
        %vm564 = vcmp.lt.s32.totalorder %v563, 0
        %v565 = vsub.s32 0, %v563
        %v566 = vsel %vm564, %v565, %v563
        %v567 = vclz %v566
        %v568 = vsub.s32 %v567, 2
        %vm569 = vcmp.gt.s32.totalorder 0, %v568
        %v570 = vsel %vm569, 0, %v568
        %v571 = vsub.s32 32, %v570
        %v572 = vshll.u32 %v563, %v570
        %v573 = vshrl.u32 %v555, %v571
        %v574 = vor.u32 %v572, %v573
        %v575 = vsub.s32 4294967266, %v570
        %v576 = vadd.s32 %v575, 127
        %v577 = vshll.u32 %v576, 23
        %v578 = vor.u32 4788187, %v577
        %v579 = vand.u32 2147483647, %v578
        %v581 = vcvt.s32.f32 %v574
        %v582 = vmul.f32 %v581, %v579
        %v583 = vxor.u32 %v582, 2147483648
        %v584 = vsel %vm501, %v583, %v582
        %v585 = vsub.s32 4, %v561
        %v586 = vsel %vm501, %v585, %v561
        %v587 = vsel %vm500, %v380, %v584
        %v588 = vsel %vm500, 0, %v586
        %v589 = vcosq.f32.pop %v587
        %v590 = vsinq.f32.pop %v587
        %vm591 = vweird.f32 %v380
        %v592 = vadd.s32 %v588, 3
        %v593 = vand.u32 %v592, 3
        %vm594 = vcmp.lt.s32.totalorder %v593, 2
        %vm595 = vcmp.eq.s32.totalorder %v593, 0
        %v596 = vxor.u32 %v590, 2147483648
        %v597 = vsel %vm595, %v589, %v596
        %vm598 = vcmp.eq.s32.totalorder %v593, 2
        %v599 = vxor.u32 %v589, 2147483648
        %v600 = vsel %vm598, %v599, %v590
        %v601 = vsel %vm594, %v597, %v600
        %v602 = vsel %vm591, nan, %v601
        %v603 = vand.u32 2147483647, %v381
        %vm604 = vcmp.le.f32.partialorder %v603, 0.7853982
        %vm605 = vcmp.lt.s32.totalorder %v381, 0
        %v606 = vand.u32 %v381, 2139095040
        %v607 = vshrl.u32 %v606, 23
        %v608 = vsub.s32 %v607, 127
        %v609 = vand.u32 2147483647, %v381
        %v610 = vand.u32 %v609, 8388607
        %v611 = vor.u32 %v610, 8388608
        %v612 = vsub.s32 0, %v611
        %v613 = vadd.s32 %v608, 1
        %vm614 = vcmp.gt.s32.totalorder %v613, 0
        %v615 = vsel %vm614, %v613, 0
        %v616 = vshrl.u32 %v615, 5
        %v617 = vand.u32 %v615, 31
        %v618 = vsub.s32 32, %v617
        %v619 = vshrl.u32 683565275, %v618
        %v620 = vshll.u32 683565275, %v617
        %v621 = vshrl.u32 2475754826, %v618
        %v622 = vor.u32 %v620, %v621
        %v623 = vshll.u32 2475754826, %v617
        %v624 = vshrl.u32 2131351028, %v618
        %v625 = vor.u32 %v623, %v624
        %v626 = vshll.u32 2131351028, %v617
        %v627 = vshrl.u32 2102212464, %v618
        %v628 = vor.u32 %v626, %v627
        %v629 = vshll.u32 2102212464, %v617
        %v630 = vshrl.u32 920167782, %v618
        %v631 = vor.u32 %v629, %v630
        %v632 = vshll.u32 920167782, %v617
        %v633 = vshrl.u32 1326507024, %v618
        %v634 = vor.u32 %v632, %v633
        %vm635 = vcmp.lt.s32.totalorder %v616, 1
        %vm636 = vcmp.lt.s32.totalorder %v616, 2
        %vm637 = vcmp.lt.s32.totalorder %v616, 3
        %vm638 = vcmp.lt.s32.totalorder %v616, 4
        %v639 = vsel %vm635, %v619, %v622
        %v640 = vsel %vm638, %v628, 2102212464
        %v641 = vsel %vm637, %v625, %v640
        %v642 = vsel %vm636, %v639, %v641
        %v643 = vsel %vm635, %v622, %v625
        %v644 = vsel %vm638, %v631, 920167782
        %v645 = vsel %vm637, %v628, %v644
        %v646 = vsel %vm636, %v643, %v645
        %v647 = vsel %vm635, %v625, %v628
        %v648 = vsel %vm638, %v634, 1326507024
        %v649 = vsel %vm637, %v631, %v648
        %v650 = vsel %vm636, %v647, %v649
        %v651 = vshll.u32 %v611, 8
        %v652 = vmul.u32.u64.compose %v651, %v650
        %v653 = vextract.low.u32 %v652
        %v654 = vextract.high.u32 %v652
        %v655 = vmul.u32.u64.compose %v651, %v646
        %v656 = vextract.low.u32 %v655
        %v657 = vextract.high.u32 %v655
        %v658 = vmul.u32 %v651, %v642
        %v659 = vadd.s32 %v654, %v656
        %vm660 = vc.u32 %v654, %v656
        %v661 = vadd.s32 %v657, 1
        %v662 = vsel %vm660, %v661, %v657
        %v663 = vadd.s32 %v658, %v662
        %v664 = vadd.s32 %v663, 536870912
        %v665 = vshrl.u32 %v664, 30
        %v666 = vshll.u32 %v665, 30
        %v667 = vsub.s32 %v663, %v666
        %vm668 = vcmp.lt.s32.totalorder %v667, 0
        %v669 = vsub.s32 0, %v667
        %v670 = vsel %vm668, %v669, %v667
        %v671 = vclz %v670
        %v672 = vsub.s32 %v671, 2
        %vm673 = vcmp.gt.s32.totalorder 0, %v672
        %v674 = vsel %vm673, 0, %v672
        %v675 = vsub.s32 32, %v674
        %v676 = vshll.u32 %v667, %v674
        %v677 = vshrl.u32 %v659, %v675
        %v678 = vor.u32 %v676, %v677
        %v679 = vsub.s32 4294967266, %v674
        %v680 = vadd.s32 %v679, 127
        %v681 = vshll.u32 %v680, 23
        %v682 = vor.u32 4788187, %v681
        %v683 = vand.u32 2147483647, %v682
        %v685 = vcvt.s32.f32 %v678
        %v686 = vmul.f32 %v685, %v683
        %v687 = vxor.u32 %v686, 2147483648
        %v688 = vsel %vm605, %v687, %v686
        %v689 = vsub.s32 4, %v665
        %v690 = vsel %vm605, %v689, %v665
        %v691 = vsel %vm604, %v381, %v688
        %v692 = vsel %vm604, 0, %v690
        %v693 = vcosq.f32.pop %v691
        %v694 = vsinq.f32.pop %v691
        %vm695 = vweird.f32 %v381
        %v696 = vadd.s32 %v692, 3
        %v697 = vand.u32 %v696, 3
        %vm698 = vcmp.lt.s32.totalorder %v697, 2
        %vm699 = vcmp.eq.s32.totalorder %v697, 0
        %v700 = vxor.u32 %v694, 2147483648
        %v701 = vsel %vm699, %v693, %v700
        %vm702 = vcmp.eq.s32.totalorder %v697, 2
        %v703 = vxor.u32 %v693, 2147483648
        %v704 = vsel %vm702, %v703, %v694
        %v705 = vsel %vm698, %v701, %v704
        %v706 = vsel %vm695, nan, %v705
        %v707 = vand.u32 2147483647, %v382
        %vm708 = vcmp.le.f32.partialorder %v707, 0.7853982
        %vm709 = vcmp.lt.s32.totalorder %v382, 0
        %v710 = vand.u32 %v382, 2139095040
        %v711 = vshrl.u32 %v710, 23
        %v712 = vsub.s32 %v711, 127
        %v713 = vand.u32 2147483647, %v382
        %v714 = vand.u32 %v713, 8388607
        %v715 = vor.u32 %v714, 8388608
        %v716 = vsub.s32 0, %v715
        %v717 = vadd.s32 %v712, 1
        %vm718 = vcmp.gt.s32.totalorder %v717, 0
        %v719 = vsel %vm718, %v717, 0
        %v720 = vshrl.u32 %v719, 5
        %v721 = vand.u32 %v719, 31
        %v722 = vsub.s32 32, %v721
        %v723 = vshrl.u32 683565275, %v722
        %v724 = vshll.u32 683565275, %v721
        %v725 = vshrl.u32 2475754826, %v722
        %v726 = vor.u32 %v724, %v725
        %v727 = vshll.u32 2475754826, %v721
        %v728 = vshrl.u32 2131351028, %v722
        %v729 = vor.u32 %v727, %v728
        %v730 = vshll.u32 2131351028, %v721
        %v731 = vshrl.u32 2102212464, %v722
        %v732 = vor.u32 %v730, %v731
        %v733 = vshll.u32 2102212464, %v721
        %v734 = vshrl.u32 920167782, %v722
        %v735 = vor.u32 %v733, %v734
        %v736 = vshll.u32 920167782, %v721
        %v737 = vshrl.u32 1326507024, %v722
        %v738 = vor.u32 %v736, %v737
        %vm739 = vcmp.lt.s32.totalorder %v720, 1
        %vm740 = vcmp.lt.s32.totalorder %v720, 2
        %vm741 = vcmp.lt.s32.totalorder %v720, 3
        %vm742 = vcmp.lt.s32.totalorder %v720, 4
        %v743 = vsel %vm739, %v723, %v726
        %v744 = vsel %vm742, %v732, 2102212464
        %v745 = vsel %vm741, %v729, %v744
        %v746 = vsel %vm740, %v743, %v745
        %v747 = vsel %vm739, %v726, %v729
        %v748 = vsel %vm742, %v735, 920167782
        %v749 = vsel %vm741, %v732, %v748
        %v750 = vsel %vm740, %v747, %v749
        %v751 = vsel %vm739, %v729, %v732
        %v752 = vsel %vm742, %v738, 1326507024
        %v753 = vsel %vm741, %v735, %v752
        %v754 = vsel %vm740, %v751, %v753
        %v755 = vshll.u32 %v715, 8
        %v756 = vmul.u32.u64.compose %v755, %v754
        %v757 = vextract.low.u32 %v756
        %v758 = vextract.high.u32 %v756
        %v759 = vmul.u32.u64.compose %v755, %v750
        %v760 = vextract.low.u32 %v759
        %v761 = vextract.high.u32 %v759
        %v762 = vmul.u32 %v755, %v746
        %v763 = vadd.s32 %v758, %v760
        %vm764 = vc.u32 %v758, %v760
        %v765 = vadd.s32 %v761, 1
        %v766 = vsel %vm764, %v765, %v761
        %v767 = vadd.s32 %v762, %v766
        %v768 = vadd.s32 %v767, 536870912
        %v769 = vshrl.u32 %v768, 30
        %v770 = vshll.u32 %v769, 30
        %v771 = vsub.s32 %v767, %v770
        %vm772 = vcmp.lt.s32.totalorder %v771, 0
        %v773 = vsub.s32 0, %v771
        %v774 = vsel %vm772, %v773, %v771
        %v775 = vclz %v774
        %v776 = vsub.s32 %v775, 2
        %vm777 = vcmp.gt.s32.totalorder 0, %v776
        %v778 = vsel %vm777, 0, %v776
        %v779 = vsub.s32 32, %v778
        %v780 = vshll.u32 %v771, %v778
        %v781 = vshrl.u32 %v763, %v779
        %v782 = vor.u32 %v780, %v781
        %v783 = vsub.s32 4294967266, %v778
        %v784 = vadd.s32 %v783, 127
        %v785 = vshll.u32 %v784, 23
        %v786 = vor.u32 4788187, %v785
        %v787 = vand.u32 2147483647, %v786
        %v789 = vcvt.s32.f32 %v782
        %v790 = vmul.f32 %v789, %v787
        %v791 = vxor.u32 %v790, 2147483648
        %v792 = vsel %vm709, %v791, %v790
        %v793 = vsub.s32 4, %v769
        %v794 = vsel %vm709, %v793, %v769
        %v795 = vsel %vm708, %v382, %v792
        %v796 = vsel %vm708, 0, %v794
        %v797 = vcosq.f32.pop %v795
        %v798 = vsinq.f32.pop %v795
        %vm799 = vweird.f32 %v382
        %v800 = vadd.s32 %v796, 3
        %v801 = vand.u32 %v800, 3
        %vm802 = vcmp.lt.s32.totalorder %v801, 2
        %vm803 = vcmp.eq.s32.totalorder %v801, 0
        %v804 = vxor.u32 %v798, 2147483648
        %v805 = vsel %vm803, %v797, %v804
        %vm806 = vcmp.eq.s32.totalorder %v801, 2
        %v807 = vxor.u32 %v797, 2147483648
        %v808 = vsel %vm806, %v807, %v798
        %v809 = vsel %vm802, %v805, %v808
        %v810 = vsel %vm799, nan, %v809
        %v811 = vand.u32 2147483647, %v383
        %vm812 = vcmp.le.f32.partialorder %v811, 0.7853982
        %vm813 = vcmp.lt.s32.totalorder %v383, 0
        %v814 = vand.u32 %v383, 2139095040
        %v815 = vshrl.u32 %v814, 23
        %v816 = vsub.s32 %v815, 127
        %v817 = vand.u32 2147483647, %v383
        %v818 = vand.u32 %v817, 8388607
        %v819 = vor.u32 %v818, 8388608
        %v820 = vsub.s32 0, %v819
        %v821 = vadd.s32 %v816, 1
        %vm822 = vcmp.gt.s32.totalorder %v821, 0
        %v823 = vsel %vm822, %v821, 0
        %v824 = vshrl.u32 %v823, 5
        %v825 = vand.u32 %v823, 31
        %v826 = vsub.s32 32, %v825
        %v827 = vshrl.u32 683565275, %v826
        %v828 = vshll.u32 683565275, %v825
        %v829 = vshrl.u32 2475754826, %v826
        %v830 = vor.u32 %v828, %v829
        %v831 = vshll.u32 2475754826, %v825
        %v832 = vshrl.u32 2131351028, %v826
        %v833 = vor.u32 %v831, %v832
        %v834 = vshll.u32 2131351028, %v825
        %v835 = vshrl.u32 2102212464, %v826
        %v836 = vor.u32 %v834, %v835
        %v837 = vshll.u32 2102212464, %v825
        %v838 = vshrl.u32 920167782, %v826
        %v839 = vor.u32 %v837, %v838
        %v840 = vshll.u32 920167782, %v825
        %v841 = vshrl.u32 1326507024, %v826
        %v842 = vor.u32 %v840, %v841
        %vm843 = vcmp.lt.s32.totalorder %v824, 1
        %vm844 = vcmp.lt.s32.totalorder %v824, 2
        %vm845 = vcmp.lt.s32.totalorder %v824, 3
        %vm846 = vcmp.lt.s32.totalorder %v824, 4
        %v847 = vsel %vm843, %v827, %v830
        %v848 = vsel %vm846, %v836, 2102212464
        %v849 = vsel %vm845, %v833, %v848
        %v850 = vsel %vm844, %v847, %v849
        %v851 = vsel %vm843, %v830, %v833
        %v852 = vsel %vm846, %v839, 920167782
        %v853 = vsel %vm845, %v836, %v852
        %v854 = vsel %vm844, %v851, %v853
        %v855 = vsel %vm843, %v833, %v836
        %v856 = vsel %vm846, %v842, 1326507024
        %v857 = vsel %vm845, %v839, %v856
        %v858 = vsel %vm844, %v855, %v857
        %v859 = vshll.u32 %v819, 8
        %v860 = vmul.u32.u64.compose %v859, %v858
        %v861 = vextract.low.u32 %v860
        %v862 = vextract.high.u32 %v860
        %v863 = vmul.u32.u64.compose %v859, %v854
        %v864 = vextract.low.u32 %v863
        %v865 = vextract.high.u32 %v863
        %v866 = vmul.u32 %v859, %v850
        %v867 = vadd.s32 %v862, %v864
        %vm868 = vc.u32 %v862, %v864
        %v869 = vadd.s32 %v865, 1
        %v870 = vsel %vm868, %v869, %v865
        %v871 = vadd.s32 %v866, %v870
        %v872 = vadd.s32 %v871, 536870912
        %v873 = vshrl.u32 %v872, 30
        %v874 = vshll.u32 %v873, 30
        %v875 = vsub.s32 %v871, %v874
        %vm876 = vcmp.lt.s32.totalorder %v875, 0
        %v877 = vsub.s32 0, %v875
        %v878 = vsel %vm876, %v877, %v875
        %v879 = vclz %v878
        %v880 = vsub.s32 %v879, 2
        %vm881 = vcmp.gt.s32.totalorder 0, %v880
        %v882 = vsel %vm881, 0, %v880
        %v883 = vsub.s32 32, %v882
        %v884 = vshll.u32 %v875, %v882
        %v885 = vshrl.u32 %v867, %v883
        %v886 = vor.u32 %v884, %v885
        %v887 = vsub.s32 4294967266, %v882
        %v888 = vadd.s32 %v887, 127
        %v889 = vshll.u32 %v888, 23
        %v890 = vor.u32 4788187, %v889
        %v891 = vand.u32 2147483647, %v890
        %v893 = vcvt.s32.f32 %v886
        %v894 = vmul.f32 %v893, %v891
        %v895 = vxor.u32 %v894, 2147483648
        %v896 = vsel %vm813, %v895, %v894
        %v897 = vsub.s32 4, %v873
        %v898 = vsel %vm813, %v897, %v873
        %v899 = vsel %vm812, %v383, %v896
        %v900 = vsel %vm812, 0, %v898
        %v901 = vcosq.f32.pop %v899
        %v902 = vsinq.f32.pop %v899
        %vm903 = vweird.f32 %v383
        %v904 = vadd.s32 %v900, 3
        %v905 = vand.u32 %v904, 3
        %vm906 = vcmp.lt.s32.totalorder %v905, 2
        %vm907 = vcmp.eq.s32.totalorder %v905, 0
        %v908 = vxor.u32 %v902, 2147483648
        %v909 = vsel %vm907, %v901, %v908
        %vm910 = vcmp.eq.s32.totalorder %v905, 2
        %v911 = vxor.u32 %v901, 2147483648
        %v912 = vsel %vm910, %v911, %v902
        %v913 = vsel %vm906, %v909, %v912
        %v914 = vsel %vm903, nan, %v913
        %v915 = vand.u32 2147483647, %v384
        %vm916 = vcmp.le.f32.partialorder %v915, 0.7853982
        %vm917 = vcmp.lt.s32.totalorder %v384, 0
        %v918 = vand.u32 %v384, 2139095040
        %v919 = vshrl.u32 %v918, 23
        %v920 = vsub.s32 %v919, 127
        %v921 = vand.u32 2147483647, %v384
        %v922 = vand.u32 %v921, 8388607
        %v923 = vor.u32 %v922, 8388608
        %v924 = vsub.s32 0, %v923
        %v925 = vadd.s32 %v920, 1
        %vm926 = vcmp.gt.s32.totalorder %v925, 0
        %v927 = vsel %vm926, %v925, 0
        %v928 = vshrl.u32 %v927, 5
        %v929 = vand.u32 %v927, 31
        %v930 = vsub.s32 32, %v929
        %v931 = vshrl.u32 683565275, %v930
        %v932 = vshll.u32 683565275, %v929
        %v933 = vshrl.u32 2475754826, %v930
        %v934 = vor.u32 %v932, %v933
        %v935 = vshll.u32 2475754826, %v929
        %v936 = vshrl.u32 2131351028, %v930
        %v937 = vor.u32 %v935, %v936
        %v938 = vshll.u32 2131351028, %v929
        %v939 = vshrl.u32 2102212464, %v930
        %v940 = vor.u32 %v938, %v939
        %v941 = vshll.u32 2102212464, %v929
        %v942 = vshrl.u32 920167782, %v930
        %v943 = vor.u32 %v941, %v942
        %v944 = vshll.u32 920167782, %v929
        %v945 = vshrl.u32 1326507024, %v930
        %v946 = vor.u32 %v944, %v945
        %vm947 = vcmp.lt.s32.totalorder %v928, 1
        %vm948 = vcmp.lt.s32.totalorder %v928, 2
        %vm949 = vcmp.lt.s32.totalorder %v928, 3
        %vm950 = vcmp.lt.s32.totalorder %v928, 4
        %v951 = vsel %vm947, %v931, %v934
        %v952 = vsel %vm950, %v940, 2102212464
        %v953 = vsel %vm949, %v937, %v952
        %v954 = vsel %vm948, %v951, %v953
        %v955 = vsel %vm947, %v934, %v937
        %v956 = vsel %vm950, %v943, 920167782
        %v957 = vsel %vm949, %v940, %v956
        %v958 = vsel %vm948, %v955, %v957
        %v959 = vsel %vm947, %v937, %v940
        %v960 = vsel %vm950, %v946, 1326507024
        %v961 = vsel %vm949, %v943, %v960
        %v962 = vsel %vm948, %v959, %v961
        %v963 = vshll.u32 %v923, 8
        %v964 = vmul.u32.u64.compose %v963, %v962
        %v965 = vextract.low.u32 %v964
        %v966 = vextract.high.u32 %v964
        %v967 = vmul.u32.u64.compose %v963, %v958
        %v968 = vextract.low.u32 %v967
        %v969 = vextract.high.u32 %v967
        %v970 = vmul.u32 %v963, %v954
        %v971 = vadd.s32 %v966, %v968
        %vm972 = vc.u32 %v966, %v968
        %v973 = vadd.s32 %v969, 1
        %v974 = vsel %vm972, %v973, %v969
        %v975 = vadd.s32 %v970, %v974
        %v976 = vadd.s32 %v975, 536870912
        %v977 = vshrl.u32 %v976, 30
        %v978 = vshll.u32 %v977, 30
        %v979 = vsub.s32 %v975, %v978
        %vm980 = vcmp.lt.s32.totalorder %v979, 0
        %v981 = vsub.s32 0, %v979
        %v982 = vsel %vm980, %v981, %v979
        %v983 = vclz %v982
        %v984 = vsub.s32 %v983, 2
        %vm985 = vcmp.gt.s32.totalorder 0, %v984
        %v986 = vsel %vm985, 0, %v984
        %v987 = vsub.s32 32, %v986
        %v988 = vshll.u32 %v979, %v986
        %v989 = vshrl.u32 %v971, %v987
        %v990 = vor.u32 %v988, %v989
        %v991 = vsub.s32 4294967266, %v986
        %v992 = vadd.s32 %v991, 127
        %v993 = vshll.u32 %v992, 23
        %v994 = vor.u32 4788187, %v993
        %v995 = vand.u32 2147483647, %v994
        %v997 = vcvt.s32.f32 %v990
        %v998 = vmul.f32 %v997, %v995
        %v999 = vxor.u32 %v998, 2147483648
        %v1000 = vsel %vm917, %v999, %v998
        %v1001 = vsub.s32 4, %v977
        %v1002 = vsel %vm917, %v1001, %v977
        %v1003 = vsel %vm916, %v384, %v1000
        %v1004 = vsel %vm916, 0, %v1002
        %v1005 = vcosq.f32.pop %v1003
        %v1006 = vsinq.f32.pop %v1003
        %vm1007 = vweird.f32 %v384
        %v1008 = vadd.s32 %v1004, 3
        %v1009 = vand.u32 %v1008, 3
        %vm1010 = vcmp.lt.s32.totalorder %v1009, 2
        %vm1011 = vcmp.eq.s32.totalorder %v1009, 0
        %v1012 = vxor.u32 %v1006, 2147483648
        %v1013 = vsel %vm1011, %v1005, %v1012
        %vm1014 = vcmp.eq.s32.totalorder %v1009, 2
        %v1015 = vxor.u32 %v1005, 2147483648
        %v1016 = vsel %vm1014, %v1015, %v1006
        %v1017 = vsel %vm1010, %v1013, %v1016
        %v1018 = vsel %vm1007, nan, %v1017
        %v1019 = vand.u32 2147483647, %v385
        %vm1020 = vcmp.le.f32.partialorder %v1019, 0.7853982
        %vm1021 = vcmp.lt.s32.totalorder %v385, 0
        %v1022 = vand.u32 %v385, 2139095040
        %v1023 = vshrl.u32 %v1022, 23
        %v1024 = vsub.s32 %v1023, 127
        %v1025 = vand.u32 2147483647, %v385
        %v1026 = vand.u32 %v1025, 8388607
        %v1027 = vor.u32 %v1026, 8388608
        %v1028 = vsub.s32 0, %v1027
        %v1029 = vadd.s32 %v1024, 1
        %vm1030 = vcmp.gt.s32.totalorder %v1029, 0
        %v1031 = vsel %vm1030, %v1029, 0
        %v1032 = vshrl.u32 %v1031, 5
        %v1033 = vand.u32 %v1031, 31
        %v1034 = vsub.s32 32, %v1033
        %v1035 = vshrl.u32 683565275, %v1034
        %v1036 = vshll.u32 683565275, %v1033
        %v1037 = vshrl.u32 2475754826, %v1034
        %v1038 = vor.u32 %v1036, %v1037
        %v1039 = vshll.u32 2475754826, %v1033
        %v1040 = vshrl.u32 2131351028, %v1034
        %v1041 = vor.u32 %v1039, %v1040
        %v1042 = vshll.u32 2131351028, %v1033
        %v1043 = vshrl.u32 2102212464, %v1034
        %v1044 = vor.u32 %v1042, %v1043
        %v1045 = vshll.u32 2102212464, %v1033
        %v1046 = vshrl.u32 920167782, %v1034
        %v1047 = vor.u32 %v1045, %v1046
        %v1048 = vshll.u32 920167782, %v1033
        %v1049 = vshrl.u32 1326507024, %v1034
        %v1050 = vor.u32 %v1048, %v1049
        %vm1051 = vcmp.lt.s32.totalorder %v1032, 1
        %vm1052 = vcmp.lt.s32.totalorder %v1032, 2
        %vm1053 = vcmp.lt.s32.totalorder %v1032, 3
        %vm1054 = vcmp.lt.s32.totalorder %v1032, 4
        %v1055 = vsel %vm1051, %v1035, %v1038
        %v1056 = vsel %vm1054, %v1044, 2102212464
        %v1057 = vsel %vm1053, %v1041, %v1056
        %v1058 = vsel %vm1052, %v1055, %v1057
        %v1059 = vsel %vm1051, %v1038, %v1041
        %v1060 = vsel %vm1054, %v1047, 920167782
        %v1061 = vsel %vm1053, %v1044, %v1060
        %v1062 = vsel %vm1052, %v1059, %v1061
        %v1063 = vsel %vm1051, %v1041, %v1044
        %v1064 = vsel %vm1054, %v1050, 1326507024
        %v1065 = vsel %vm1053, %v1047, %v1064
        %v1066 = vsel %vm1052, %v1063, %v1065
        %v1067 = vshll.u32 %v1027, 8
        %v1068 = vmul.u32.u64.compose %v1067, %v1066
        %v1069 = vextract.low.u32 %v1068
        %v1070 = vextract.high.u32 %v1068
        %v1071 = vmul.u32.u64.compose %v1067, %v1062
        %v1072 = vextract.low.u32 %v1071
        %v1073 = vextract.high.u32 %v1071
        %v1074 = vmul.u32 %v1067, %v1058
        %v1075 = vadd.s32 %v1070, %v1072
        %vm1076 = vc.u32 %v1070, %v1072
        %v1077 = vadd.s32 %v1073, 1
        %v1078 = vsel %vm1076, %v1077, %v1073
        %v1079 = vadd.s32 %v1074, %v1078
        %v1080 = vadd.s32 %v1079, 536870912
        %v1081 = vshrl.u32 %v1080, 30
        %v1082 = vshll.u32 %v1081, 30
        %v1083 = vsub.s32 %v1079, %v1082
        %vm1084 = vcmp.lt.s32.totalorder %v1083, 0
        %v1085 = vsub.s32 0, %v1083
        %v1086 = vsel %vm1084, %v1085, %v1083
        %v1087 = vclz %v1086
        %v1088 = vsub.s32 %v1087, 2
        %vm1089 = vcmp.gt.s32.totalorder 0, %v1088
        %v1090 = vsel %vm1089, 0, %v1088
        %v1091 = vsub.s32 32, %v1090
        %v1092 = vshll.u32 %v1083, %v1090
        %v1093 = vshrl.u32 %v1075, %v1091
        %v1094 = vor.u32 %v1092, %v1093
        %v1095 = vsub.s32 4294967266, %v1090
        %v1096 = vadd.s32 %v1095, 127
        %v1097 = vshll.u32 %v1096, 23
        %v1098 = vor.u32 4788187, %v1097
        %v1099 = vand.u32 2147483647, %v1098
        %v1101 = vcvt.s32.f32 %v1094
        %v1102 = vmul.f32 %v1101, %v1099
        %v1103 = vxor.u32 %v1102, 2147483648
        %v1104 = vsel %vm1021, %v1103, %v1102
        %v1105 = vsub.s32 4, %v1081
        %v1106 = vsel %vm1021, %v1105, %v1081
        %v1107 = vsel %vm1020, %v385, %v1104
        %v1108 = vsel %vm1020, 0, %v1106
        %v1109 = vcosq.f32.pop %v1107
        %v1110 = vsinq.f32.pop %v1107
        %vm1111 = vweird.f32 %v385
        %v1112 = vadd.s32 %v1108, 3
        %v1113 = vand.u32 %v1112, 3
        %vm1114 = vcmp.lt.s32.totalorder %v1113, 2
        %vm1115 = vcmp.eq.s32.totalorder %v1113, 0
        %v1116 = vxor.u32 %v1110, 2147483648
        %v1117 = vsel %vm1115, %v1109, %v1116
        %vm1118 = vcmp.eq.s32.totalorder %v1113, 2
        %v1119 = vxor.u32 %v1109, 2147483648
        %v1120 = vsel %vm1118, %v1119, %v1110
        %v1121 = vsel %vm1114, %v1117, %v1120
        %v1122 = vsel %vm1111, nan, %v1121
        %v1123 = vand.u32 2147483647, %v386
        %vm1124 = vcmp.le.f32.partialorder %v1123, 0.7853982
        %vm1125 = vcmp.lt.s32.totalorder %v386, 0
        %v1126 = vand.u32 %v386, 2139095040
        %v1127 = vshrl.u32 %v1126, 23
        %v1128 = vsub.s32 %v1127, 127
        %v1129 = vand.u32 2147483647, %v386
        %v1130 = vand.u32 %v1129, 8388607
        %v1131 = vor.u32 %v1130, 8388608
        %v1132 = vsub.s32 0, %v1131
        %v1133 = vadd.s32 %v1128, 1
        %vm1134 = vcmp.gt.s32.totalorder %v1133, 0
        %v1135 = vsel %vm1134, %v1133, 0
        %v1136 = vshrl.u32 %v1135, 5
        %v1137 = vand.u32 %v1135, 31
        %v1138 = vsub.s32 32, %v1137
        %v1139 = vshrl.u32 683565275, %v1138
        %v1140 = vshll.u32 683565275, %v1137
        %v1141 = vshrl.u32 2475754826, %v1138
        %v1142 = vor.u32 %v1140, %v1141
        %v1143 = vshll.u32 2475754826, %v1137
        %v1144 = vshrl.u32 2131351028, %v1138
        %v1145 = vor.u32 %v1143, %v1144
        %v1146 = vshll.u32 2131351028, %v1137
        %v1147 = vshrl.u32 2102212464, %v1138
        %v1148 = vor.u32 %v1146, %v1147
        %v1149 = vshll.u32 2102212464, %v1137
        %v1150 = vshrl.u32 920167782, %v1138
        %v1151 = vor.u32 %v1149, %v1150
        %v1152 = vshll.u32 920167782, %v1137
        %v1153 = vshrl.u32 1326507024, %v1138
        %v1154 = vor.u32 %v1152, %v1153
        %vm1155 = vcmp.lt.s32.totalorder %v1136, 1
        %vm1156 = vcmp.lt.s32.totalorder %v1136, 2
        %vm1157 = vcmp.lt.s32.totalorder %v1136, 3
        %vm1158 = vcmp.lt.s32.totalorder %v1136, 4
        %v1159 = vsel %vm1155, %v1139, %v1142
        %v1160 = vsel %vm1158, %v1148, 2102212464
        %v1161 = vsel %vm1157, %v1145, %v1160
        %v1162 = vsel %vm1156, %v1159, %v1161
        %v1163 = vsel %vm1155, %v1142, %v1145
        %v1164 = vsel %vm1158, %v1151, 920167782
        %v1165 = vsel %vm1157, %v1148, %v1164
        %v1166 = vsel %vm1156, %v1163, %v1165
        %v1167 = vsel %vm1155, %v1145, %v1148
        %v1168 = vsel %vm1158, %v1154, 1326507024
        %v1169 = vsel %vm1157, %v1151, %v1168
        %v1170 = vsel %vm1156, %v1167, %v1169
        %v1171 = vshll.u32 %v1131, 8
        %v1172 = vmul.u32.u64.compose %v1171, %v1170
        %v1173 = vextract.low.u32 %v1172
        %v1174 = vextract.high.u32 %v1172
        %v1175 = vmul.u32.u64.compose %v1171, %v1166
        %v1176 = vextract.low.u32 %v1175
        %v1177 = vextract.high.u32 %v1175
        %v1178 = vmul.u32 %v1171, %v1162
        %v1179 = vadd.s32 %v1174, %v1176
        %vm1180 = vc.u32 %v1174, %v1176
        %v1181 = vadd.s32 %v1177, 1
        %v1182 = vsel %vm1180, %v1181, %v1177
        %v1183 = vadd.s32 %v1178, %v1182
        %v1184 = vadd.s32 %v1183, 536870912
        %v1185 = vshrl.u32 %v1184, 30
        %v1186 = vshll.u32 %v1185, 30
        %v1187 = vsub.s32 %v1183, %v1186
        %vm1188 = vcmp.lt.s32.totalorder %v1187, 0
        %v1189 = vsub.s32 0, %v1187
        %v1190 = vsel %vm1188, %v1189, %v1187
        %v1191 = vclz %v1190
        %v1192 = vsub.s32 %v1191, 2
        %vm1193 = vcmp.gt.s32.totalorder 0, %v1192
        %v1194 = vsel %vm1193, 0, %v1192
        %v1195 = vsub.s32 32, %v1194
        %v1196 = vshll.u32 %v1187, %v1194
        %v1197 = vshrl.u32 %v1179, %v1195
        %v1198 = vor.u32 %v1196, %v1197
        %v1199 = vsub.s32 4294967266, %v1194
        %v1200 = vadd.s32 %v1199, 127
        %v1201 = vshll.u32 %v1200, 23
        %v1202 = vor.u32 4788187, %v1201
        %v1203 = vand.u32 2147483647, %v1202
        %v1205 = vcvt.s32.f32 %v1198
        %v1206 = vmul.f32 %v1205, %v1203
        %v1207 = vxor.u32 %v1206, 2147483648
        %v1208 = vsel %vm1125, %v1207, %v1206
        %v1209 = vsub.s32 4, %v1185
        %v1210 = vsel %vm1125, %v1209, %v1185
        %v1211 = vsel %vm1124, %v386, %v1208
        %v1212 = vsel %vm1124, 0, %v1210
        %v1213 = vcosq.f32.pop %v1211
        %v1214 = vsinq.f32.pop %v1211
        %vm1215 = vweird.f32 %v386
        %v1216 = vadd.s32 %v1212, 3
        %v1217 = vand.u32 %v1216, 3
        %vm1218 = vcmp.lt.s32.totalorder %v1217, 2
        %vm1219 = vcmp.eq.s32.totalorder %v1217, 0
        %v1220 = vxor.u32 %v1214, 2147483648
        %v1221 = vsel %vm1219, %v1213, %v1220
        %vm1222 = vcmp.eq.s32.totalorder %v1217, 2
        %v1223 = vxor.u32 %v1213, 2147483648
        %v1224 = vsel %vm1222, %v1223, %v1214
        %v1225 = vsel %vm1218, %v1221, %v1224
        %v1226 = vsel %vm1215, nan, %v1225
        %v1227 = vand.u32 2147483647, %v387
        %vm1228 = vcmp.le.f32.partialorder %v1227, 0.7853982
        %vm1229 = vcmp.lt.s32.totalorder %v387, 0
        %v1230 = vand.u32 %v387, 2139095040
        %v1231 = vshrl.u32 %v1230, 23
        %v1232 = vsub.s32 %v1231, 127
        %v1233 = vand.u32 2147483647, %v387
        %v1234 = vand.u32 %v1233, 8388607
        %v1235 = vor.u32 %v1234, 8388608
        %v1236 = vsub.s32 0, %v1235
        %v1237 = vadd.s32 %v1232, 1
        %vm1238 = vcmp.gt.s32.totalorder %v1237, 0
        %v1239 = vsel %vm1238, %v1237, 0
        %v1240 = vshrl.u32 %v1239, 5
        %v1241 = vand.u32 %v1239, 31
        %v1242 = vsub.s32 32, %v1241
        %v1243 = vshrl.u32 683565275, %v1242
        %v1244 = vshll.u32 683565275, %v1241
        %v1245 = vshrl.u32 2475754826, %v1242
        %v1246 = vor.u32 %v1244, %v1245
        %v1247 = vshll.u32 2475754826, %v1241
        %v1248 = vshrl.u32 2131351028, %v1242
        %v1249 = vor.u32 %v1247, %v1248
        %v1250 = vshll.u32 2131351028, %v1241
        %v1251 = vshrl.u32 2102212464, %v1242
        %v1252 = vor.u32 %v1250, %v1251
        %v1253 = vshll.u32 2102212464, %v1241
        %v1254 = vshrl.u32 920167782, %v1242
        %v1255 = vor.u32 %v1253, %v1254
        %v1256 = vshll.u32 920167782, %v1241
        %v1257 = vshrl.u32 1326507024, %v1242
        %v1258 = vor.u32 %v1256, %v1257
        %vm1259 = vcmp.lt.s32.totalorder %v1240, 1
        %vm1260 = vcmp.lt.s32.totalorder %v1240, 2
        %vm1261 = vcmp.lt.s32.totalorder %v1240, 3
        %vm1262 = vcmp.lt.s32.totalorder %v1240, 4
        %v1263 = vsel %vm1259, %v1243, %v1246
        %v1264 = vsel %vm1262, %v1252, 2102212464
        %v1265 = vsel %vm1261, %v1249, %v1264
        %v1266 = vsel %vm1260, %v1263, %v1265
        %v1267 = vsel %vm1259, %v1246, %v1249
        %v1268 = vsel %vm1262, %v1255, 920167782
        %v1269 = vsel %vm1261, %v1252, %v1268
        %v1270 = vsel %vm1260, %v1267, %v1269
        %v1271 = vsel %vm1259, %v1249, %v1252
        %v1272 = vsel %vm1262, %v1258, 1326507024
        %v1273 = vsel %vm1261, %v1255, %v1272
        %v1274 = vsel %vm1260, %v1271, %v1273
        %v1275 = vshll.u32 %v1235, 8
        %v1276 = vmul.u32.u64.compose %v1275, %v1274
        %v1277 = vextract.low.u32 %v1276
        %v1278 = vextract.high.u32 %v1276
        %v1279 = vmul.u32.u64.compose %v1275, %v1270
        %v1280 = vextract.low.u32 %v1279
        %v1281 = vextract.high.u32 %v1279
        %v1282 = vmul.u32 %v1275, %v1266
        %v1283 = vadd.s32 %v1278, %v1280
        %vm1284 = vc.u32 %v1278, %v1280
        %v1285 = vadd.s32 %v1281, 1
        %v1286 = vsel %vm1284, %v1285, %v1281
        %v1287 = vadd.s32 %v1282, %v1286
        %v1288 = vadd.s32 %v1287, 536870912
        %v1289 = vshrl.u32 %v1288, 30
        %v1290 = vshll.u32 %v1289, 30
        %v1291 = vsub.s32 %v1287, %v1290
        %vm1292 = vcmp.lt.s32.totalorder %v1291, 0
        %v1293 = vsub.s32 0, %v1291
        %v1294 = vsel %vm1292, %v1293, %v1291
        %v1295 = vclz %v1294
        %v1296 = vsub.s32 %v1295, 2
        %vm1297 = vcmp.gt.s32.totalorder 0, %v1296
        %v1298 = vsel %vm1297, 0, %v1296
        %v1299 = vsub.s32 32, %v1298
        %v1300 = vshll.u32 %v1291, %v1298
        %v1301 = vshrl.u32 %v1283, %v1299
        %v1302 = vor.u32 %v1300, %v1301
        %v1303 = vsub.s32 4294967266, %v1298
        %v1304 = vadd.s32 %v1303, 127
        %v1305 = vshll.u32 %v1304, 23
        %v1306 = vor.u32 4788187, %v1305
        %v1307 = vand.u32 2147483647, %v1306
        %v1309 = vcvt.s32.f32 %v1302
        %v1310 = vmul.f32 %v1309, %v1307
        %v1311 = vxor.u32 %v1310, 2147483648
        %v1312 = vsel %vm1229, %v1311, %v1310
        %v1313 = vsub.s32 4, %v1289
        %v1314 = vsel %vm1229, %v1313, %v1289
        %v1315 = vsel %vm1228, %v387, %v1312
        %v1316 = vsel %vm1228, 0, %v1314
        %v1317 = vcosq.f32.pop %v1315
        %v1318 = vsinq.f32.pop %v1315
        %vm1319 = vweird.f32 %v387
        %v1320 = vadd.s32 %v1316, 3
        %v1321 = vand.u32 %v1320, 3
        %vm1322 = vcmp.lt.s32.totalorder %v1321, 2
        %vm1323 = vcmp.eq.s32.totalorder %v1321, 0
        %v1324 = vxor.u32 %v1318, 2147483648
        %v1325 = vsel %vm1323, %v1317, %v1324
        %vm1326 = vcmp.eq.s32.totalorder %v1321, 2
        %v1327 = vxor.u32 %v1317, 2147483648
        %v1328 = vsel %vm1326, %v1327, %v1318
        %v1329 = vsel %vm1322, %v1325, %v1328
        %v1330 = vsel %vm1319, nan, %v1329
        %v1331 = vand.u32 2147483647, %v388
        %vm1332 = vcmp.le.f32.partialorder %v1331, 0.7853982
        %vm1333 = vcmp.lt.s32.totalorder %v388, 0
        %v1334 = vand.u32 %v388, 2139095040
        %v1335 = vshrl.u32 %v1334, 23
        %v1336 = vsub.s32 %v1335, 127
        %v1337 = vand.u32 2147483647, %v388
        %v1338 = vand.u32 %v1337, 8388607
        %v1339 = vor.u32 %v1338, 8388608
        %v1340 = vsub.s32 0, %v1339
        %v1341 = vadd.s32 %v1336, 1
        %vm1342 = vcmp.gt.s32.totalorder %v1341, 0
        %v1343 = vsel %vm1342, %v1341, 0
        %v1344 = vshrl.u32 %v1343, 5
        %v1345 = vand.u32 %v1343, 31
        %v1346 = vsub.s32 32, %v1345
        %v1347 = vshrl.u32 683565275, %v1346
        %v1348 = vshll.u32 683565275, %v1345
        %v1349 = vshrl.u32 2475754826, %v1346
        %v1350 = vor.u32 %v1348, %v1349
        %v1351 = vshll.u32 2475754826, %v1345
        %v1352 = vshrl.u32 2131351028, %v1346
        %v1353 = vor.u32 %v1351, %v1352
        %v1354 = vshll.u32 2131351028, %v1345
        %v1355 = vshrl.u32 2102212464, %v1346
        %v1356 = vor.u32 %v1354, %v1355
        %v1357 = vshll.u32 2102212464, %v1345
        %v1358 = vshrl.u32 920167782, %v1346
        %v1359 = vor.u32 %v1357, %v1358
        %v1360 = vshll.u32 920167782, %v1345
        %v1361 = vshrl.u32 1326507024, %v1346
        %v1362 = vor.u32 %v1360, %v1361
        %vm1363 = vcmp.lt.s32.totalorder %v1344, 1
        %vm1364 = vcmp.lt.s32.totalorder %v1344, 2
        %vm1365 = vcmp.lt.s32.totalorder %v1344, 3
        %vm1366 = vcmp.lt.s32.totalorder %v1344, 4
        %v1367 = vsel %vm1363, %v1347, %v1350
        %v1368 = vsel %vm1366, %v1356, 2102212464
        %v1369 = vsel %vm1365, %v1353, %v1368
        %v1370 = vsel %vm1364, %v1367, %v1369
        %v1371 = vsel %vm1363, %v1350, %v1353
        %v1372 = vsel %vm1366, %v1359, 920167782
        %v1373 = vsel %vm1365, %v1356, %v1372
        %v1374 = vsel %vm1364, %v1371, %v1373
        %v1375 = vsel %vm1363, %v1353, %v1356
        %v1376 = vsel %vm1366, %v1362, 1326507024
        %v1377 = vsel %vm1365, %v1359, %v1376
        %v1378 = vsel %vm1364, %v1375, %v1377
        %v1379 = vshll.u32 %v1339, 8
        %v1380 = vmul.u32.u64.compose %v1379, %v1378
        %v1381 = vextract.low.u32 %v1380
        %v1382 = vextract.high.u32 %v1380
        %v1383 = vmul.u32.u64.compose %v1379, %v1374
        %v1384 = vextract.low.u32 %v1383
        %v1385 = vextract.high.u32 %v1383
        %v1386 = vmul.u32 %v1379, %v1370
        %v1387 = vadd.s32 %v1382, %v1384
        %vm1388 = vc.u32 %v1382, %v1384
        %v1389 = vadd.s32 %v1385, 1
        %v1390 = vsel %vm1388, %v1389, %v1385
        %v1391 = vadd.s32 %v1386, %v1390
        %v1392 = vadd.s32 %v1391, 536870912
        %v1393 = vshrl.u32 %v1392, 30
        %v1394 = vshll.u32 %v1393, 30
        %v1395 = vsub.s32 %v1391, %v1394
        %vm1396 = vcmp.lt.s32.totalorder %v1395, 0
        %v1397 = vsub.s32 0, %v1395
        %v1398 = vsel %vm1396, %v1397, %v1395
        %v1399 = vclz %v1398
        %v1400 = vsub.s32 %v1399, 2
        %vm1401 = vcmp.gt.s32.totalorder 0, %v1400
        %v1402 = vsel %vm1401, 0, %v1400
        %v1403 = vsub.s32 32, %v1402
        %v1404 = vshll.u32 %v1395, %v1402
        %v1405 = vshrl.u32 %v1387, %v1403
        %v1406 = vor.u32 %v1404, %v1405
        %v1407 = vsub.s32 4294967266, %v1402
        %v1408 = vadd.s32 %v1407, 127
        %v1409 = vshll.u32 %v1408, 23
        %v1410 = vor.u32 4788187, %v1409
        %v1411 = vand.u32 2147483647, %v1410
        %v1413 = vcvt.s32.f32 %v1406
        %v1414 = vmul.f32 %v1413, %v1411
        %v1415 = vxor.u32 %v1414, 2147483648
        %v1416 = vsel %vm1333, %v1415, %v1414
        %v1417 = vsub.s32 4, %v1393
        %v1418 = vsel %vm1333, %v1417, %v1393
        %v1419 = vsel %vm1332, %v388, %v1416
        %v1420 = vsel %vm1332, 0, %v1418
        %v1421 = vcosq.f32.pop %v1419
        %v1422 = vsinq.f32.pop %v1419
        %vm1423 = vweird.f32 %v388
        %v1424 = vadd.s32 %v1420, 3
        %v1425 = vand.u32 %v1424, 3
        %vm1426 = vcmp.lt.s32.totalorder %v1425, 2
        %vm1427 = vcmp.eq.s32.totalorder %v1425, 0
        %v1428 = vxor.u32 %v1422, 2147483648
        %v1429 = vsel %vm1427, %v1421, %v1428
        %vm1430 = vcmp.eq.s32.totalorder %v1425, 2
        %v1431 = vxor.u32 %v1421, 2147483648
        %v1432 = vsel %vm1430, %v1431, %v1422
        %v1433 = vsel %vm1426, %v1429, %v1432
        %v1434 = vsel %vm1423, nan, %v1433
        %v1435 = vand.u32 2147483647, %v389
        %vm1436 = vcmp.le.f32.partialorder %v1435, 0.7853982
        %vm1437 = vcmp.lt.s32.totalorder %v389, 0
        %v1438 = vand.u32 %v389, 2139095040
        %v1439 = vshrl.u32 %v1438, 23
        %v1440 = vsub.s32 %v1439, 127
        %v1441 = vand.u32 2147483647, %v389
        %v1442 = vand.u32 %v1441, 8388607
        %v1443 = vor.u32 %v1442, 8388608
        %v1444 = vsub.s32 0, %v1443
        %v1445 = vadd.s32 %v1440, 1
        %vm1446 = vcmp.gt.s32.totalorder %v1445, 0
        %v1447 = vsel %vm1446, %v1445, 0
        %v1448 = vshrl.u32 %v1447, 5
        %v1449 = vand.u32 %v1447, 31
        %v1450 = vsub.s32 32, %v1449
        %v1451 = vshrl.u32 683565275, %v1450
        %v1452 = vshll.u32 683565275, %v1449
        %v1453 = vshrl.u32 2475754826, %v1450
        %v1454 = vor.u32 %v1452, %v1453
        %v1455 = vshll.u32 2475754826, %v1449
        %v1456 = vshrl.u32 2131351028, %v1450
        %v1457 = vor.u32 %v1455, %v1456
        %v1458 = vshll.u32 2131351028, %v1449
        %v1459 = vshrl.u32 2102212464, %v1450
        %v1460 = vor.u32 %v1458, %v1459
        %v1461 = vshll.u32 2102212464, %v1449
        %v1462 = vshrl.u32 920167782, %v1450
        %v1463 = vor.u32 %v1461, %v1462
        %v1464 = vshll.u32 920167782, %v1449
        %v1465 = vshrl.u32 1326507024, %v1450
        %v1466 = vor.u32 %v1464, %v1465
        %vm1467 = vcmp.lt.s32.totalorder %v1448, 1
        %vm1468 = vcmp.lt.s32.totalorder %v1448, 2
        %vm1469 = vcmp.lt.s32.totalorder %v1448, 3
        %vm1470 = vcmp.lt.s32.totalorder %v1448, 4
        %v1471 = vsel %vm1467, %v1451, %v1454
        %v1472 = vsel %vm1470, %v1460, 2102212464
        %v1473 = vsel %vm1469, %v1457, %v1472
        %v1474 = vsel %vm1468, %v1471, %v1473
        %v1475 = vsel %vm1467, %v1454, %v1457
        %v1476 = vsel %vm1470, %v1463, 920167782
        %v1477 = vsel %vm1469, %v1460, %v1476
        %v1478 = vsel %vm1468, %v1475, %v1477
        %v1479 = vsel %vm1467, %v1457, %v1460
        %v1480 = vsel %vm1470, %v1466, 1326507024
        %v1481 = vsel %vm1469, %v1463, %v1480
        %v1482 = vsel %vm1468, %v1479, %v1481
        %v1483 = vshll.u32 %v1443, 8
        %v1484 = vmul.u32.u64.compose %v1483, %v1482
        %v1485 = vextract.low.u32 %v1484
        %v1486 = vextract.high.u32 %v1484
        %v1487 = vmul.u32.u64.compose %v1483, %v1478
        %v1488 = vextract.low.u32 %v1487
        %v1489 = vextract.high.u32 %v1487
        %v1490 = vmul.u32 %v1483, %v1474
        %v1491 = vadd.s32 %v1486, %v1488
        %vm1492 = vc.u32 %v1486, %v1488
        %v1493 = vadd.s32 %v1489, 1
        %v1494 = vsel %vm1492, %v1493, %v1489
        %v1495 = vadd.s32 %v1490, %v1494
        %v1496 = vadd.s32 %v1495, 536870912
        %v1497 = vshrl.u32 %v1496, 30
        %v1498 = vshll.u32 %v1497, 30
        %v1499 = vsub.s32 %v1495, %v1498
        %vm1500 = vcmp.lt.s32.totalorder %v1499, 0
        %v1501 = vsub.s32 0, %v1499
        %v1502 = vsel %vm1500, %v1501, %v1499
        %v1503 = vclz %v1502
        %v1504 = vsub.s32 %v1503, 2
        %vm1505 = vcmp.gt.s32.totalorder 0, %v1504
        %v1506 = vsel %vm1505, 0, %v1504
        %v1507 = vsub.s32 32, %v1506
        %v1508 = vshll.u32 %v1499, %v1506
        %v1509 = vshrl.u32 %v1491, %v1507
        %v1510 = vor.u32 %v1508, %v1509
        %v1511 = vsub.s32 4294967266, %v1506
        %v1512 = vadd.s32 %v1511, 127
        %v1513 = vshll.u32 %v1512, 23
        %v1514 = vor.u32 4788187, %v1513
        %v1515 = vand.u32 2147483647, %v1514
        %v1517 = vcvt.s32.f32 %v1510
        %v1518 = vmul.f32 %v1517, %v1515
        %v1519 = vxor.u32 %v1518, 2147483648
        %v1520 = vsel %vm1437, %v1519, %v1518
        %v1521 = vsub.s32 4, %v1497
        %v1522 = vsel %vm1437, %v1521, %v1497
        %v1523 = vsel %vm1436, %v389, %v1520
        %v1524 = vsel %vm1436, 0, %v1522
        %v1525 = vcosq.f32.pop %v1523
        %v1526 = vsinq.f32.pop %v1523
        %vm1527 = vweird.f32 %v389
        %v1528 = vadd.s32 %v1524, 3
        %v1529 = vand.u32 %v1528, 3
        %vm1530 = vcmp.lt.s32.totalorder %v1529, 2
        %vm1531 = vcmp.eq.s32.totalorder %v1529, 0
        %v1532 = vxor.u32 %v1526, 2147483648
        %v1533 = vsel %vm1531, %v1525, %v1532
        %vm1534 = vcmp.eq.s32.totalorder %v1529, 2
        %v1535 = vxor.u32 %v1525, 2147483648
        %v1536 = vsel %vm1534, %v1535, %v1526
        %v1537 = vsel %vm1530, %v1533, %v1536
        %v1538 = vsel %vm1527, nan, %v1537
        %v1539 = vand.u32 2147483647, %v390
        %vm1540 = vcmp.le.f32.partialorder %v1539, 0.7853982
        %vm1541 = vcmp.lt.s32.totalorder %v390, 0
        %v1542 = vand.u32 %v390, 2139095040
        %v1543 = vshrl.u32 %v1542, 23
        %v1544 = vsub.s32 %v1543, 127
        %v1545 = vand.u32 2147483647, %v390
        %v1546 = vand.u32 %v1545, 8388607
        %v1547 = vor.u32 %v1546, 8388608
        %v1548 = vsub.s32 0, %v1547
        %v1549 = vadd.s32 %v1544, 1
        %vm1550 = vcmp.gt.s32.totalorder %v1549, 0
        %v1551 = vsel %vm1550, %v1549, 0
        %v1552 = vshrl.u32 %v1551, 5
        %v1553 = vand.u32 %v1551, 31
        %v1554 = vsub.s32 32, %v1553
        %v1555 = vshrl.u32 683565275, %v1554
        %v1556 = vshll.u32 683565275, %v1553
        %v1557 = vshrl.u32 2475754826, %v1554
        %v1558 = vor.u32 %v1556, %v1557
        %v1559 = vshll.u32 2475754826, %v1553
        %v1560 = vshrl.u32 2131351028, %v1554
        %v1561 = vor.u32 %v1559, %v1560
        %v1562 = vshll.u32 2131351028, %v1553
        %v1563 = vshrl.u32 2102212464, %v1554
        %v1564 = vor.u32 %v1562, %v1563
        %v1565 = vshll.u32 2102212464, %v1553
        %v1566 = vshrl.u32 920167782, %v1554
        %v1567 = vor.u32 %v1565, %v1566
        %v1568 = vshll.u32 920167782, %v1553
        %v1569 = vshrl.u32 1326507024, %v1554
        %v1570 = vor.u32 %v1568, %v1569
        %vm1571 = vcmp.lt.s32.totalorder %v1552, 1
        %vm1572 = vcmp.lt.s32.totalorder %v1552, 2
        %vm1573 = vcmp.lt.s32.totalorder %v1552, 3
        %vm1574 = vcmp.lt.s32.totalorder %v1552, 4
        %v1575 = vsel %vm1571, %v1555, %v1558
        %v1576 = vsel %vm1574, %v1564, 2102212464
        %v1577 = vsel %vm1573, %v1561, %v1576
        %v1578 = vsel %vm1572, %v1575, %v1577
        %v1579 = vsel %vm1571, %v1558, %v1561
        %v1580 = vsel %vm1574, %v1567, 920167782
        %v1581 = vsel %vm1573, %v1564, %v1580
        %v1582 = vsel %vm1572, %v1579, %v1581
        %v1583 = vsel %vm1571, %v1561, %v1564
        %v1584 = vsel %vm1574, %v1570, 1326507024
        %v1585 = vsel %vm1573, %v1567, %v1584
        %v1586 = vsel %vm1572, %v1583, %v1585
        %v1587 = vshll.u32 %v1547, 8
        %v1588 = vmul.u32.u64.compose %v1587, %v1586
        %v1589 = vextract.low.u32 %v1588
        %v1590 = vextract.high.u32 %v1588
        %v1591 = vmul.u32.u64.compose %v1587, %v1582
        %v1592 = vextract.low.u32 %v1591
        %v1593 = vextract.high.u32 %v1591
        %v1594 = vmul.u32 %v1587, %v1578
        %v1595 = vadd.s32 %v1590, %v1592
        %vm1596 = vc.u32 %v1590, %v1592
        %v1597 = vadd.s32 %v1593, 1
        %v1598 = vsel %vm1596, %v1597, %v1593
        %v1599 = vadd.s32 %v1594, %v1598
        %v1600 = vadd.s32 %v1599, 536870912
        %v1601 = vshrl.u32 %v1600, 30
        %v1602 = vshll.u32 %v1601, 30
        %v1603 = vsub.s32 %v1599, %v1602
        %vm1604 = vcmp.lt.s32.totalorder %v1603, 0
        %v1605 = vsub.s32 0, %v1603
        %v1606 = vsel %vm1604, %v1605, %v1603
        %v1607 = vclz %v1606
        %v1608 = vsub.s32 %v1607, 2
        %vm1609 = vcmp.gt.s32.totalorder 0, %v1608
        %v1610 = vsel %vm1609, 0, %v1608
        %v1611 = vsub.s32 32, %v1610
        %v1612 = vshll.u32 %v1603, %v1610
        %v1613 = vshrl.u32 %v1595, %v1611
        %v1614 = vor.u32 %v1612, %v1613
        %v1615 = vsub.s32 4294967266, %v1610
        %v1616 = vadd.s32 %v1615, 127
        %v1617 = vshll.u32 %v1616, 23
        %v1618 = vor.u32 4788187, %v1617
        %v1619 = vand.u32 2147483647, %v1618
        %v1621 = vcvt.s32.f32 %v1614
        %v1622 = vmul.f32 %v1621, %v1619
        %v1623 = vxor.u32 %v1622, 2147483648
        %v1624 = vsel %vm1541, %v1623, %v1622
        %v1625 = vsub.s32 4, %v1601
        %v1626 = vsel %vm1541, %v1625, %v1601
        %v1627 = vsel %vm1540, %v390, %v1624
        %v1628 = vsel %vm1540, 0, %v1626
        %v1629 = vcosq.f32.pop %v1627
        %v1630 = vsinq.f32.pop %v1627
        %vm1631 = vweird.f32 %v390
        %v1632 = vadd.s32 %v1628, 3
        %v1633 = vand.u32 %v1632, 3
        %vm1634 = vcmp.lt.s32.totalorder %v1633, 2
        %vm1635 = vcmp.eq.s32.totalorder %v1633, 0
        %v1636 = vxor.u32 %v1630, 2147483648
        %v1637 = vsel %vm1635, %v1629, %v1636
        %vm1638 = vcmp.eq.s32.totalorder %v1633, 2
        %v1639 = vxor.u32 %v1629, 2147483648
        %v1640 = vsel %vm1638, %v1639, %v1630
        %v1641 = vsel %vm1634, %v1637, %v1640
        %v1642 = vsel %vm1631, nan, %v1641
        %v1643 = vand.u32 2147483647, %v391
        %vm1644 = vcmp.le.f32.partialorder %v1643, 0.7853982
        %vm1645 = vcmp.lt.s32.totalorder %v391, 0
        %v1646 = vand.u32 %v391, 2139095040
        %v1647 = vshrl.u32 %v1646, 23
        %v1648 = vsub.s32 %v1647, 127
        %v1649 = vand.u32 2147483647, %v391
        %v1650 = vand.u32 %v1649, 8388607
        %v1651 = vor.u32 %v1650, 8388608
        %v1652 = vsub.s32 0, %v1651
        %v1653 = vadd.s32 %v1648, 1
        %vm1654 = vcmp.gt.s32.totalorder %v1653, 0
        %v1655 = vsel %vm1654, %v1653, 0
        %v1656 = vshrl.u32 %v1655, 5
        %v1657 = vand.u32 %v1655, 31
        %v1658 = vsub.s32 32, %v1657
        %v1659 = vshrl.u32 683565275, %v1658
        %v1660 = vshll.u32 683565275, %v1657
        %v1661 = vshrl.u32 2475754826, %v1658
        %v1662 = vor.u32 %v1660, %v1661
        %v1663 = vshll.u32 2475754826, %v1657
        %v1664 = vshrl.u32 2131351028, %v1658
        %v1665 = vor.u32 %v1663, %v1664
        %v1666 = vshll.u32 2131351028, %v1657
        %v1667 = vshrl.u32 2102212464, %v1658
        %v1668 = vor.u32 %v1666, %v1667
        %v1669 = vshll.u32 2102212464, %v1657
        %v1670 = vshrl.u32 920167782, %v1658
        %v1671 = vor.u32 %v1669, %v1670
        %v1672 = vshll.u32 920167782, %v1657
        %v1673 = vshrl.u32 1326507024, %v1658
        %v1674 = vor.u32 %v1672, %v1673
        %vm1675 = vcmp.lt.s32.totalorder %v1656, 1
        %vm1676 = vcmp.lt.s32.totalorder %v1656, 2
        %vm1677 = vcmp.lt.s32.totalorder %v1656, 3
        %vm1678 = vcmp.lt.s32.totalorder %v1656, 4
        %v1679 = vsel %vm1675, %v1659, %v1662
        %v1680 = vsel %vm1678, %v1668, 2102212464
        %v1681 = vsel %vm1677, %v1665, %v1680
        %v1682 = vsel %vm1676, %v1679, %v1681
        %v1683 = vsel %vm1675, %v1662, %v1665
        %v1684 = vsel %vm1678, %v1671, 920167782
        %v1685 = vsel %vm1677, %v1668, %v1684
        %v1686 = vsel %vm1676, %v1683, %v1685
        %v1687 = vsel %vm1675, %v1665, %v1668
        %v1688 = vsel %vm1678, %v1674, 1326507024
        %v1689 = vsel %vm1677, %v1671, %v1688
        %v1690 = vsel %vm1676, %v1687, %v1689
        %v1691 = vshll.u32 %v1651, 8
        %v1692 = vmul.u32.u64.compose %v1691, %v1690
        %v1693 = vextract.low.u32 %v1692
        %v1694 = vextract.high.u32 %v1692
        %v1695 = vmul.u32.u64.compose %v1691, %v1686
        %v1696 = vextract.low.u32 %v1695
        %v1697 = vextract.high.u32 %v1695
        %v1698 = vmul.u32 %v1691, %v1682
        %v1699 = vadd.s32 %v1694, %v1696
        %vm1700 = vc.u32 %v1694, %v1696
        %v1701 = vadd.s32 %v1697, 1
        %v1702 = vsel %vm1700, %v1701, %v1697
        %v1703 = vadd.s32 %v1698, %v1702
        %v1704 = vadd.s32 %v1703, 536870912
        %v1705 = vshrl.u32 %v1704, 30
        %v1706 = vshll.u32 %v1705, 30
        %v1707 = vsub.s32 %v1703, %v1706
        %vm1708 = vcmp.lt.s32.totalorder %v1707, 0
        %v1709 = vsub.s32 0, %v1707
        %v1710 = vsel %vm1708, %v1709, %v1707
        %v1711 = vclz %v1710
        %v1712 = vsub.s32 %v1711, 2
        %vm1713 = vcmp.gt.s32.totalorder 0, %v1712
        %v1714 = vsel %vm1713, 0, %v1712
        %v1715 = vsub.s32 32, %v1714
        %v1716 = vshll.u32 %v1707, %v1714
        %v1717 = vshrl.u32 %v1699, %v1715
        %v1718 = vor.u32 %v1716, %v1717
        %v1719 = vsub.s32 4294967266, %v1714
        %v1720 = vadd.s32 %v1719, 127
        %v1721 = vshll.u32 %v1720, 23
        %v1722 = vor.u32 4788187, %v1721
        %v1723 = vand.u32 2147483647, %v1722
        %v1725 = vcvt.s32.f32 %v1718
        %v1726 = vmul.f32 %v1725, %v1723
        %v1727 = vxor.u32 %v1726, 2147483648
        %v1728 = vsel %vm1645, %v1727, %v1726
        %v1729 = vsub.s32 4, %v1705
        %v1730 = vsel %vm1645, %v1729, %v1705
        %v1731 = vsel %vm1644, %v391, %v1728
        %v1732 = vsel %vm1644, 0, %v1730
        %v1733 = vcosq.f32.pop %v1731
        %v1734 = vsinq.f32.pop %v1731
        %vm1735 = vweird.f32 %v391
        %v1736 = vadd.s32 %v1732, 3
        %v1737 = vand.u32 %v1736, 3
        %vm1738 = vcmp.lt.s32.totalorder %v1737, 2
        %vm1739 = vcmp.eq.s32.totalorder %v1737, 0
        %v1740 = vxor.u32 %v1734, 2147483648
        %v1741 = vsel %vm1739, %v1733, %v1740
        %vm1742 = vcmp.eq.s32.totalorder %v1737, 2
        %v1743 = vxor.u32 %v1733, 2147483648
        %v1744 = vsel %vm1742, %v1743, %v1734
        %v1745 = vsel %vm1738, %v1741, %v1744
        %v1746 = vsel %vm1735, nan, %v1745
        %v1747 = vand.u32 2147483647, %v392
        %vm1748 = vcmp.le.f32.partialorder %v1747, 0.7853982
        %vm1749 = vcmp.lt.s32.totalorder %v392, 0
        %v1750 = vand.u32 %v392, 2139095040
        %v1751 = vshrl.u32 %v1750, 23
        %v1752 = vsub.s32 %v1751, 127
        %v1753 = vand.u32 2147483647, %v392
        %v1754 = vand.u32 %v1753, 8388607
        %v1755 = vor.u32 %v1754, 8388608
        %v1756 = vsub.s32 0, %v1755
        %v1757 = vadd.s32 %v1752, 1
        %vm1758 = vcmp.gt.s32.totalorder %v1757, 0
        %v1759 = vsel %vm1758, %v1757, 0
        %v1760 = vshrl.u32 %v1759, 5
        %v1761 = vand.u32 %v1759, 31
        %v1762 = vsub.s32 32, %v1761
        %v1763 = vshrl.u32 683565275, %v1762
        %v1764 = vshll.u32 683565275, %v1761
        %v1765 = vshrl.u32 2475754826, %v1762
        %v1766 = vor.u32 %v1764, %v1765
        %v1767 = vshll.u32 2475754826, %v1761
        %v1768 = vshrl.u32 2131351028, %v1762
        %v1769 = vor.u32 %v1767, %v1768
        %v1770 = vshll.u32 2131351028, %v1761
        %v1771 = vshrl.u32 2102212464, %v1762
        %v1772 = vor.u32 %v1770, %v1771
        %v1773 = vshll.u32 2102212464, %v1761
        %v1774 = vshrl.u32 920167782, %v1762
        %v1775 = vor.u32 %v1773, %v1774
        %v1776 = vshll.u32 920167782, %v1761
        %v1777 = vshrl.u32 1326507024, %v1762
        %v1778 = vor.u32 %v1776, %v1777
        %vm1779 = vcmp.lt.s32.totalorder %v1760, 1
        %vm1780 = vcmp.lt.s32.totalorder %v1760, 2
        %vm1781 = vcmp.lt.s32.totalorder %v1760, 3
        %vm1782 = vcmp.lt.s32.totalorder %v1760, 4
        %v1783 = vsel %vm1779, %v1763, %v1766
        %v1784 = vsel %vm1782, %v1772, 2102212464
        %v1785 = vsel %vm1781, %v1769, %v1784
        %v1786 = vsel %vm1780, %v1783, %v1785
        %v1787 = vsel %vm1779, %v1766, %v1769
        %v1788 = vsel %vm1782, %v1775, 920167782
        %v1789 = vsel %vm1781, %v1772, %v1788
        %v1790 = vsel %vm1780, %v1787, %v1789
        %v1791 = vsel %vm1779, %v1769, %v1772
        %v1792 = vsel %vm1782, %v1778, 1326507024
        %v1793 = vsel %vm1781, %v1775, %v1792
        %v1794 = vsel %vm1780, %v1791, %v1793
        %v1795 = vshll.u32 %v1755, 8
        %v1796 = vmul.u32.u64.compose %v1795, %v1794
        %v1797 = vextract.low.u32 %v1796
        %v1798 = vextract.high.u32 %v1796
        %v1799 = vmul.u32.u64.compose %v1795, %v1790
        %v1800 = vextract.low.u32 %v1799
        %v1801 = vextract.high.u32 %v1799
        %v1802 = vmul.u32 %v1795, %v1786
        %v1803 = vadd.s32 %v1798, %v1800
        %vm1804 = vc.u32 %v1798, %v1800
        %v1805 = vadd.s32 %v1801, 1
        %v1806 = vsel %vm1804, %v1805, %v1801
        %v1807 = vadd.s32 %v1802, %v1806
        %v1808 = vadd.s32 %v1807, 536870912
        %v1809 = vshrl.u32 %v1808, 30
        %v1810 = vshll.u32 %v1809, 30
        %v1811 = vsub.s32 %v1807, %v1810
        %vm1812 = vcmp.lt.s32.totalorder %v1811, 0
        %v1813 = vsub.s32 0, %v1811
        %v1814 = vsel %vm1812, %v1813, %v1811
        %v1815 = vclz %v1814
        %v1816 = vsub.s32 %v1815, 2
        %vm1817 = vcmp.gt.s32.totalorder 0, %v1816
        %v1818 = vsel %vm1817, 0, %v1816
        %v1819 = vsub.s32 32, %v1818
        %v1820 = vshll.u32 %v1811, %v1818
        %v1821 = vshrl.u32 %v1803, %v1819
        %v1822 = vor.u32 %v1820, %v1821
        %v1823 = vsub.s32 4294967266, %v1818
        %v1824 = vadd.s32 %v1823, 127
        %v1825 = vshll.u32 %v1824, 23
        %v1826 = vor.u32 4788187, %v1825
        %v1827 = vand.u32 2147483647, %v1826
        %v1829 = vcvt.s32.f32 %v1822
        %v1830 = vmul.f32 %v1829, %v1827
        %v1831 = vxor.u32 %v1830, 2147483648
        %v1832 = vsel %vm1749, %v1831, %v1830
        %v1833 = vsub.s32 4, %v1809
        %v1834 = vsel %vm1749, %v1833, %v1809
        %v1835 = vsel %vm1748, %v392, %v1832
        %v1836 = vsel %vm1748, 0, %v1834
        %v1837 = vcosq.f32.pop %v1835
        %v1838 = vsinq.f32.pop %v1835
        %vm1839 = vweird.f32 %v392
        %v1840 = vadd.s32 %v1836, 3
        %v1841 = vand.u32 %v1840, 3
        %vm1842 = vcmp.lt.s32.totalorder %v1841, 2
        %vm1843 = vcmp.eq.s32.totalorder %v1841, 0
        %v1844 = vxor.u32 %v1838, 2147483648
        %v1845 = vsel %vm1843, %v1837, %v1844
        %vm1846 = vcmp.eq.s32.totalorder %v1841, 2
        %v1847 = vxor.u32 %v1837, 2147483648
        %v1848 = vsel %vm1846, %v1847, %v1838
        %v1849 = vsel %vm1842, %v1845, %v1848
        %v1850 = vsel %vm1839, nan, %v1849
        %v1851 = vand.u32 2147483647, %v393
        %vm1852 = vcmp.le.f32.partialorder %v1851, 0.7853982
        %vm1853 = vcmp.lt.s32.totalorder %v393, 0
        %v1854 = vand.u32 %v393, 2139095040
        %v1855 = vshrl.u32 %v1854, 23
        %v1856 = vsub.s32 %v1855, 127
        %v1857 = vand.u32 2147483647, %v393
        %v1858 = vand.u32 %v1857, 8388607
        %v1859 = vor.u32 %v1858, 8388608
        %v1860 = vsub.s32 0, %v1859
        %v1861 = vadd.s32 %v1856, 1
        %vm1862 = vcmp.gt.s32.totalorder %v1861, 0
        %v1863 = vsel %vm1862, %v1861, 0
        %v1864 = vshrl.u32 %v1863, 5
        %v1865 = vand.u32 %v1863, 31
        %v1866 = vsub.s32 32, %v1865
        %v1867 = vshrl.u32 683565275, %v1866
        %v1868 = vshll.u32 683565275, %v1865
        %v1869 = vshrl.u32 2475754826, %v1866
        %v1870 = vor.u32 %v1868, %v1869
        %v1871 = vshll.u32 2475754826, %v1865
        %v1872 = vshrl.u32 2131351028, %v1866
        %v1873 = vor.u32 %v1871, %v1872
        %v1874 = vshll.u32 2131351028, %v1865
        %v1875 = vshrl.u32 2102212464, %v1866
        %v1876 = vor.u32 %v1874, %v1875
        %v1877 = vshll.u32 2102212464, %v1865
        %v1878 = vshrl.u32 920167782, %v1866
        %v1879 = vor.u32 %v1877, %v1878
        %v1880 = vshll.u32 920167782, %v1865
        %v1881 = vshrl.u32 1326507024, %v1866
        %v1882 = vor.u32 %v1880, %v1881
        %vm1883 = vcmp.lt.s32.totalorder %v1864, 1
        %vm1884 = vcmp.lt.s32.totalorder %v1864, 2
        %vm1885 = vcmp.lt.s32.totalorder %v1864, 3
        %vm1886 = vcmp.lt.s32.totalorder %v1864, 4
        %v1887 = vsel %vm1883, %v1867, %v1870
        %v1888 = vsel %vm1886, %v1876, 2102212464
        %v1889 = vsel %vm1885, %v1873, %v1888
        %v1890 = vsel %vm1884, %v1887, %v1889
        %v1891 = vsel %vm1883, %v1870, %v1873
        %v1892 = vsel %vm1886, %v1879, 920167782
        %v1893 = vsel %vm1885, %v1876, %v1892
        %v1894 = vsel %vm1884, %v1891, %v1893
        %v1895 = vsel %vm1883, %v1873, %v1876
        %v1896 = vsel %vm1886, %v1882, 1326507024
        %v1897 = vsel %vm1885, %v1879, %v1896
        %v1898 = vsel %vm1884, %v1895, %v1897
        %v1899 = vshll.u32 %v1859, 8
        %v1900 = vmul.u32.u64.compose %v1899, %v1898
        %v1901 = vextract.low.u32 %v1900
        %v1902 = vextract.high.u32 %v1900
        %v1903 = vmul.u32.u64.compose %v1899, %v1894
        %v1904 = vextract.low.u32 %v1903
        %v1905 = vextract.high.u32 %v1903
        %v1906 = vmul.u32 %v1899, %v1890
        %v1907 = vadd.s32 %v1902, %v1904
        %vm1908 = vc.u32 %v1902, %v1904
        %v1909 = vadd.s32 %v1905, 1
        %v1910 = vsel %vm1908, %v1909, %v1905
        %v1911 = vadd.s32 %v1906, %v1910
        %v1912 = vadd.s32 %v1911, 536870912
        %v1913 = vshrl.u32 %v1912, 30
        %v1914 = vshll.u32 %v1913, 30
        %v1915 = vsub.s32 %v1911, %v1914
        %vm1916 = vcmp.lt.s32.totalorder %v1915, 0
        %v1917 = vsub.s32 0, %v1915
        %v1918 = vsel %vm1916, %v1917, %v1915
        %v1919 = vclz %v1918
        %v1920 = vsub.s32 %v1919, 2
        %vm1921 = vcmp.gt.s32.totalorder 0, %v1920
        %v1922 = vsel %vm1921, 0, %v1920
        %v1923 = vsub.s32 32, %v1922
        %v1924 = vshll.u32 %v1915, %v1922
        %v1925 = vshrl.u32 %v1907, %v1923
        %v1926 = vor.u32 %v1924, %v1925
        %v1927 = vsub.s32 4294967266, %v1922
        %v1928 = vadd.s32 %v1927, 127
        %v1929 = vshll.u32 %v1928, 23
        %v1930 = vor.u32 4788187, %v1929
        %v1931 = vand.u32 2147483647, %v1930
        %v1933 = vcvt.s32.f32 %v1926
        %v1934 = vmul.f32 %v1933, %v1931
        %v1935 = vxor.u32 %v1934, 2147483648
        %v1936 = vsel %vm1853, %v1935, %v1934
        %v1937 = vsub.s32 4, %v1913
        %v1938 = vsel %vm1853, %v1937, %v1913
        %v1939 = vsel %vm1852, %v393, %v1936
        %v1940 = vsel %vm1852, 0, %v1938
        %v1941 = vcosq.f32.pop %v1939
        %v1942 = vsinq.f32.pop %v1939
        %vm1943 = vweird.f32 %v393
        %v1944 = vadd.s32 %v1940, 3
        %v1945 = vand.u32 %v1944, 3
        %vm1946 = vcmp.lt.s32.totalorder %v1945, 2
        %vm1947 = vcmp.eq.s32.totalorder %v1945, 0
        %v1948 = vxor.u32 %v1942, 2147483648
        %v1949 = vsel %vm1947, %v1941, %v1948
        %vm1950 = vcmp.eq.s32.totalorder %v1945, 2
        %v1951 = vxor.u32 %v1941, 2147483648
        %v1952 = vsel %vm1950, %v1951, %v1942
        %v1953 = vsel %vm1946, %v1949, %v1952
        %v1954 = vsel %vm1943, nan, %v1953
        %v1955 = vand.u32 2147483647, %v394
        %vm1956 = vcmp.le.f32.partialorder %v1955, 0.7853982
        %vm1957 = vcmp.lt.s32.totalorder %v394, 0
        %v1958 = vand.u32 %v394, 2139095040
        %v1959 = vshrl.u32 %v1958, 23
        %v1960 = vsub.s32 %v1959, 127
        %v1961 = vand.u32 2147483647, %v394
        %v1962 = vand.u32 %v1961, 8388607
        %v1963 = vor.u32 %v1962, 8388608
        %v1964 = vsub.s32 0, %v1963
        %v1965 = vadd.s32 %v1960, 1
        %vm1966 = vcmp.gt.s32.totalorder %v1965, 0
        %v1967 = vsel %vm1966, %v1965, 0
        %v1968 = vshrl.u32 %v1967, 5
        %v1969 = vand.u32 %v1967, 31
        %v1970 = vsub.s32 32, %v1969
        %v1971 = vshrl.u32 683565275, %v1970
        %v1972 = vshll.u32 683565275, %v1969
        %v1973 = vshrl.u32 2475754826, %v1970
        %v1974 = vor.u32 %v1972, %v1973
        %v1975 = vshll.u32 2475754826, %v1969
        %v1976 = vshrl.u32 2131351028, %v1970
        %v1977 = vor.u32 %v1975, %v1976
        %v1978 = vshll.u32 2131351028, %v1969
        %v1979 = vshrl.u32 2102212464, %v1970
        %v1980 = vor.u32 %v1978, %v1979
        %v1981 = vshll.u32 2102212464, %v1969
        %v1982 = vshrl.u32 920167782, %v1970
        %v1983 = vor.u32 %v1981, %v1982
        %v1984 = vshll.u32 920167782, %v1969
        %v1985 = vshrl.u32 1326507024, %v1970
        %v1986 = vor.u32 %v1984, %v1985
        %vm1987 = vcmp.lt.s32.totalorder %v1968, 1
        %vm1988 = vcmp.lt.s32.totalorder %v1968, 2
        %vm1989 = vcmp.lt.s32.totalorder %v1968, 3
        %vm1990 = vcmp.lt.s32.totalorder %v1968, 4
        %v1991 = vsel %vm1987, %v1971, %v1974
        %v1992 = vsel %vm1990, %v1980, 2102212464
        %v1993 = vsel %vm1989, %v1977, %v1992
        %v1994 = vsel %vm1988, %v1991, %v1993
        %v1995 = vsel %vm1987, %v1974, %v1977
        %v1996 = vsel %vm1990, %v1983, 920167782
        %v1997 = vsel %vm1989, %v1980, %v1996
        %v1998 = vsel %vm1988, %v1995, %v1997
        %v1999 = vsel %vm1987, %v1977, %v1980
        %v2000 = vsel %vm1990, %v1986, 1326507024
        %v2001 = vsel %vm1989, %v1983, %v2000
        %v2002 = vsel %vm1988, %v1999, %v2001
        %v2003 = vshll.u32 %v1963, 8
        %v2004 = vmul.u32.u64.compose %v2003, %v2002
        %v2005 = vextract.low.u32 %v2004
        %v2006 = vextract.high.u32 %v2004
        %v2007 = vmul.u32.u64.compose %v2003, %v1998
        %v2008 = vextract.low.u32 %v2007
        %v2009 = vextract.high.u32 %v2007
        %v2010 = vmul.u32 %v2003, %v1994
        %v2011 = vadd.s32 %v2006, %v2008
        %vm2012 = vc.u32 %v2006, %v2008
        %v2013 = vadd.s32 %v2009, 1
        %v2014 = vsel %vm2012, %v2013, %v2009
        %v2015 = vadd.s32 %v2010, %v2014
        %v2016 = vadd.s32 %v2015, 536870912
        %v2017 = vshrl.u32 %v2016, 30
        %v2018 = vshll.u32 %v2017, 30
        %v2019 = vsub.s32 %v2015, %v2018
        %vm2020 = vcmp.lt.s32.totalorder %v2019, 0
        %v2021 = vsub.s32 0, %v2019
        %v2022 = vsel %vm2020, %v2021, %v2019
        %v2023 = vclz %v2022
        %v2024 = vsub.s32 %v2023, 2
        %vm2025 = vcmp.gt.s32.totalorder 0, %v2024
        %v2026 = vsel %vm2025, 0, %v2024
        %v2027 = vsub.s32 32, %v2026
        %v2028 = vshll.u32 %v2019, %v2026
        %v2029 = vshrl.u32 %v2011, %v2027
        %v2030 = vor.u32 %v2028, %v2029
        %v2031 = vsub.s32 4294967266, %v2026
        %v2032 = vadd.s32 %v2031, 127
        %v2033 = vshll.u32 %v2032, 23
        %v2034 = vor.u32 4788187, %v2033
        %v2035 = vand.u32 2147483647, %v2034
        %v2037 = vcvt.s32.f32 %v2030
        %v2038 = vmul.f32 %v2037, %v2035
        %v2039 = vxor.u32 %v2038, 2147483648
        %v2040 = vsel %vm1957, %v2039, %v2038
        %v2041 = vsub.s32 4, %v2017
        %v2042 = vsel %vm1957, %v2041, %v2017
        %v2043 = vsel %vm1956, %v394, %v2040
        %v2044 = vsel %vm1956, 0, %v2042
        %v2045 = vcosq.f32.pop %v2043
        %v2046 = vsinq.f32.pop %v2043
        %vm2047 = vweird.f32 %v394
        %v2048 = vadd.s32 %v2044, 3
        %v2049 = vand.u32 %v2048, 3
        %vm2050 = vcmp.lt.s32.totalorder %v2049, 2
        %vm2051 = vcmp.eq.s32.totalorder %v2049, 0
        %v2052 = vxor.u32 %v2046, 2147483648
        %v2053 = vsel %vm2051, %v2045, %v2052
        %vm2054 = vcmp.eq.s32.totalorder %v2049, 2
        %v2055 = vxor.u32 %v2045, 2147483648
        %v2056 = vsel %vm2054, %v2055, %v2046
        %v2057 = vsel %vm2050, %v2053, %v2056
        %v2058 = vsel %vm2047, nan, %v2057
        %v2059 = vand.u32 2147483647, %v379
        %vm2060 = vcmp.le.f32.partialorder %v2059, 0.7853982
        %vm2061 = vcmp.lt.s32.totalorder %v379, 0
        %v2062 = vand.u32 %v379, 2139095040
        %v2063 = vshrl.u32 %v2062, 23
        %v2064 = vsub.s32 %v2063, 127
        %v2065 = vand.u32 2147483647, %v379
        %v2066 = vand.u32 %v2065, 8388607
        %v2067 = vor.u32 %v2066, 8388608
        %v2068 = vsub.s32 0, %v2067
        %v2069 = vadd.s32 %v2064, 1
        %vm2070 = vcmp.gt.s32.totalorder %v2069, 0
        %v2071 = vsel %vm2070, %v2069, 0
        %v2072 = vshrl.u32 %v2071, 5
        %v2073 = vand.u32 %v2071, 31
        %v2074 = vsub.s32 32, %v2073
        %v2075 = vshrl.u32 683565275, %v2074
        %v2076 = vshll.u32 683565275, %v2073
        %v2077 = vshrl.u32 2475754826, %v2074
        %v2078 = vor.u32 %v2076, %v2077
        %v2079 = vshll.u32 2475754826, %v2073
        %v2080 = vshrl.u32 2131351028, %v2074
        %v2081 = vor.u32 %v2079, %v2080
        %v2082 = vshll.u32 2131351028, %v2073
        %v2083 = vshrl.u32 2102212464, %v2074
        %v2084 = vor.u32 %v2082, %v2083
        %v2085 = vshll.u32 2102212464, %v2073
        %v2086 = vshrl.u32 920167782, %v2074
        %v2087 = vor.u32 %v2085, %v2086
        %v2088 = vshll.u32 920167782, %v2073
        %v2089 = vshrl.u32 1326507024, %v2074
        %v2090 = vor.u32 %v2088, %v2089
        %vm2091 = vcmp.lt.s32.totalorder %v2072, 1
        %vm2092 = vcmp.lt.s32.totalorder %v2072, 2
        %vm2093 = vcmp.lt.s32.totalorder %v2072, 3
        %vm2094 = vcmp.lt.s32.totalorder %v2072, 4
        %v2095 = vsel %vm2091, %v2075, %v2078
        %v2096 = vsel %vm2094, %v2084, 2102212464
        %v2097 = vsel %vm2093, %v2081, %v2096
        %v2098 = vsel %vm2092, %v2095, %v2097
        %v2099 = vsel %vm2091, %v2078, %v2081
        %v2100 = vsel %vm2094, %v2087, 920167782
        %v2101 = vsel %vm2093, %v2084, %v2100
        %v2102 = vsel %vm2092, %v2099, %v2101
        %v2103 = vsel %vm2091, %v2081, %v2084
        %v2104 = vsel %vm2094, %v2090, 1326507024
        %v2105 = vsel %vm2093, %v2087, %v2104
        %v2106 = vsel %vm2092, %v2103, %v2105
        %v2107 = vshll.u32 %v2067, 8
        %v2108 = vmul.u32.u64.compose %v2107, %v2106
        %v2109 = vextract.low.u32 %v2108
        %v2110 = vextract.high.u32 %v2108
        %v2111 = vmul.u32.u64.compose %v2107, %v2102
        %v2112 = vextract.low.u32 %v2111
        %v2113 = vextract.high.u32 %v2111
        %v2114 = vmul.u32 %v2107, %v2098
        %v2115 = vadd.s32 %v2110, %v2112
        %vm2116 = vc.u32 %v2110, %v2112
        %v2117 = vadd.s32 %v2113, 1
        %v2118 = vsel %vm2116, %v2117, %v2113
        %v2119 = vadd.s32 %v2114, %v2118
        %v2120 = vadd.s32 %v2119, 536870912
        %v2121 = vshrl.u32 %v2120, 30
        %v2122 = vshll.u32 %v2121, 30
        %v2123 = vsub.s32 %v2119, %v2122
        %vm2124 = vcmp.lt.s32.totalorder %v2123, 0
        %v2125 = vsub.s32 0, %v2123
        %v2126 = vsel %vm2124, %v2125, %v2123
        %v2127 = vclz %v2126
        %v2128 = vsub.s32 %v2127, 2
        %vm2129 = vcmp.gt.s32.totalorder 0, %v2128
        %v2130 = vsel %vm2129, 0, %v2128
        %v2131 = vsub.s32 32, %v2130
        %v2132 = vshll.u32 %v2123, %v2130
        %v2133 = vshrl.u32 %v2115, %v2131
        %v2134 = vor.u32 %v2132, %v2133
        %v2135 = vsub.s32 4294967266, %v2130
        %v2136 = vadd.s32 %v2135, 127
        %v2137 = vshll.u32 %v2136, 23
        %v2138 = vor.u32 4788187, %v2137
        %v2139 = vand.u32 2147483647, %v2138
        %v2141 = vcvt.s32.f32 %v2134
        %v2142 = vmul.f32 %v2141, %v2139
        %v2143 = vxor.u32 %v2142, 2147483648
        %v2144 = vsel %vm2061, %v2143, %v2142
        %v2145 = vsub.s32 4, %v2121
        %v2146 = vsel %vm2061, %v2145, %v2121
        %v2147 = vsel %vm2060, %v379, %v2144
        %v2148 = vsel %vm2060, 0, %v2146
        %v2149 = vcosq.f32.pop %v2147
        %v2150 = vsinq.f32.pop %v2147
        %vm2151 = vweird.f32 %v379
        %v2152 = vand.u32 %v2148, 3
        %vm2153 = vcmp.lt.s32.totalorder %v2152, 2
        %vm2154 = vcmp.eq.s32.totalorder %v2152, 0
        %v2155 = vxor.u32 %v2150, 2147483648
        %v2156 = vsel %vm2154, %v2149, %v2155
        %vm2157 = vcmp.eq.s32.totalorder %v2152, 2
        %v2158 = vxor.u32 %v2149, 2147483648
        %v2159 = vsel %vm2157, %v2158, %v2150
        %v2160 = vsel %vm2153, %v2156, %v2159
        %v2161 = vsel %vm2151, nan, %v2160
        %v2162 = vand.u32 2147483647, %v380
        %vm2163 = vcmp.le.f32.partialorder %v2162, 0.7853982
        %vm2164 = vcmp.lt.s32.totalorder %v380, 0
        %v2165 = vand.u32 %v380, 2139095040
        %v2166 = vshrl.u32 %v2165, 23
        %v2167 = vsub.s32 %v2166, 127
        %v2168 = vand.u32 2147483647, %v380
        %v2169 = vand.u32 %v2168, 8388607
        %v2170 = vor.u32 %v2169, 8388608
        %v2171 = vsub.s32 0, %v2170
        %v2172 = vadd.s32 %v2167, 1
        %vm2173 = vcmp.gt.s32.totalorder %v2172, 0
        %v2174 = vsel %vm2173, %v2172, 0
        %v2175 = vshrl.u32 %v2174, 5
        %v2176 = vand.u32 %v2174, 31
        %v2177 = vsub.s32 32, %v2176
        %v2178 = vshrl.u32 683565275, %v2177
        %v2179 = vshll.u32 683565275, %v2176
        %v2180 = vshrl.u32 2475754826, %v2177
        %v2181 = vor.u32 %v2179, %v2180
        %v2182 = vshll.u32 2475754826, %v2176
        %v2183 = vshrl.u32 2131351028, %v2177
        %v2184 = vor.u32 %v2182, %v2183
        %v2185 = vshll.u32 2131351028, %v2176
        %v2186 = vshrl.u32 2102212464, %v2177
        %v2187 = vor.u32 %v2185, %v2186
        %v2188 = vshll.u32 2102212464, %v2176
        %v2189 = vshrl.u32 920167782, %v2177
        %v2190 = vor.u32 %v2188, %v2189
        %v2191 = vshll.u32 920167782, %v2176
        %v2192 = vshrl.u32 1326507024, %v2177
        %v2193 = vor.u32 %v2191, %v2192
        %vm2194 = vcmp.lt.s32.totalorder %v2175, 1
        %vm2195 = vcmp.lt.s32.totalorder %v2175, 2
        %vm2196 = vcmp.lt.s32.totalorder %v2175, 3
        %vm2197 = vcmp.lt.s32.totalorder %v2175, 4
        %v2198 = vsel %vm2194, %v2178, %v2181
        %v2199 = vsel %vm2197, %v2187, 2102212464
        %v2200 = vsel %vm2196, %v2184, %v2199
        %v2201 = vsel %vm2195, %v2198, %v2200
        %v2202 = vsel %vm2194, %v2181, %v2184
        %v2203 = vsel %vm2197, %v2190, 920167782
        %v2204 = vsel %vm2196, %v2187, %v2203
        %v2205 = vsel %vm2195, %v2202, %v2204
        %v2206 = vsel %vm2194, %v2184, %v2187
        %v2207 = vsel %vm2197, %v2193, 1326507024
        %v2208 = vsel %vm2196, %v2190, %v2207
        %v2209 = vsel %vm2195, %v2206, %v2208
        %v2210 = vshll.u32 %v2170, 8
        %v2211 = vmul.u32.u64.compose %v2210, %v2209
        %v2212 = vextract.low.u32 %v2211
        %v2213 = vextract.high.u32 %v2211
        %v2214 = vmul.u32.u64.compose %v2210, %v2205
        %v2215 = vextract.low.u32 %v2214
        %v2216 = vextract.high.u32 %v2214
        %v2217 = vmul.u32 %v2210, %v2201
        %v2218 = vadd.s32 %v2213, %v2215
        %vm2219 = vc.u32 %v2213, %v2215
        %v2220 = vadd.s32 %v2216, 1
        %v2221 = vsel %vm2219, %v2220, %v2216
        %v2222 = vadd.s32 %v2217, %v2221
        %v2223 = vadd.s32 %v2222, 536870912
        %v2224 = vshrl.u32 %v2223, 30
        %v2225 = vshll.u32 %v2224, 30
        %v2226 = vsub.s32 %v2222, %v2225
        %vm2227 = vcmp.lt.s32.totalorder %v2226, 0
        %v2228 = vsub.s32 0, %v2226
        %v2229 = vsel %vm2227, %v2228, %v2226
        %v2230 = vclz %v2229
        %v2231 = vsub.s32 %v2230, 2
        %vm2232 = vcmp.gt.s32.totalorder 0, %v2231
        %v2233 = vsel %vm2232, 0, %v2231
        %v2234 = vsub.s32 32, %v2233
        %v2235 = vshll.u32 %v2226, %v2233
        %v2236 = vshrl.u32 %v2218, %v2234
        %v2237 = vor.u32 %v2235, %v2236
        %v2238 = vsub.s32 4294967266, %v2233
        %v2239 = vadd.s32 %v2238, 127
        %v2240 = vshll.u32 %v2239, 23
        %v2241 = vor.u32 4788187, %v2240
        %v2242 = vand.u32 2147483647, %v2241
        %v2244 = vcvt.s32.f32 %v2237
        %v2245 = vmul.f32 %v2244, %v2242
        %v2246 = vxor.u32 %v2245, 2147483648
        %v2247 = vsel %vm2164, %v2246, %v2245
        %v2248 = vsub.s32 4, %v2224
        %v2249 = vsel %vm2164, %v2248, %v2224
        %v2250 = vsel %vm2163, %v380, %v2247
        %v2251 = vsel %vm2163, 0, %v2249
        %v2252 = vcosq.f32.pop %v2250
        %v2253 = vsinq.f32.pop %v2250
        %vm2254 = vweird.f32 %v380
        %v2255 = vand.u32 %v2251, 3
        %vm2256 = vcmp.lt.s32.totalorder %v2255, 2
        %vm2257 = vcmp.eq.s32.totalorder %v2255, 0
        %v2258 = vxor.u32 %v2253, 2147483648
        %v2259 = vsel %vm2257, %v2252, %v2258
        %vm2260 = vcmp.eq.s32.totalorder %v2255, 2
        %v2261 = vxor.u32 %v2252, 2147483648
        %v2262 = vsel %vm2260, %v2261, %v2253
        %v2263 = vsel %vm2256, %v2259, %v2262
        %v2264 = vsel %vm2254, nan, %v2263
        %v2265 = vand.u32 2147483647, %v381
        %vm2266 = vcmp.le.f32.partialorder %v2265, 0.7853982
        %vm2267 = vcmp.lt.s32.totalorder %v381, 0
        %v2268 = vand.u32 %v381, 2139095040
        %v2269 = vshrl.u32 %v2268, 23
        %v2270 = vsub.s32 %v2269, 127
        %v2271 = vand.u32 2147483647, %v381
        %v2272 = vand.u32 %v2271, 8388607
        %v2273 = vor.u32 %v2272, 8388608
        %v2274 = vsub.s32 0, %v2273
        %v2275 = vadd.s32 %v2270, 1
        %vm2276 = vcmp.gt.s32.totalorder %v2275, 0
        %v2277 = vsel %vm2276, %v2275, 0
        %v2278 = vshrl.u32 %v2277, 5
        %v2279 = vand.u32 %v2277, 31
        %v2280 = vsub.s32 32, %v2279
        %v2281 = vshrl.u32 683565275, %v2280
        %v2282 = vshll.u32 683565275, %v2279
        %v2283 = vshrl.u32 2475754826, %v2280
        %v2284 = vor.u32 %v2282, %v2283
        %v2285 = vshll.u32 2475754826, %v2279
        %v2286 = vshrl.u32 2131351028, %v2280
        %v2287 = vor.u32 %v2285, %v2286
        %v2288 = vshll.u32 2131351028, %v2279
        %v2289 = vshrl.u32 2102212464, %v2280
        %v2290 = vor.u32 %v2288, %v2289
        %v2291 = vshll.u32 2102212464, %v2279
        %v2292 = vshrl.u32 920167782, %v2280
        %v2293 = vor.u32 %v2291, %v2292
        %v2294 = vshll.u32 920167782, %v2279
        %v2295 = vshrl.u32 1326507024, %v2280
        %v2296 = vor.u32 %v2294, %v2295
        %vm2297 = vcmp.lt.s32.totalorder %v2278, 1
        %vm2298 = vcmp.lt.s32.totalorder %v2278, 2
        %vm2299 = vcmp.lt.s32.totalorder %v2278, 3
        %vm2300 = vcmp.lt.s32.totalorder %v2278, 4
        %v2301 = vsel %vm2297, %v2281, %v2284
        %v2302 = vsel %vm2300, %v2290, 2102212464
        %v2303 = vsel %vm2299, %v2287, %v2302
        %v2304 = vsel %vm2298, %v2301, %v2303
        %v2305 = vsel %vm2297, %v2284, %v2287
        %v2306 = vsel %vm2300, %v2293, 920167782
        %v2307 = vsel %vm2299, %v2290, %v2306
        %v2308 = vsel %vm2298, %v2305, %v2307
        %v2309 = vsel %vm2297, %v2287, %v2290
        %v2310 = vsel %vm2300, %v2296, 1326507024
        %v2311 = vsel %vm2299, %v2293, %v2310
        %v2312 = vsel %vm2298, %v2309, %v2311
        %v2313 = vshll.u32 %v2273, 8
        %v2314 = vmul.u32.u64.compose %v2313, %v2312
        %v2315 = vextract.low.u32 %v2314
        %v2316 = vextract.high.u32 %v2314
        %v2317 = vmul.u32.u64.compose %v2313, %v2308
        %v2318 = vextract.low.u32 %v2317
        %v2319 = vextract.high.u32 %v2317
        %v2320 = vmul.u32 %v2313, %v2304
        %v2321 = vadd.s32 %v2316, %v2318
        %vm2322 = vc.u32 %v2316, %v2318
        %v2323 = vadd.s32 %v2319, 1
        %v2324 = vsel %vm2322, %v2323, %v2319
        %v2325 = vadd.s32 %v2320, %v2324
        %v2326 = vadd.s32 %v2325, 536870912
        %v2327 = vshrl.u32 %v2326, 30
        %v2328 = vshll.u32 %v2327, 30
        %v2329 = vsub.s32 %v2325, %v2328
        %vm2330 = vcmp.lt.s32.totalorder %v2329, 0
        %v2331 = vsub.s32 0, %v2329
        %v2332 = vsel %vm2330, %v2331, %v2329
        %v2333 = vclz %v2332
        %v2334 = vsub.s32 %v2333, 2
        %vm2335 = vcmp.gt.s32.totalorder 0, %v2334
        %v2336 = vsel %vm2335, 0, %v2334
        %v2337 = vsub.s32 32, %v2336
        %v2338 = vshll.u32 %v2329, %v2336
        %v2339 = vshrl.u32 %v2321, %v2337
        %v2340 = vor.u32 %v2338, %v2339
        %v2341 = vsub.s32 4294967266, %v2336
        %v2342 = vadd.s32 %v2341, 127
        %v2343 = vshll.u32 %v2342, 23
        %v2344 = vor.u32 4788187, %v2343
        %v2345 = vand.u32 2147483647, %v2344
        %v2347 = vcvt.s32.f32 %v2340
        %v2348 = vmul.f32 %v2347, %v2345
        %v2349 = vxor.u32 %v2348, 2147483648
        %v2350 = vsel %vm2267, %v2349, %v2348
        %v2351 = vsub.s32 4, %v2327
        %v2352 = vsel %vm2267, %v2351, %v2327
        %v2353 = vsel %vm2266, %v381, %v2350
        %v2354 = vsel %vm2266, 0, %v2352
        %v2355 = vcosq.f32.pop %v2353
        %v2356 = vsinq.f32.pop %v2353
        %vm2357 = vweird.f32 %v381
        %v2358 = vand.u32 %v2354, 3
        %vm2359 = vcmp.lt.s32.totalorder %v2358, 2
        %vm2360 = vcmp.eq.s32.totalorder %v2358, 0
        %v2361 = vxor.u32 %v2356, 2147483648
        %v2362 = vsel %vm2360, %v2355, %v2361
        %vm2363 = vcmp.eq.s32.totalorder %v2358, 2
        %v2364 = vxor.u32 %v2355, 2147483648
        %v2365 = vsel %vm2363, %v2364, %v2356
        %v2366 = vsel %vm2359, %v2362, %v2365
        %v2367 = vsel %vm2357, nan, %v2366
        %v2368 = vand.u32 2147483647, %v382
        %vm2369 = vcmp.le.f32.partialorder %v2368, 0.7853982
        %vm2370 = vcmp.lt.s32.totalorder %v382, 0
        %v2371 = vand.u32 %v382, 2139095040
        %v2372 = vshrl.u32 %v2371, 23
        %v2373 = vsub.s32 %v2372, 127
        %v2374 = vand.u32 2147483647, %v382
        %v2375 = vand.u32 %v2374, 8388607
        %v2376 = vor.u32 %v2375, 8388608
        %v2377 = vsub.s32 0, %v2376
        %v2378 = vadd.s32 %v2373, 1
        %vm2379 = vcmp.gt.s32.totalorder %v2378, 0
        %v2380 = vsel %vm2379, %v2378, 0
        %v2381 = vshrl.u32 %v2380, 5
        %v2382 = vand.u32 %v2380, 31
        %v2383 = vsub.s32 32, %v2382
        %v2384 = vshrl.u32 683565275, %v2383
        %v2385 = vshll.u32 683565275, %v2382
        %v2386 = vshrl.u32 2475754826, %v2383
        %v2387 = vor.u32 %v2385, %v2386
        %v2388 = vshll.u32 2475754826, %v2382
        %v2389 = vshrl.u32 2131351028, %v2383
        %v2390 = vor.u32 %v2388, %v2389
        %v2391 = vshll.u32 2131351028, %v2382
        %v2392 = vshrl.u32 2102212464, %v2383
        %v2393 = vor.u32 %v2391, %v2392
        %v2394 = vshll.u32 2102212464, %v2382
        %v2395 = vshrl.u32 920167782, %v2383
        %v2396 = vor.u32 %v2394, %v2395
        %v2397 = vshll.u32 920167782, %v2382
        %v2398 = vshrl.u32 1326507024, %v2383
        %v2399 = vor.u32 %v2397, %v2398
        %vm2400 = vcmp.lt.s32.totalorder %v2381, 1
        %vm2401 = vcmp.lt.s32.totalorder %v2381, 2
        %vm2402 = vcmp.lt.s32.totalorder %v2381, 3
        %vm2403 = vcmp.lt.s32.totalorder %v2381, 4
        %v2404 = vsel %vm2400, %v2384, %v2387
        %v2405 = vsel %vm2403, %v2393, 2102212464
        %v2406 = vsel %vm2402, %v2390, %v2405
        %v2407 = vsel %vm2401, %v2404, %v2406
        %v2408 = vsel %vm2400, %v2387, %v2390
        %v2409 = vsel %vm2403, %v2396, 920167782
        %v2410 = vsel %vm2402, %v2393, %v2409
        %v2411 = vsel %vm2401, %v2408, %v2410
        %v2412 = vsel %vm2400, %v2390, %v2393
        %v2413 = vsel %vm2403, %v2399, 1326507024
        %v2414 = vsel %vm2402, %v2396, %v2413
        %v2415 = vsel %vm2401, %v2412, %v2414
        %v2416 = vshll.u32 %v2376, 8
        %v2417 = vmul.u32.u64.compose %v2416, %v2415
        %v2418 = vextract.low.u32 %v2417
        %v2419 = vextract.high.u32 %v2417
        %v2420 = vmul.u32.u64.compose %v2416, %v2411
        %v2421 = vextract.low.u32 %v2420
        %v2422 = vextract.high.u32 %v2420
        %v2423 = vmul.u32 %v2416, %v2407
        %v2424 = vadd.s32 %v2419, %v2421
        %vm2425 = vc.u32 %v2419, %v2421
        %v2426 = vadd.s32 %v2422, 1
        %v2427 = vsel %vm2425, %v2426, %v2422
        %v2428 = vadd.s32 %v2423, %v2427
        %v2429 = vadd.s32 %v2428, 536870912
        %v2430 = vshrl.u32 %v2429, 30
        %v2431 = vshll.u32 %v2430, 30
        %v2432 = vsub.s32 %v2428, %v2431
        %vm2433 = vcmp.lt.s32.totalorder %v2432, 0
        %v2434 = vsub.s32 0, %v2432
        %v2435 = vsel %vm2433, %v2434, %v2432
        %v2436 = vclz %v2435
        %v2437 = vsub.s32 %v2436, 2
        %vm2438 = vcmp.gt.s32.totalorder 0, %v2437
        %v2439 = vsel %vm2438, 0, %v2437
        %v2440 = vsub.s32 32, %v2439
        %v2441 = vshll.u32 %v2432, %v2439
        %v2442 = vshrl.u32 %v2424, %v2440
        %v2443 = vor.u32 %v2441, %v2442
        %v2444 = vsub.s32 4294967266, %v2439
        %v2445 = vadd.s32 %v2444, 127
        %v2446 = vshll.u32 %v2445, 23
        %v2447 = vor.u32 4788187, %v2446
        %v2448 = vand.u32 2147483647, %v2447
        %v2450 = vcvt.s32.f32 %v2443
        %v2451 = vmul.f32 %v2450, %v2448
        %v2452 = vxor.u32 %v2451, 2147483648
        %v2453 = vsel %vm2370, %v2452, %v2451
        %v2454 = vsub.s32 4, %v2430
        %v2455 = vsel %vm2370, %v2454, %v2430
        %v2456 = vsel %vm2369, %v382, %v2453
        %v2457 = vsel %vm2369, 0, %v2455
        %v2458 = vcosq.f32.pop %v2456
        %v2459 = vsinq.f32.pop %v2456
        %vm2460 = vweird.f32 %v382
        %v2461 = vand.u32 %v2457, 3
        %vm2462 = vcmp.lt.s32.totalorder %v2461, 2
        %vm2463 = vcmp.eq.s32.totalorder %v2461, 0
        %v2464 = vxor.u32 %v2459, 2147483648
        %v2465 = vsel %vm2463, %v2458, %v2464
        %vm2466 = vcmp.eq.s32.totalorder %v2461, 2
        %v2467 = vxor.u32 %v2458, 2147483648
        %v2468 = vsel %vm2466, %v2467, %v2459
        %v2469 = vsel %vm2462, %v2465, %v2468
        %v2470 = vsel %vm2460, nan, %v2469
        %v2471 = vand.u32 2147483647, %v383
        %vm2472 = vcmp.le.f32.partialorder %v2471, 0.7853982
        %vm2473 = vcmp.lt.s32.totalorder %v383, 0
        %v2474 = vand.u32 %v383, 2139095040
        %v2475 = vshrl.u32 %v2474, 23
        %v2476 = vsub.s32 %v2475, 127
        %v2477 = vand.u32 2147483647, %v383
        %v2478 = vand.u32 %v2477, 8388607
        %v2479 = vor.u32 %v2478, 8388608
        %v2480 = vsub.s32 0, %v2479
        %v2481 = vadd.s32 %v2476, 1
        %vm2482 = vcmp.gt.s32.totalorder %v2481, 0
        %v2483 = vsel %vm2482, %v2481, 0
        %v2484 = vshrl.u32 %v2483, 5
        %v2485 = vand.u32 %v2483, 31
        %v2486 = vsub.s32 32, %v2485
        %v2487 = vshrl.u32 683565275, %v2486
        %v2488 = vshll.u32 683565275, %v2485
        %v2489 = vshrl.u32 2475754826, %v2486
        %v2490 = vor.u32 %v2488, %v2489
        %v2491 = vshll.u32 2475754826, %v2485
        %v2492 = vshrl.u32 2131351028, %v2486
        %v2493 = vor.u32 %v2491, %v2492
        %v2494 = vshll.u32 2131351028, %v2485
        %v2495 = vshrl.u32 2102212464, %v2486
        %v2496 = vor.u32 %v2494, %v2495
        %v2497 = vshll.u32 2102212464, %v2485
        %v2498 = vshrl.u32 920167782, %v2486
        %v2499 = vor.u32 %v2497, %v2498
        %v2500 = vshll.u32 920167782, %v2485
        %v2501 = vshrl.u32 1326507024, %v2486
        %v2502 = vor.u32 %v2500, %v2501
        %vm2503 = vcmp.lt.s32.totalorder %v2484, 1
        %vm2504 = vcmp.lt.s32.totalorder %v2484, 2
        %vm2505 = vcmp.lt.s32.totalorder %v2484, 3
        %vm2506 = vcmp.lt.s32.totalorder %v2484, 4
        %v2507 = vsel %vm2503, %v2487, %v2490
        %v2508 = vsel %vm2506, %v2496, 2102212464
        %v2509 = vsel %vm2505, %v2493, %v2508
        %v2510 = vsel %vm2504, %v2507, %v2509
        %v2511 = vsel %vm2503, %v2490, %v2493
        %v2512 = vsel %vm2506, %v2499, 920167782
        %v2513 = vsel %vm2505, %v2496, %v2512
        %v2514 = vsel %vm2504, %v2511, %v2513
        %v2515 = vsel %vm2503, %v2493, %v2496
        %v2516 = vsel %vm2506, %v2502, 1326507024
        %v2517 = vsel %vm2505, %v2499, %v2516
        %v2518 = vsel %vm2504, %v2515, %v2517
        %v2519 = vshll.u32 %v2479, 8
        %v2520 = vmul.u32.u64.compose %v2519, %v2518
        %v2521 = vextract.low.u32 %v2520
        %v2522 = vextract.high.u32 %v2520
        %v2523 = vmul.u32.u64.compose %v2519, %v2514
        %v2524 = vextract.low.u32 %v2523
        %v2525 = vextract.high.u32 %v2523
        %v2526 = vmul.u32 %v2519, %v2510
        %v2527 = vadd.s32 %v2522, %v2524
        %vm2528 = vc.u32 %v2522, %v2524
        %v2529 = vadd.s32 %v2525, 1
        %v2530 = vsel %vm2528, %v2529, %v2525
        %v2531 = vadd.s32 %v2526, %v2530
        %v2532 = vadd.s32 %v2531, 536870912
        %v2533 = vshrl.u32 %v2532, 30
        %v2534 = vshll.u32 %v2533, 30
        %v2535 = vsub.s32 %v2531, %v2534
        %vm2536 = vcmp.lt.s32.totalorder %v2535, 0
        %v2537 = vsub.s32 0, %v2535
        %v2538 = vsel %vm2536, %v2537, %v2535
        %v2539 = vclz %v2538
        %v2540 = vsub.s32 %v2539, 2
        %vm2541 = vcmp.gt.s32.totalorder 0, %v2540
        %v2542 = vsel %vm2541, 0, %v2540
        %v2543 = vsub.s32 32, %v2542
        %v2544 = vshll.u32 %v2535, %v2542
        %v2545 = vshrl.u32 %v2527, %v2543
        %v2546 = vor.u32 %v2544, %v2545
        %v2547 = vsub.s32 4294967266, %v2542
        %v2548 = vadd.s32 %v2547, 127
        %v2549 = vshll.u32 %v2548, 23
        %v2550 = vor.u32 4788187, %v2549
        %v2551 = vand.u32 2147483647, %v2550
        %v2553 = vcvt.s32.f32 %v2546
        %v2554 = vmul.f32 %v2553, %v2551
        %v2555 = vxor.u32 %v2554, 2147483648
        %v2556 = vsel %vm2473, %v2555, %v2554
        %v2557 = vsub.s32 4, %v2533
        %v2558 = vsel %vm2473, %v2557, %v2533
        %v2559 = vsel %vm2472, %v383, %v2556
        %v2560 = vsel %vm2472, 0, %v2558
        %v2561 = vcosq.f32.pop %v2559
        %v2562 = vsinq.f32.pop %v2559
        %vm2563 = vweird.f32 %v383
        %v2564 = vand.u32 %v2560, 3
        %vm2565 = vcmp.lt.s32.totalorder %v2564, 2
        %vm2566 = vcmp.eq.s32.totalorder %v2564, 0
        %v2567 = vxor.u32 %v2562, 2147483648
        %v2568 = vsel %vm2566, %v2561, %v2567
        %vm2569 = vcmp.eq.s32.totalorder %v2564, 2
        %v2570 = vxor.u32 %v2561, 2147483648
        %v2571 = vsel %vm2569, %v2570, %v2562
        %v2572 = vsel %vm2565, %v2568, %v2571
        %v2573 = vsel %vm2563, nan, %v2572
        %v2574 = vand.u32 2147483647, %v384
        %vm2575 = vcmp.le.f32.partialorder %v2574, 0.7853982
        %vm2576 = vcmp.lt.s32.totalorder %v384, 0
        %v2577 = vand.u32 %v384, 2139095040
        %v2578 = vshrl.u32 %v2577, 23
        %v2579 = vsub.s32 %v2578, 127
        %v2580 = vand.u32 2147483647, %v384
        %v2581 = vand.u32 %v2580, 8388607
        %v2582 = vor.u32 %v2581, 8388608
        %v2583 = vsub.s32 0, %v2582
        %v2584 = vadd.s32 %v2579, 1
        %vm2585 = vcmp.gt.s32.totalorder %v2584, 0
        %v2586 = vsel %vm2585, %v2584, 0
        %v2587 = vshrl.u32 %v2586, 5
        %v2588 = vand.u32 %v2586, 31
        %v2589 = vsub.s32 32, %v2588
        %v2590 = vshrl.u32 683565275, %v2589
        %v2591 = vshll.u32 683565275, %v2588
        %v2592 = vshrl.u32 2475754826, %v2589
        %v2593 = vor.u32 %v2591, %v2592
        %v2594 = vshll.u32 2475754826, %v2588
        %v2595 = vshrl.u32 2131351028, %v2589
        %v2596 = vor.u32 %v2594, %v2595
        %v2597 = vshll.u32 2131351028, %v2588
        %v2598 = vshrl.u32 2102212464, %v2589
        %v2599 = vor.u32 %v2597, %v2598
        %v2600 = vshll.u32 2102212464, %v2588
        %v2601 = vshrl.u32 920167782, %v2589
        %v2602 = vor.u32 %v2600, %v2601
        %v2603 = vshll.u32 920167782, %v2588
        %v2604 = vshrl.u32 1326507024, %v2589
        %v2605 = vor.u32 %v2603, %v2604
        %vm2606 = vcmp.lt.s32.totalorder %v2587, 1
        %vm2607 = vcmp.lt.s32.totalorder %v2587, 2
        %vm2608 = vcmp.lt.s32.totalorder %v2587, 3
        %vm2609 = vcmp.lt.s32.totalorder %v2587, 4
        %v2610 = vsel %vm2606, %v2590, %v2593
        %v2611 = vsel %vm2609, %v2599, 2102212464
        %v2612 = vsel %vm2608, %v2596, %v2611
        %v2613 = vsel %vm2607, %v2610, %v2612
        %v2614 = vsel %vm2606, %v2593, %v2596
        %v2615 = vsel %vm2609, %v2602, 920167782
        %v2616 = vsel %vm2608, %v2599, %v2615
        %v2617 = vsel %vm2607, %v2614, %v2616
        %v2618 = vsel %vm2606, %v2596, %v2599
        %v2619 = vsel %vm2609, %v2605, 1326507024
        %v2620 = vsel %vm2608, %v2602, %v2619
        %v2621 = vsel %vm2607, %v2618, %v2620
        %v2622 = vshll.u32 %v2582, 8
        %v2623 = vmul.u32.u64.compose %v2622, %v2621
        %v2624 = vextract.low.u32 %v2623
        %v2625 = vextract.high.u32 %v2623
        %v2626 = vmul.u32.u64.compose %v2622, %v2617
        %v2627 = vextract.low.u32 %v2626
        %v2628 = vextract.high.u32 %v2626
        %v2629 = vmul.u32 %v2622, %v2613
        %v2630 = vadd.s32 %v2625, %v2627
        %vm2631 = vc.u32 %v2625, %v2627
        %v2632 = vadd.s32 %v2628, 1
        %v2633 = vsel %vm2631, %v2632, %v2628
        %v2634 = vadd.s32 %v2629, %v2633
        %v2635 = vadd.s32 %v2634, 536870912
        %v2636 = vshrl.u32 %v2635, 30
        %v2637 = vshll.u32 %v2636, 30
        %v2638 = vsub.s32 %v2634, %v2637
        %vm2639 = vcmp.lt.s32.totalorder %v2638, 0
        %v2640 = vsub.s32 0, %v2638
        %v2641 = vsel %vm2639, %v2640, %v2638
        %v2642 = vclz %v2641
        %v2643 = vsub.s32 %v2642, 2
        %vm2644 = vcmp.gt.s32.totalorder 0, %v2643
        %v2645 = vsel %vm2644, 0, %v2643
        %v2646 = vsub.s32 32, %v2645
        %v2647 = vshll.u32 %v2638, %v2645
        %v2648 = vshrl.u32 %v2630, %v2646
        %v2649 = vor.u32 %v2647, %v2648
        %v2650 = vsub.s32 4294967266, %v2645
        %v2651 = vadd.s32 %v2650, 127
        %v2652 = vshll.u32 %v2651, 23
        %v2653 = vor.u32 4788187, %v2652
        %v2654 = vand.u32 2147483647, %v2653
        %v2656 = vcvt.s32.f32 %v2649
        %v2657 = vmul.f32 %v2656, %v2654
        %v2658 = vxor.u32 %v2657, 2147483648
        %v2659 = vsel %vm2576, %v2658, %v2657
        %v2660 = vsub.s32 4, %v2636
        %v2661 = vsel %vm2576, %v2660, %v2636
        %v2662 = vsel %vm2575, %v384, %v2659
        %v2663 = vsel %vm2575, 0, %v2661
        %v2664 = vcosq.f32.pop %v2662
        %v2665 = vsinq.f32.pop %v2662
        %vm2666 = vweird.f32 %v384
        %v2667 = vand.u32 %v2663, 3
        %vm2668 = vcmp.lt.s32.totalorder %v2667, 2
        %vm2669 = vcmp.eq.s32.totalorder %v2667, 0
        %v2670 = vxor.u32 %v2665, 2147483648
        %v2671 = vsel %vm2669, %v2664, %v2670
        %vm2672 = vcmp.eq.s32.totalorder %v2667, 2
        %v2673 = vxor.u32 %v2664, 2147483648
        %v2674 = vsel %vm2672, %v2673, %v2665
        %v2675 = vsel %vm2668, %v2671, %v2674
        %v2676 = vsel %vm2666, nan, %v2675
        %v2677 = vand.u32 2147483647, %v385
        %vm2678 = vcmp.le.f32.partialorder %v2677, 0.7853982
        %vm2679 = vcmp.lt.s32.totalorder %v385, 0
        %v2680 = vand.u32 %v385, 2139095040
        %v2681 = vshrl.u32 %v2680, 23
        %v2682 = vsub.s32 %v2681, 127
        %v2683 = vand.u32 2147483647, %v385
        %v2684 = vand.u32 %v2683, 8388607
        %v2685 = vor.u32 %v2684, 8388608
        %v2686 = vsub.s32 0, %v2685
        %v2687 = vadd.s32 %v2682, 1
        %vm2688 = vcmp.gt.s32.totalorder %v2687, 0
        %v2689 = vsel %vm2688, %v2687, 0
        %v2690 = vshrl.u32 %v2689, 5
        %v2691 = vand.u32 %v2689, 31
        %v2692 = vsub.s32 32, %v2691
        %v2693 = vshrl.u32 683565275, %v2692
        %v2694 = vshll.u32 683565275, %v2691
        %v2695 = vshrl.u32 2475754826, %v2692
        %v2696 = vor.u32 %v2694, %v2695
        %v2697 = vshll.u32 2475754826, %v2691
        %v2698 = vshrl.u32 2131351028, %v2692
        %v2699 = vor.u32 %v2697, %v2698
        %v2700 = vshll.u32 2131351028, %v2691
        %v2701 = vshrl.u32 2102212464, %v2692
        %v2702 = vor.u32 %v2700, %v2701
        %v2703 = vshll.u32 2102212464, %v2691
        %v2704 = vshrl.u32 920167782, %v2692
        %v2705 = vor.u32 %v2703, %v2704
        %v2706 = vshll.u32 920167782, %v2691
        %v2707 = vshrl.u32 1326507024, %v2692
        %v2708 = vor.u32 %v2706, %v2707
        %vm2709 = vcmp.lt.s32.totalorder %v2690, 1
        %vm2710 = vcmp.lt.s32.totalorder %v2690, 2
        %vm2711 = vcmp.lt.s32.totalorder %v2690, 3
        %vm2712 = vcmp.lt.s32.totalorder %v2690, 4
        %v2713 = vsel %vm2709, %v2693, %v2696
        %v2714 = vsel %vm2712, %v2702, 2102212464
        %v2715 = vsel %vm2711, %v2699, %v2714
        %v2716 = vsel %vm2710, %v2713, %v2715
        %v2717 = vsel %vm2709, %v2696, %v2699
        %v2718 = vsel %vm2712, %v2705, 920167782
        %v2719 = vsel %vm2711, %v2702, %v2718
        %v2720 = vsel %vm2710, %v2717, %v2719
        %v2721 = vsel %vm2709, %v2699, %v2702
        %v2722 = vsel %vm2712, %v2708, 1326507024
        %v2723 = vsel %vm2711, %v2705, %v2722
        %v2724 = vsel %vm2710, %v2721, %v2723
        %v2725 = vshll.u32 %v2685, 8
        %v2726 = vmul.u32.u64.compose %v2725, %v2724
        %v2727 = vextract.low.u32 %v2726
        %v2728 = vextract.high.u32 %v2726
        %v2729 = vmul.u32.u64.compose %v2725, %v2720
        %v2730 = vextract.low.u32 %v2729
        %v2731 = vextract.high.u32 %v2729
        %v2732 = vmul.u32 %v2725, %v2716
        %v2733 = vadd.s32 %v2728, %v2730
        %vm2734 = vc.u32 %v2728, %v2730
        %v2735 = vadd.s32 %v2731, 1
        %v2736 = vsel %vm2734, %v2735, %v2731
        %v2737 = vadd.s32 %v2732, %v2736
        %v2738 = vadd.s32 %v2737, 536870912
        %v2739 = vshrl.u32 %v2738, 30
        %v2740 = vshll.u32 %v2739, 30
        %v2741 = vsub.s32 %v2737, %v2740
        %vm2742 = vcmp.lt.s32.totalorder %v2741, 0
        %v2743 = vsub.s32 0, %v2741
        %v2744 = vsel %vm2742, %v2743, %v2741
        %v2745 = vclz %v2744
        %v2746 = vsub.s32 %v2745, 2
        %vm2747 = vcmp.gt.s32.totalorder 0, %v2746
        %v2748 = vsel %vm2747, 0, %v2746
        %v2749 = vsub.s32 32, %v2748
        %v2750 = vshll.u32 %v2741, %v2748
        %v2751 = vshrl.u32 %v2733, %v2749
        %v2752 = vor.u32 %v2750, %v2751
        %v2753 = vsub.s32 4294967266, %v2748
        %v2754 = vadd.s32 %v2753, 127
        %v2755 = vshll.u32 %v2754, 23
        %v2756 = vor.u32 4788187, %v2755
        %v2757 = vand.u32 2147483647, %v2756
        %v2759 = vcvt.s32.f32 %v2752
        %v2760 = vmul.f32 %v2759, %v2757
        %v2761 = vxor.u32 %v2760, 2147483648
        %v2762 = vsel %vm2679, %v2761, %v2760
        %v2763 = vsub.s32 4, %v2739
        %v2764 = vsel %vm2679, %v2763, %v2739
        %v2765 = vsel %vm2678, %v385, %v2762
        %v2766 = vsel %vm2678, 0, %v2764
        %v2767 = vcosq.f32.pop %v2765
        %v2768 = vsinq.f32.pop %v2765
        %vm2769 = vweird.f32 %v385
        %v2770 = vand.u32 %v2766, 3
        %vm2771 = vcmp.lt.s32.totalorder %v2770, 2
        %vm2772 = vcmp.eq.s32.totalorder %v2770, 0
        %v2773 = vxor.u32 %v2768, 2147483648
        %v2774 = vsel %vm2772, %v2767, %v2773
        %vm2775 = vcmp.eq.s32.totalorder %v2770, 2
        %v2776 = vxor.u32 %v2767, 2147483648
        %v2777 = vsel %vm2775, %v2776, %v2768
        %v2778 = vsel %vm2771, %v2774, %v2777
        %v2779 = vsel %vm2769, nan, %v2778
        %v2780 = vand.u32 2147483647, %v386
        %vm2781 = vcmp.le.f32.partialorder %v2780, 0.7853982
        %vm2782 = vcmp.lt.s32.totalorder %v386, 0
        %v2783 = vand.u32 %v386, 2139095040
        %v2784 = vshrl.u32 %v2783, 23
        %v2785 = vsub.s32 %v2784, 127
        %v2786 = vand.u32 2147483647, %v386
        %v2787 = vand.u32 %v2786, 8388607
        %v2788 = vor.u32 %v2787, 8388608
        %v2789 = vsub.s32 0, %v2788
        %v2790 = vadd.s32 %v2785, 1
        %vm2791 = vcmp.gt.s32.totalorder %v2790, 0
        %v2792 = vsel %vm2791, %v2790, 0
        %v2793 = vshrl.u32 %v2792, 5
        %v2794 = vand.u32 %v2792, 31
        %v2795 = vsub.s32 32, %v2794
        %v2796 = vshrl.u32 683565275, %v2795
        %v2797 = vshll.u32 683565275, %v2794
        %v2798 = vshrl.u32 2475754826, %v2795
        %v2799 = vor.u32 %v2797, %v2798
        %v2800 = vshll.u32 2475754826, %v2794
        %v2801 = vshrl.u32 2131351028, %v2795
        %v2802 = vor.u32 %v2800, %v2801
        %v2803 = vshll.u32 2131351028, %v2794
        %v2804 = vshrl.u32 2102212464, %v2795
        %v2805 = vor.u32 %v2803, %v2804
        %v2806 = vshll.u32 2102212464, %v2794
        %v2807 = vshrl.u32 920167782, %v2795
        %v2808 = vor.u32 %v2806, %v2807
        %v2809 = vshll.u32 920167782, %v2794
        %v2810 = vshrl.u32 1326507024, %v2795
        %v2811 = vor.u32 %v2809, %v2810
        %vm2812 = vcmp.lt.s32.totalorder %v2793, 1
        %vm2813 = vcmp.lt.s32.totalorder %v2793, 2
        %vm2814 = vcmp.lt.s32.totalorder %v2793, 3
        %vm2815 = vcmp.lt.s32.totalorder %v2793, 4
        %v2816 = vsel %vm2812, %v2796, %v2799
        %v2817 = vsel %vm2815, %v2805, 2102212464
        %v2818 = vsel %vm2814, %v2802, %v2817
        %v2819 = vsel %vm2813, %v2816, %v2818
        %v2820 = vsel %vm2812, %v2799, %v2802
        %v2821 = vsel %vm2815, %v2808, 920167782
        %v2822 = vsel %vm2814, %v2805, %v2821
        %v2823 = vsel %vm2813, %v2820, %v2822
        %v2824 = vsel %vm2812, %v2802, %v2805
        %v2825 = vsel %vm2815, %v2811, 1326507024
        %v2826 = vsel %vm2814, %v2808, %v2825
        %v2827 = vsel %vm2813, %v2824, %v2826
        %v2828 = vshll.u32 %v2788, 8
        %v2829 = vmul.u32.u64.compose %v2828, %v2827
        %v2830 = vextract.low.u32 %v2829
        %v2831 = vextract.high.u32 %v2829
        %v2832 = vmul.u32.u64.compose %v2828, %v2823
        %v2833 = vextract.low.u32 %v2832
        %v2834 = vextract.high.u32 %v2832
        %v2835 = vmul.u32 %v2828, %v2819
        %v2836 = vadd.s32 %v2831, %v2833
        %vm2837 = vc.u32 %v2831, %v2833
        %v2838 = vadd.s32 %v2834, 1
        %v2839 = vsel %vm2837, %v2838, %v2834
        %v2840 = vadd.s32 %v2835, %v2839
        %v2841 = vadd.s32 %v2840, 536870912
        %v2842 = vshrl.u32 %v2841, 30
        %v2843 = vshll.u32 %v2842, 30
        %v2844 = vsub.s32 %v2840, %v2843
        %vm2845 = vcmp.lt.s32.totalorder %v2844, 0
        %v2846 = vsub.s32 0, %v2844
        %v2847 = vsel %vm2845, %v2846, %v2844
        %v2848 = vclz %v2847
        %v2849 = vsub.s32 %v2848, 2
        %vm2850 = vcmp.gt.s32.totalorder 0, %v2849
        %v2851 = vsel %vm2850, 0, %v2849
        %v2852 = vsub.s32 32, %v2851
        %v2853 = vshll.u32 %v2844, %v2851
        %v2854 = vshrl.u32 %v2836, %v2852
        %v2855 = vor.u32 %v2853, %v2854
        %v2856 = vsub.s32 4294967266, %v2851
        %v2857 = vadd.s32 %v2856, 127
        %v2858 = vshll.u32 %v2857, 23
        %v2859 = vor.u32 4788187, %v2858
        %v2860 = vand.u32 2147483647, %v2859
        %v2862 = vcvt.s32.f32 %v2855
        %v2863 = vmul.f32 %v2862, %v2860
        %v2864 = vxor.u32 %v2863, 2147483648
        %v2865 = vsel %vm2782, %v2864, %v2863
        %v2866 = vsub.s32 4, %v2842
        %v2867 = vsel %vm2782, %v2866, %v2842
        %v2868 = vsel %vm2781, %v386, %v2865
        %v2869 = vsel %vm2781, 0, %v2867
        %v2870 = vcosq.f32.pop %v2868
        %v2871 = vsinq.f32.pop %v2868
        %vm2872 = vweird.f32 %v386
        %v2873 = vand.u32 %v2869, 3
        %vm2874 = vcmp.lt.s32.totalorder %v2873, 2
        %vm2875 = vcmp.eq.s32.totalorder %v2873, 0
        %v2876 = vxor.u32 %v2871, 2147483648
        %v2877 = vsel %vm2875, %v2870, %v2876
        %vm2878 = vcmp.eq.s32.totalorder %v2873, 2
        %v2879 = vxor.u32 %v2870, 2147483648
        %v2880 = vsel %vm2878, %v2879, %v2871
        %v2881 = vsel %vm2874, %v2877, %v2880
        %v2882 = vsel %vm2872, nan, %v2881
        %v2883 = vand.u32 2147483647, %v387
        %vm2884 = vcmp.le.f32.partialorder %v2883, 0.7853982
        %vm2885 = vcmp.lt.s32.totalorder %v387, 0
        %v2886 = vand.u32 %v387, 2139095040
        %v2887 = vshrl.u32 %v2886, 23
        %v2888 = vsub.s32 %v2887, 127
        %v2889 = vand.u32 2147483647, %v387
        %v2890 = vand.u32 %v2889, 8388607
        %v2891 = vor.u32 %v2890, 8388608
        %v2892 = vsub.s32 0, %v2891
        %v2893 = vadd.s32 %v2888, 1
        %vm2894 = vcmp.gt.s32.totalorder %v2893, 0
        %v2895 = vsel %vm2894, %v2893, 0
        %v2896 = vshrl.u32 %v2895, 5
        %v2897 = vand.u32 %v2895, 31
        %v2898 = vsub.s32 32, %v2897
        %v2899 = vshrl.u32 683565275, %v2898
        %v2900 = vshll.u32 683565275, %v2897
        %v2901 = vshrl.u32 2475754826, %v2898
        %v2902 = vor.u32 %v2900, %v2901
        %v2903 = vshll.u32 2475754826, %v2897
        %v2904 = vshrl.u32 2131351028, %v2898
        %v2905 = vor.u32 %v2903, %v2904
        %v2906 = vshll.u32 2131351028, %v2897
        %v2907 = vshrl.u32 2102212464, %v2898
        %v2908 = vor.u32 %v2906, %v2907
        %v2909 = vshll.u32 2102212464, %v2897
        %v2910 = vshrl.u32 920167782, %v2898
        %v2911 = vor.u32 %v2909, %v2910
        %v2912 = vshll.u32 920167782, %v2897
        %v2913 = vshrl.u32 1326507024, %v2898
        %v2914 = vor.u32 %v2912, %v2913
        %vm2915 = vcmp.lt.s32.totalorder %v2896, 1
        %vm2916 = vcmp.lt.s32.totalorder %v2896, 2
        %vm2917 = vcmp.lt.s32.totalorder %v2896, 3
        %vm2918 = vcmp.lt.s32.totalorder %v2896, 4
        %v2919 = vsel %vm2915, %v2899, %v2902
        %v2920 = vsel %vm2918, %v2908, 2102212464
        %v2921 = vsel %vm2917, %v2905, %v2920
        %v2922 = vsel %vm2916, %v2919, %v2921
        %v2923 = vsel %vm2915, %v2902, %v2905
        %v2924 = vsel %vm2918, %v2911, 920167782
        %v2925 = vsel %vm2917, %v2908, %v2924
        %v2926 = vsel %vm2916, %v2923, %v2925
        %v2927 = vsel %vm2915, %v2905, %v2908
        %v2928 = vsel %vm2918, %v2914, 1326507024
        %v2929 = vsel %vm2917, %v2911, %v2928
        %v2930 = vsel %vm2916, %v2927, %v2929
        %v2931 = vshll.u32 %v2891, 8
        %v2932 = vmul.u32.u64.compose %v2931, %v2930
        %v2933 = vextract.low.u32 %v2932
        %v2934 = vextract.high.u32 %v2932
        %v2935 = vmul.u32.u64.compose %v2931, %v2926
        %v2936 = vextract.low.u32 %v2935
        %v2937 = vextract.high.u32 %v2935
        %v2938 = vmul.u32 %v2931, %v2922
        %v2939 = vadd.s32 %v2934, %v2936
        %vm2940 = vc.u32 %v2934, %v2936
        %v2941 = vadd.s32 %v2937, 1
        %v2942 = vsel %vm2940, %v2941, %v2937
        %v2943 = vadd.s32 %v2938, %v2942
        %v2944 = vadd.s32 %v2943, 536870912
        %v2945 = vshrl.u32 %v2944, 30
        %v2946 = vshll.u32 %v2945, 30
        %v2947 = vsub.s32 %v2943, %v2946
        %vm2948 = vcmp.lt.s32.totalorder %v2947, 0
        %v2949 = vsub.s32 0, %v2947
        %v2950 = vsel %vm2948, %v2949, %v2947
        %v2951 = vclz %v2950
        %v2952 = vsub.s32 %v2951, 2
        %vm2953 = vcmp.gt.s32.totalorder 0, %v2952
        %v2954 = vsel %vm2953, 0, %v2952
        %v2955 = vsub.s32 32, %v2954
        %v2956 = vshll.u32 %v2947, %v2954
        %v2957 = vshrl.u32 %v2939, %v2955
        %v2958 = vor.u32 %v2956, %v2957
        %v2959 = vsub.s32 4294967266, %v2954
        %v2960 = vadd.s32 %v2959, 127
        %v2961 = vshll.u32 %v2960, 23
        %v2962 = vor.u32 4788187, %v2961
        %v2963 = vand.u32 2147483647, %v2962
        %v2965 = vcvt.s32.f32 %v2958
        %v2966 = vmul.f32 %v2965, %v2963
        %v2967 = vxor.u32 %v2966, 2147483648
        %v2968 = vsel %vm2885, %v2967, %v2966
        %v2969 = vsub.s32 4, %v2945
        %v2970 = vsel %vm2885, %v2969, %v2945
        %v2971 = vsel %vm2884, %v387, %v2968
        %v2972 = vsel %vm2884, 0, %v2970
        %v2973 = vcosq.f32.pop %v2971
        %v2974 = vsinq.f32.pop %v2971
        %vm2975 = vweird.f32 %v387
        %v2976 = vand.u32 %v2972, 3
        %vm2977 = vcmp.lt.s32.totalorder %v2976, 2
        %vm2978 = vcmp.eq.s32.totalorder %v2976, 0
        %v2979 = vxor.u32 %v2974, 2147483648
        %v2980 = vsel %vm2978, %v2973, %v2979
        %vm2981 = vcmp.eq.s32.totalorder %v2976, 2
        %v2982 = vxor.u32 %v2973, 2147483648
        %v2983 = vsel %vm2981, %v2982, %v2974
        %v2984 = vsel %vm2977, %v2980, %v2983
        %v2985 = vsel %vm2975, nan, %v2984
        %v2986 = vand.u32 2147483647, %v388
        %vm2987 = vcmp.le.f32.partialorder %v2986, 0.7853982
        %vm2988 = vcmp.lt.s32.totalorder %v388, 0
        %v2989 = vand.u32 %v388, 2139095040
        %v2990 = vshrl.u32 %v2989, 23
        %v2991 = vsub.s32 %v2990, 127
        %v2992 = vand.u32 2147483647, %v388
        %v2993 = vand.u32 %v2992, 8388607
        %v2994 = vor.u32 %v2993, 8388608
        %v2995 = vsub.s32 0, %v2994
        %v2996 = vadd.s32 %v2991, 1
        %vm2997 = vcmp.gt.s32.totalorder %v2996, 0
        %v2998 = vsel %vm2997, %v2996, 0
        %v2999 = vshrl.u32 %v2998, 5
        %v3000 = vand.u32 %v2998, 31
        %v3001 = vsub.s32 32, %v3000
        %v3002 = vshrl.u32 683565275, %v3001
        %v3003 = vshll.u32 683565275, %v3000
        %v3004 = vshrl.u32 2475754826, %v3001
        %v3005 = vor.u32 %v3003, %v3004
        %v3006 = vshll.u32 2475754826, %v3000
        %v3007 = vshrl.u32 2131351028, %v3001
        %v3008 = vor.u32 %v3006, %v3007
        %v3009 = vshll.u32 2131351028, %v3000
        %v3010 = vshrl.u32 2102212464, %v3001
        %v3011 = vor.u32 %v3009, %v3010
        %v3012 = vshll.u32 2102212464, %v3000
        %v3013 = vshrl.u32 920167782, %v3001
        %v3014 = vor.u32 %v3012, %v3013
        %v3015 = vshll.u32 920167782, %v3000
        %v3016 = vshrl.u32 1326507024, %v3001
        %v3017 = vor.u32 %v3015, %v3016
        %vm3018 = vcmp.lt.s32.totalorder %v2999, 1
        %vm3019 = vcmp.lt.s32.totalorder %v2999, 2
        %vm3020 = vcmp.lt.s32.totalorder %v2999, 3
        %vm3021 = vcmp.lt.s32.totalorder %v2999, 4
        %v3022 = vsel %vm3018, %v3002, %v3005
        %v3023 = vsel %vm3021, %v3011, 2102212464
        %v3024 = vsel %vm3020, %v3008, %v3023
        %v3025 = vsel %vm3019, %v3022, %v3024
        %v3026 = vsel %vm3018, %v3005, %v3008
        %v3027 = vsel %vm3021, %v3014, 920167782
        %v3028 = vsel %vm3020, %v3011, %v3027
        %v3029 = vsel %vm3019, %v3026, %v3028
        %v3030 = vsel %vm3018, %v3008, %v3011
        %v3031 = vsel %vm3021, %v3017, 1326507024
        %v3032 = vsel %vm3020, %v3014, %v3031
        %v3033 = vsel %vm3019, %v3030, %v3032
        %v3034 = vshll.u32 %v2994, 8
        %v3035 = vmul.u32.u64.compose %v3034, %v3033
        %v3036 = vextract.low.u32 %v3035
        %v3037 = vextract.high.u32 %v3035
        %v3038 = vmul.u32.u64.compose %v3034, %v3029
        %v3039 = vextract.low.u32 %v3038
        %v3040 = vextract.high.u32 %v3038
        %v3041 = vmul.u32 %v3034, %v3025
        %v3042 = vadd.s32 %v3037, %v3039
        %vm3043 = vc.u32 %v3037, %v3039
        %v3044 = vadd.s32 %v3040, 1
        %v3045 = vsel %vm3043, %v3044, %v3040
        %v3046 = vadd.s32 %v3041, %v3045
        %v3047 = vadd.s32 %v3046, 536870912
        %v3048 = vshrl.u32 %v3047, 30
        %v3049 = vshll.u32 %v3048, 30
        %v3050 = vsub.s32 %v3046, %v3049
        %vm3051 = vcmp.lt.s32.totalorder %v3050, 0
        %v3052 = vsub.s32 0, %v3050
        %v3053 = vsel %vm3051, %v3052, %v3050
        %v3054 = vclz %v3053
        %v3055 = vsub.s32 %v3054, 2
        %vm3056 = vcmp.gt.s32.totalorder 0, %v3055
        %v3057 = vsel %vm3056, 0, %v3055
        %v3058 = vsub.s32 32, %v3057
        %v3059 = vshll.u32 %v3050, %v3057
        %v3060 = vshrl.u32 %v3042, %v3058
        %v3061 = vor.u32 %v3059, %v3060
        %v3062 = vsub.s32 4294967266, %v3057
        %v3063 = vadd.s32 %v3062, 127
        %v3064 = vshll.u32 %v3063, 23
        %v3065 = vor.u32 4788187, %v3064
        %v3066 = vand.u32 2147483647, %v3065
        %v3068 = vcvt.s32.f32 %v3061
        %v3069 = vmul.f32 %v3068, %v3066
        %v3070 = vxor.u32 %v3069, 2147483648
        %v3071 = vsel %vm2988, %v3070, %v3069
        %v3072 = vsub.s32 4, %v3048
        %v3073 = vsel %vm2988, %v3072, %v3048
        %v3074 = vsel %vm2987, %v388, %v3071
        %v3075 = vsel %vm2987, 0, %v3073
        %v3076 = vcosq.f32.pop %v3074
        %v3077 = vsinq.f32.pop %v3074
        %vm3078 = vweird.f32 %v388
        %v3079 = vand.u32 %v3075, 3
        %vm3080 = vcmp.lt.s32.totalorder %v3079, 2
        %vm3081 = vcmp.eq.s32.totalorder %v3079, 0
        %v3082 = vxor.u32 %v3077, 2147483648
        %v3083 = vsel %vm3081, %v3076, %v3082
        %vm3084 = vcmp.eq.s32.totalorder %v3079, 2
        %v3085 = vxor.u32 %v3076, 2147483648
        %v3086 = vsel %vm3084, %v3085, %v3077
        %v3087 = vsel %vm3080, %v3083, %v3086
        %v3088 = vsel %vm3078, nan, %v3087
        %v3089 = vand.u32 2147483647, %v389
        %vm3090 = vcmp.le.f32.partialorder %v3089, 0.7853982
        %vm3091 = vcmp.lt.s32.totalorder %v389, 0
        %v3092 = vand.u32 %v389, 2139095040
        %v3093 = vshrl.u32 %v3092, 23
        %v3094 = vsub.s32 %v3093, 127
        %v3095 = vand.u32 2147483647, %v389
        %v3096 = vand.u32 %v3095, 8388607
        %v3097 = vor.u32 %v3096, 8388608
        %v3098 = vsub.s32 0, %v3097
        %v3099 = vadd.s32 %v3094, 1
        %vm3100 = vcmp.gt.s32.totalorder %v3099, 0
        %v3101 = vsel %vm3100, %v3099, 0
        %v3102 = vshrl.u32 %v3101, 5
        %v3103 = vand.u32 %v3101, 31
        %v3104 = vsub.s32 32, %v3103
        %v3105 = vshrl.u32 683565275, %v3104
        %v3106 = vshll.u32 683565275, %v3103
        %v3107 = vshrl.u32 2475754826, %v3104
        %v3108 = vor.u32 %v3106, %v3107
        %v3109 = vshll.u32 2475754826, %v3103
        %v3110 = vshrl.u32 2131351028, %v3104
        %v3111 = vor.u32 %v3109, %v3110
        %v3112 = vshll.u32 2131351028, %v3103
        %v3113 = vshrl.u32 2102212464, %v3104
        %v3114 = vor.u32 %v3112, %v3113
        %v3115 = vshll.u32 2102212464, %v3103
        %v3116 = vshrl.u32 920167782, %v3104
        %v3117 = vor.u32 %v3115, %v3116
        %v3118 = vshll.u32 920167782, %v3103
        %v3119 = vshrl.u32 1326507024, %v3104
        %v3120 = vor.u32 %v3118, %v3119
        %vm3121 = vcmp.lt.s32.totalorder %v3102, 1
        %vm3122 = vcmp.lt.s32.totalorder %v3102, 2
        %vm3123 = vcmp.lt.s32.totalorder %v3102, 3
        %vm3124 = vcmp.lt.s32.totalorder %v3102, 4
        %v3125 = vsel %vm3121, %v3105, %v3108
        %v3126 = vsel %vm3124, %v3114, 2102212464
        %v3127 = vsel %vm3123, %v3111, %v3126
        %v3128 = vsel %vm3122, %v3125, %v3127
        %v3129 = vsel %vm3121, %v3108, %v3111
        %v3130 = vsel %vm3124, %v3117, 920167782
        %v3131 = vsel %vm3123, %v3114, %v3130
        %v3132 = vsel %vm3122, %v3129, %v3131
        %v3133 = vsel %vm3121, %v3111, %v3114
        %v3134 = vsel %vm3124, %v3120, 1326507024
        %v3135 = vsel %vm3123, %v3117, %v3134
        %v3136 = vsel %vm3122, %v3133, %v3135
        %v3137 = vshll.u32 %v3097, 8
        %v3138 = vmul.u32.u64.compose %v3137, %v3136
        %v3139 = vextract.low.u32 %v3138
        %v3140 = vextract.high.u32 %v3138
        %v3141 = vmul.u32.u64.compose %v3137, %v3132
        %v3142 = vextract.low.u32 %v3141
        %v3143 = vextract.high.u32 %v3141
        %v3144 = vmul.u32 %v3137, %v3128
        %v3145 = vadd.s32 %v3140, %v3142
        %vm3146 = vc.u32 %v3140, %v3142
        %v3147 = vadd.s32 %v3143, 1
        %v3148 = vsel %vm3146, %v3147, %v3143
        %v3149 = vadd.s32 %v3144, %v3148
        %v3150 = vadd.s32 %v3149, 536870912
        %v3151 = vshrl.u32 %v3150, 30
        %v3152 = vshll.u32 %v3151, 30
        %v3153 = vsub.s32 %v3149, %v3152
        %vm3154 = vcmp.lt.s32.totalorder %v3153, 0
        %v3155 = vsub.s32 0, %v3153
        %v3156 = vsel %vm3154, %v3155, %v3153
        %v3157 = vclz %v3156
        %v3158 = vsub.s32 %v3157, 2
        %vm3159 = vcmp.gt.s32.totalorder 0, %v3158
        %v3160 = vsel %vm3159, 0, %v3158
        %v3161 = vsub.s32 32, %v3160
        %v3162 = vshll.u32 %v3153, %v3160
        %v3163 = vshrl.u32 %v3145, %v3161
        %v3164 = vor.u32 %v3162, %v3163
        %v3165 = vsub.s32 4294967266, %v3160
        %v3166 = vadd.s32 %v3165, 127
        %v3167 = vshll.u32 %v3166, 23
        %v3168 = vor.u32 4788187, %v3167
        %v3169 = vand.u32 2147483647, %v3168
        %v3171 = vcvt.s32.f32 %v3164
        %v3172 = vmul.f32 %v3171, %v3169
        %v3173 = vxor.u32 %v3172, 2147483648
        %v3174 = vsel %vm3091, %v3173, %v3172
        %v3175 = vsub.s32 4, %v3151
        %v3176 = vsel %vm3091, %v3175, %v3151
        %v3177 = vsel %vm3090, %v389, %v3174
        %v3178 = vsel %vm3090, 0, %v3176
        %v3179 = vcosq.f32.pop %v3177
        %v3180 = vsinq.f32.pop %v3177
        %vm3181 = vweird.f32 %v389
        %v3182 = vand.u32 %v3178, 3
        %vm3183 = vcmp.lt.s32.totalorder %v3182, 2
        %vm3184 = vcmp.eq.s32.totalorder %v3182, 0
        %v3185 = vxor.u32 %v3180, 2147483648
        %v3186 = vsel %vm3184, %v3179, %v3185
        %vm3187 = vcmp.eq.s32.totalorder %v3182, 2
        %v3188 = vxor.u32 %v3179, 2147483648
        %v3189 = vsel %vm3187, %v3188, %v3180
        %v3190 = vsel %vm3183, %v3186, %v3189
        %v3191 = vsel %vm3181, nan, %v3190
        %v3192 = vand.u32 2147483647, %v390
        %vm3193 = vcmp.le.f32.partialorder %v3192, 0.7853982
        %vm3194 = vcmp.lt.s32.totalorder %v390, 0
        %v3195 = vand.u32 %v390, 2139095040
        %v3196 = vshrl.u32 %v3195, 23
        %v3197 = vsub.s32 %v3196, 127
        %v3198 = vand.u32 2147483647, %v390
        %v3199 = vand.u32 %v3198, 8388607
        %v3200 = vor.u32 %v3199, 8388608
        %v3201 = vsub.s32 0, %v3200
        %v3202 = vadd.s32 %v3197, 1
        %vm3203 = vcmp.gt.s32.totalorder %v3202, 0
        %v3204 = vsel %vm3203, %v3202, 0
        %v3205 = vshrl.u32 %v3204, 5
        %v3206 = vand.u32 %v3204, 31
        %v3207 = vsub.s32 32, %v3206
        %v3208 = vshrl.u32 683565275, %v3207
        %v3209 = vshll.u32 683565275, %v3206
        %v3210 = vshrl.u32 2475754826, %v3207
        %v3211 = vor.u32 %v3209, %v3210
        %v3212 = vshll.u32 2475754826, %v3206
        %v3213 = vshrl.u32 2131351028, %v3207
        %v3214 = vor.u32 %v3212, %v3213
        %v3215 = vshll.u32 2131351028, %v3206
        %v3216 = vshrl.u32 2102212464, %v3207
        %v3217 = vor.u32 %v3215, %v3216
        %v3218 = vshll.u32 2102212464, %v3206
        %v3219 = vshrl.u32 920167782, %v3207
        %v3220 = vor.u32 %v3218, %v3219
        %v3221 = vshll.u32 920167782, %v3206
        %v3222 = vshrl.u32 1326507024, %v3207
        %v3223 = vor.u32 %v3221, %v3222
        %vm3224 = vcmp.lt.s32.totalorder %v3205, 1
        %vm3225 = vcmp.lt.s32.totalorder %v3205, 2
        %vm3226 = vcmp.lt.s32.totalorder %v3205, 3
        %vm3227 = vcmp.lt.s32.totalorder %v3205, 4
        %v3228 = vsel %vm3224, %v3208, %v3211
        %v3229 = vsel %vm3227, %v3217, 2102212464
        %v3230 = vsel %vm3226, %v3214, %v3229
        %v3231 = vsel %vm3225, %v3228, %v3230
        %v3232 = vsel %vm3224, %v3211, %v3214
        %v3233 = vsel %vm3227, %v3220, 920167782
        %v3234 = vsel %vm3226, %v3217, %v3233
        %v3235 = vsel %vm3225, %v3232, %v3234
        %v3236 = vsel %vm3224, %v3214, %v3217
        %v3237 = vsel %vm3227, %v3223, 1326507024
        %v3238 = vsel %vm3226, %v3220, %v3237
        %v3239 = vsel %vm3225, %v3236, %v3238
        %v3240 = vshll.u32 %v3200, 8
        %v3241 = vmul.u32.u64.compose %v3240, %v3239
        %v3242 = vextract.low.u32 %v3241
        %v3243 = vextract.high.u32 %v3241
        %v3244 = vmul.u32.u64.compose %v3240, %v3235
        %v3245 = vextract.low.u32 %v3244
        %v3246 = vextract.high.u32 %v3244
        %v3247 = vmul.u32 %v3240, %v3231
        %v3248 = vadd.s32 %v3243, %v3245
        %vm3249 = vc.u32 %v3243, %v3245
        %v3250 = vadd.s32 %v3246, 1
        %v3251 = vsel %vm3249, %v3250, %v3246
        %v3252 = vadd.s32 %v3247, %v3251
        %v3253 = vadd.s32 %v3252, 536870912
        %v3254 = vshrl.u32 %v3253, 30
        %v3255 = vshll.u32 %v3254, 30
        %v3256 = vsub.s32 %v3252, %v3255
        %vm3257 = vcmp.lt.s32.totalorder %v3256, 0
        %v3258 = vsub.s32 0, %v3256
        %v3259 = vsel %vm3257, %v3258, %v3256
        %v3260 = vclz %v3259
        %v3261 = vsub.s32 %v3260, 2
        %vm3262 = vcmp.gt.s32.totalorder 0, %v3261
        %v3263 = vsel %vm3262, 0, %v3261
        %v3264 = vsub.s32 32, %v3263
        %v3265 = vshll.u32 %v3256, %v3263
        %v3266 = vshrl.u32 %v3248, %v3264
        %v3267 = vor.u32 %v3265, %v3266
        %v3268 = vsub.s32 4294967266, %v3263
        %v3269 = vadd.s32 %v3268, 127
        %v3270 = vshll.u32 %v3269, 23
        %v3271 = vor.u32 4788187, %v3270
        %v3272 = vand.u32 2147483647, %v3271
        %v3274 = vcvt.s32.f32 %v3267
        %v3275 = vmul.f32 %v3274, %v3272
        %v3276 = vxor.u32 %v3275, 2147483648
        %v3277 = vsel %vm3194, %v3276, %v3275
        %v3278 = vsub.s32 4, %v3254
        %v3279 = vsel %vm3194, %v3278, %v3254
        %v3280 = vsel %vm3193, %v390, %v3277
        %v3281 = vsel %vm3193, 0, %v3279
        %v3282 = vcosq.f32.pop %v3280
        %v3283 = vsinq.f32.pop %v3280
        %vm3284 = vweird.f32 %v390
        %v3285 = vand.u32 %v3281, 3
        %vm3286 = vcmp.lt.s32.totalorder %v3285, 2
        %vm3287 = vcmp.eq.s32.totalorder %v3285, 0
        %v3288 = vxor.u32 %v3283, 2147483648
        %v3289 = vsel %vm3287, %v3282, %v3288
        %vm3290 = vcmp.eq.s32.totalorder %v3285, 2
        %v3291 = vxor.u32 %v3282, 2147483648
        %v3292 = vsel %vm3290, %v3291, %v3283
        %v3293 = vsel %vm3286, %v3289, %v3292
        %v3294 = vsel %vm3284, nan, %v3293
        %v3295 = vand.u32 2147483647, %v391
        %vm3296 = vcmp.le.f32.partialorder %v3295, 0.7853982
        %vm3297 = vcmp.lt.s32.totalorder %v391, 0
        %v3298 = vand.u32 %v391, 2139095040
        %v3299 = vshrl.u32 %v3298, 23
        %v3300 = vsub.s32 %v3299, 127
        %v3301 = vand.u32 2147483647, %v391
        %v3302 = vand.u32 %v3301, 8388607
        %v3303 = vor.u32 %v3302, 8388608
        %v3304 = vsub.s32 0, %v3303
        %v3305 = vadd.s32 %v3300, 1
        %vm3306 = vcmp.gt.s32.totalorder %v3305, 0
        %v3307 = vsel %vm3306, %v3305, 0
        %v3308 = vshrl.u32 %v3307, 5
        %v3309 = vand.u32 %v3307, 31
        %v3310 = vsub.s32 32, %v3309
        %v3311 = vshrl.u32 683565275, %v3310
        %v3312 = vshll.u32 683565275, %v3309
        %v3313 = vshrl.u32 2475754826, %v3310
        %v3314 = vor.u32 %v3312, %v3313
        %v3315 = vshll.u32 2475754826, %v3309
        %v3316 = vshrl.u32 2131351028, %v3310
        %v3317 = vor.u32 %v3315, %v3316
        %v3318 = vshll.u32 2131351028, %v3309
        %v3319 = vshrl.u32 2102212464, %v3310
        %v3320 = vor.u32 %v3318, %v3319
        %v3321 = vshll.u32 2102212464, %v3309
        %v3322 = vshrl.u32 920167782, %v3310
        %v3323 = vor.u32 %v3321, %v3322
        %v3324 = vshll.u32 920167782, %v3309
        %v3325 = vshrl.u32 1326507024, %v3310
        %v3326 = vor.u32 %v3324, %v3325
        %vm3327 = vcmp.lt.s32.totalorder %v3308, 1
        %vm3328 = vcmp.lt.s32.totalorder %v3308, 2
        %vm3329 = vcmp.lt.s32.totalorder %v3308, 3
        %vm3330 = vcmp.lt.s32.totalorder %v3308, 4
        %v3331 = vsel %vm3327, %v3311, %v3314
        %v3332 = vsel %vm3330, %v3320, 2102212464
        %v3333 = vsel %vm3329, %v3317, %v3332
        %v3334 = vsel %vm3328, %v3331, %v3333
        %v3335 = vsel %vm3327, %v3314, %v3317
        %v3336 = vsel %vm3330, %v3323, 920167782
        %v3337 = vsel %vm3329, %v3320, %v3336
        %v3338 = vsel %vm3328, %v3335, %v3337
        %v3339 = vsel %vm3327, %v3317, %v3320
        %v3340 = vsel %vm3330, %v3326, 1326507024
        %v3341 = vsel %vm3329, %v3323, %v3340
        %v3342 = vsel %vm3328, %v3339, %v3341
        %v3343 = vshll.u32 %v3303, 8
        %v3344 = vmul.u32.u64.compose %v3343, %v3342
        %v3345 = vextract.low.u32 %v3344
        %v3346 = vextract.high.u32 %v3344
        %v3347 = vmul.u32.u64.compose %v3343, %v3338
        %v3348 = vextract.low.u32 %v3347
        %v3349 = vextract.high.u32 %v3347
        %v3350 = vmul.u32 %v3343, %v3334
        %v3351 = vadd.s32 %v3346, %v3348
        %vm3352 = vc.u32 %v3346, %v3348
        %v3353 = vadd.s32 %v3349, 1
        %v3354 = vsel %vm3352, %v3353, %v3349
        %v3355 = vadd.s32 %v3350, %v3354
        %v3356 = vadd.s32 %v3355, 536870912
        %v3357 = vshrl.u32 %v3356, 30
        %v3358 = vshll.u32 %v3357, 30
        %v3359 = vsub.s32 %v3355, %v3358
        %vm3360 = vcmp.lt.s32.totalorder %v3359, 0
        %v3361 = vsub.s32 0, %v3359
        %v3362 = vsel %vm3360, %v3361, %v3359
        %v3363 = vclz %v3362
        %v3364 = vsub.s32 %v3363, 2
        %vm3365 = vcmp.gt.s32.totalorder 0, %v3364
        %v3366 = vsel %vm3365, 0, %v3364
        %v3367 = vsub.s32 32, %v3366
        %v3368 = vshll.u32 %v3359, %v3366
        %v3369 = vshrl.u32 %v3351, %v3367
        %v3370 = vor.u32 %v3368, %v3369
        %v3371 = vsub.s32 4294967266, %v3366
        %v3372 = vadd.s32 %v3371, 127
        %v3373 = vshll.u32 %v3372, 23
        %v3374 = vor.u32 4788187, %v3373
        %v3375 = vand.u32 2147483647, %v3374
        %v3377 = vcvt.s32.f32 %v3370
        %v3378 = vmul.f32 %v3377, %v3375
        %v3379 = vxor.u32 %v3378, 2147483648
        %v3380 = vsel %vm3297, %v3379, %v3378
        %v3381 = vsub.s32 4, %v3357
        %v3382 = vsel %vm3297, %v3381, %v3357
        %v3383 = vsel %vm3296, %v391, %v3380
        %v3384 = vsel %vm3296, 0, %v3382
        %v3385 = vcosq.f32.pop %v3383
        %v3386 = vsinq.f32.pop %v3383
        %vm3387 = vweird.f32 %v391
        %v3388 = vand.u32 %v3384, 3
        %vm3389 = vcmp.lt.s32.totalorder %v3388, 2
        %vm3390 = vcmp.eq.s32.totalorder %v3388, 0
        %v3391 = vxor.u32 %v3386, 2147483648
        %v3392 = vsel %vm3390, %v3385, %v3391
        %vm3393 = vcmp.eq.s32.totalorder %v3388, 2
        %v3394 = vxor.u32 %v3385, 2147483648
        %v3395 = vsel %vm3393, %v3394, %v3386
        %v3396 = vsel %vm3389, %v3392, %v3395
        %v3397 = vsel %vm3387, nan, %v3396
        %v3398 = vand.u32 2147483647, %v392
        %vm3399 = vcmp.le.f32.partialorder %v3398, 0.7853982
        %vm3400 = vcmp.lt.s32.totalorder %v392, 0
        %v3401 = vand.u32 %v392, 2139095040
        %v3402 = vshrl.u32 %v3401, 23
        %v3403 = vsub.s32 %v3402, 127
        %v3404 = vand.u32 2147483647, %v392
        %v3405 = vand.u32 %v3404, 8388607
        %v3406 = vor.u32 %v3405, 8388608
        %v3407 = vsub.s32 0, %v3406
        %v3408 = vadd.s32 %v3403, 1
        %vm3409 = vcmp.gt.s32.totalorder %v3408, 0
        %v3410 = vsel %vm3409, %v3408, 0
        %v3411 = vshrl.u32 %v3410, 5
        %v3412 = vand.u32 %v3410, 31
        %v3413 = vsub.s32 32, %v3412
        %v3414 = vshrl.u32 683565275, %v3413
        %v3415 = vshll.u32 683565275, %v3412
        %v3416 = vshrl.u32 2475754826, %v3413
        %v3417 = vor.u32 %v3415, %v3416
        %v3418 = vshll.u32 2475754826, %v3412
        %v3419 = vshrl.u32 2131351028, %v3413
        %v3420 = vor.u32 %v3418, %v3419
        %v3421 = vshll.u32 2131351028, %v3412
        %v3422 = vshrl.u32 2102212464, %v3413
        %v3423 = vor.u32 %v3421, %v3422
        %v3424 = vshll.u32 2102212464, %v3412
        %v3425 = vshrl.u32 920167782, %v3413
        %v3426 = vor.u32 %v3424, %v3425
        %v3427 = vshll.u32 920167782, %v3412
        %v3428 = vshrl.u32 1326507024, %v3413
        %v3429 = vor.u32 %v3427, %v3428
        %vm3430 = vcmp.lt.s32.totalorder %v3411, 1
        %vm3431 = vcmp.lt.s32.totalorder %v3411, 2
        %vm3432 = vcmp.lt.s32.totalorder %v3411, 3
        %vm3433 = vcmp.lt.s32.totalorder %v3411, 4
        %v3434 = vsel %vm3430, %v3414, %v3417
        %v3435 = vsel %vm3433, %v3423, 2102212464
        %v3436 = vsel %vm3432, %v3420, %v3435
        %v3437 = vsel %vm3431, %v3434, %v3436
        %v3438 = vsel %vm3430, %v3417, %v3420
        %v3439 = vsel %vm3433, %v3426, 920167782
        %v3440 = vsel %vm3432, %v3423, %v3439
        %v3441 = vsel %vm3431, %v3438, %v3440
        %v3442 = vsel %vm3430, %v3420, %v3423
        %v3443 = vsel %vm3433, %v3429, 1326507024
        %v3444 = vsel %vm3432, %v3426, %v3443
        %v3445 = vsel %vm3431, %v3442, %v3444
        %v3446 = vshll.u32 %v3406, 8
        %v3447 = vmul.u32.u64.compose %v3446, %v3445
        %v3448 = vextract.low.u32 %v3447
        %v3449 = vextract.high.u32 %v3447
        %v3450 = vmul.u32.u64.compose %v3446, %v3441
        %v3451 = vextract.low.u32 %v3450
        %v3452 = vextract.high.u32 %v3450
        %v3453 = vmul.u32 %v3446, %v3437
        %v3454 = vadd.s32 %v3449, %v3451
        %vm3455 = vc.u32 %v3449, %v3451
        %v3456 = vadd.s32 %v3452, 1
        %v3457 = vsel %vm3455, %v3456, %v3452
        %v3458 = vadd.s32 %v3453, %v3457
        %v3459 = vadd.s32 %v3458, 536870912
        %v3460 = vshrl.u32 %v3459, 30
        %v3461 = vshll.u32 %v3460, 30
        %v3462 = vsub.s32 %v3458, %v3461
        %vm3463 = vcmp.lt.s32.totalorder %v3462, 0
        %v3464 = vsub.s32 0, %v3462
        %v3465 = vsel %vm3463, %v3464, %v3462
        %v3466 = vclz %v3465
        %v3467 = vsub.s32 %v3466, 2
        %vm3468 = vcmp.gt.s32.totalorder 0, %v3467
        %v3469 = vsel %vm3468, 0, %v3467
        %v3470 = vsub.s32 32, %v3469
        %v3471 = vshll.u32 %v3462, %v3469
        %v3472 = vshrl.u32 %v3454, %v3470
        %v3473 = vor.u32 %v3471, %v3472
        %v3474 = vsub.s32 4294967266, %v3469
        %v3475 = vadd.s32 %v3474, 127
        %v3476 = vshll.u32 %v3475, 23
        %v3477 = vor.u32 4788187, %v3476
        %v3478 = vand.u32 2147483647, %v3477
        %v3480 = vcvt.s32.f32 %v3473
        %v3481 = vmul.f32 %v3480, %v3478
        %v3482 = vxor.u32 %v3481, 2147483648
        %v3483 = vsel %vm3400, %v3482, %v3481
        %v3484 = vsub.s32 4, %v3460
        %v3485 = vsel %vm3400, %v3484, %v3460
        %v3486 = vsel %vm3399, %v392, %v3483
        %v3487 = vsel %vm3399, 0, %v3485
        %v3488 = vcosq.f32.pop %v3486
        %v3489 = vsinq.f32.pop %v3486
        %vm3490 = vweird.f32 %v392
        %v3491 = vand.u32 %v3487, 3
        %vm3492 = vcmp.lt.s32.totalorder %v3491, 2
        %vm3493 = vcmp.eq.s32.totalorder %v3491, 0
        %v3494 = vxor.u32 %v3489, 2147483648
        %v3495 = vsel %vm3493, %v3488, %v3494
        %vm3496 = vcmp.eq.s32.totalorder %v3491, 2
        %v3497 = vxor.u32 %v3488, 2147483648
        %v3498 = vsel %vm3496, %v3497, %v3489
        %v3499 = vsel %vm3492, %v3495, %v3498
        %v3500 = vsel %vm3490, nan, %v3499
        %v3501 = vand.u32 2147483647, %v393
        %vm3502 = vcmp.le.f32.partialorder %v3501, 0.7853982
        %vm3503 = vcmp.lt.s32.totalorder %v393, 0
        %v3504 = vand.u32 %v393, 2139095040
        %v3505 = vshrl.u32 %v3504, 23
        %v3506 = vsub.s32 %v3505, 127
        %v3507 = vand.u32 2147483647, %v393
        %v3508 = vand.u32 %v3507, 8388607
        %v3509 = vor.u32 %v3508, 8388608
        %v3510 = vsub.s32 0, %v3509
        %v3511 = vadd.s32 %v3506, 1
        %vm3512 = vcmp.gt.s32.totalorder %v3511, 0
        %v3513 = vsel %vm3512, %v3511, 0
        %v3514 = vshrl.u32 %v3513, 5
        %v3515 = vand.u32 %v3513, 31
        %v3516 = vsub.s32 32, %v3515
        %v3517 = vshrl.u32 683565275, %v3516
        %v3518 = vshll.u32 683565275, %v3515
        %v3519 = vshrl.u32 2475754826, %v3516
        %v3520 = vor.u32 %v3518, %v3519
        %v3521 = vshll.u32 2475754826, %v3515
        %v3522 = vshrl.u32 2131351028, %v3516
        %v3523 = vor.u32 %v3521, %v3522
        %v3524 = vshll.u32 2131351028, %v3515
        %v3525 = vshrl.u32 2102212464, %v3516
        %v3526 = vor.u32 %v3524, %v3525
        %v3527 = vshll.u32 2102212464, %v3515
        %v3528 = vshrl.u32 920167782, %v3516
        %v3529 = vor.u32 %v3527, %v3528
        %v3530 = vshll.u32 920167782, %v3515
        %v3531 = vshrl.u32 1326507024, %v3516
        %v3532 = vor.u32 %v3530, %v3531
        %vm3533 = vcmp.lt.s32.totalorder %v3514, 1
        %vm3534 = vcmp.lt.s32.totalorder %v3514, 2
        %vm3535 = vcmp.lt.s32.totalorder %v3514, 3
        %vm3536 = vcmp.lt.s32.totalorder %v3514, 4
        %v3537 = vsel %vm3533, %v3517, %v3520
        %v3538 = vsel %vm3536, %v3526, 2102212464
        %v3539 = vsel %vm3535, %v3523, %v3538
        %v3540 = vsel %vm3534, %v3537, %v3539
        %v3541 = vsel %vm3533, %v3520, %v3523
        %v3542 = vsel %vm3536, %v3529, 920167782
        %v3543 = vsel %vm3535, %v3526, %v3542
        %v3544 = vsel %vm3534, %v3541, %v3543
        %v3545 = vsel %vm3533, %v3523, %v3526
        %v3546 = vsel %vm3536, %v3532, 1326507024
        %v3547 = vsel %vm3535, %v3529, %v3546
        %v3548 = vsel %vm3534, %v3545, %v3547
        %v3549 = vshll.u32 %v3509, 8
        %v3550 = vmul.u32.u64.compose %v3549, %v3548
        %v3551 = vextract.low.u32 %v3550
        %v3552 = vextract.high.u32 %v3550
        %v3553 = vmul.u32.u64.compose %v3549, %v3544
        %v3554 = vextract.low.u32 %v3553
        %v3555 = vextract.high.u32 %v3553
        %v3556 = vmul.u32 %v3549, %v3540
        %v3557 = vadd.s32 %v3552, %v3554
        %vm3558 = vc.u32 %v3552, %v3554
        %v3559 = vadd.s32 %v3555, 1
        %v3560 = vsel %vm3558, %v3559, %v3555
        %v3561 = vadd.s32 %v3556, %v3560
        %v3562 = vadd.s32 %v3561, 536870912
        %v3563 = vshrl.u32 %v3562, 30
        %v3564 = vshll.u32 %v3563, 30
        %v3565 = vsub.s32 %v3561, %v3564
        %vm3566 = vcmp.lt.s32.totalorder %v3565, 0
        %v3567 = vsub.s32 0, %v3565
        %v3568 = vsel %vm3566, %v3567, %v3565
        %v3569 = vclz %v3568
        %v3570 = vsub.s32 %v3569, 2
        %vm3571 = vcmp.gt.s32.totalorder 0, %v3570
        %v3572 = vsel %vm3571, 0, %v3570
        %v3573 = vsub.s32 32, %v3572
        %v3574 = vshll.u32 %v3565, %v3572
        %v3575 = vshrl.u32 %v3557, %v3573
        %v3576 = vor.u32 %v3574, %v3575
        %v3577 = vsub.s32 4294967266, %v3572
        %v3578 = vadd.s32 %v3577, 127
        %v3579 = vshll.u32 %v3578, 23
        %v3580 = vor.u32 4788187, %v3579
        %v3581 = vand.u32 2147483647, %v3580
        %v3583 = vcvt.s32.f32 %v3576
        %v3584 = vmul.f32 %v3583, %v3581
        %v3585 = vxor.u32 %v3584, 2147483648
        %v3586 = vsel %vm3503, %v3585, %v3584
        %v3587 = vsub.s32 4, %v3563
        %v3588 = vsel %vm3503, %v3587, %v3563
        %v3589 = vsel %vm3502, %v393, %v3586
        %v3590 = vsel %vm3502, 0, %v3588
        %v3591 = vcosq.f32.pop %v3589
        %v3592 = vsinq.f32.pop %v3589
        %vm3593 = vweird.f32 %v393
        %v3594 = vand.u32 %v3590, 3
        %vm3595 = vcmp.lt.s32.totalorder %v3594, 2
        %vm3596 = vcmp.eq.s32.totalorder %v3594, 0
        %v3597 = vxor.u32 %v3592, 2147483648
        %v3598 = vsel %vm3596, %v3591, %v3597
        %vm3599 = vcmp.eq.s32.totalorder %v3594, 2
        %v3600 = vxor.u32 %v3591, 2147483648
        %v3601 = vsel %vm3599, %v3600, %v3592
        %v3602 = vsel %vm3595, %v3598, %v3601
        %v3603 = vsel %vm3593, nan, %v3602
        %v3604 = vand.u32 2147483647, %v394
        %vm3605 = vcmp.le.f32.partialorder %v3604, 0.7853982
        %vm3606 = vcmp.lt.s32.totalorder %v394, 0
        %v3607 = vand.u32 %v394, 2139095040
        %v3608 = vshrl.u32 %v3607, 23
        %v3609 = vsub.s32 %v3608, 127
        %v3610 = vand.u32 2147483647, %v394
        %v3611 = vand.u32 %v3610, 8388607
        %v3612 = vor.u32 %v3611, 8388608
        %v3613 = vsub.s32 0, %v3612
        %v3614 = vadd.s32 %v3609, 1
        %vm3615 = vcmp.gt.s32.totalorder %v3614, 0
        %v3616 = vsel %vm3615, %v3614, 0
        %v3617 = vshrl.u32 %v3616, 5
        %v3618 = vand.u32 %v3616, 31
        %v3619 = vsub.s32 32, %v3618
        %v3620 = vshrl.u32 683565275, %v3619
        %v3621 = vshll.u32 683565275, %v3618
        %v3622 = vshrl.u32 2475754826, %v3619
        %v3623 = vor.u32 %v3621, %v3622
        %v3624 = vshll.u32 2475754826, %v3618
        %v3625 = vshrl.u32 2131351028, %v3619
        %v3626 = vor.u32 %v3624, %v3625
        %v3627 = vshll.u32 2131351028, %v3618
        %v3628 = vshrl.u32 2102212464, %v3619
        %v3629 = vor.u32 %v3627, %v3628
        %v3630 = vshll.u32 2102212464, %v3618
        %v3631 = vshrl.u32 920167782, %v3619
        %v3632 = vor.u32 %v3630, %v3631
        %v3633 = vshll.u32 920167782, %v3618
        %v3634 = vshrl.u32 1326507024, %v3619
        %v3635 = vor.u32 %v3633, %v3634
        %vm3636 = vcmp.lt.s32.totalorder %v3617, 1
        %vm3637 = vcmp.lt.s32.totalorder %v3617, 2
        %vm3638 = vcmp.lt.s32.totalorder %v3617, 3
        %vm3639 = vcmp.lt.s32.totalorder %v3617, 4
        %v3640 = vsel %vm3636, %v3620, %v3623
        %v3641 = vsel %vm3639, %v3629, 2102212464
        %v3642 = vsel %vm3638, %v3626, %v3641
        %v3643 = vsel %vm3637, %v3640, %v3642
        %v3644 = vsel %vm3636, %v3623, %v3626
        %v3645 = vsel %vm3639, %v3632, 920167782
        %v3646 = vsel %vm3638, %v3629, %v3645
        %v3647 = vsel %vm3637, %v3644, %v3646
        %v3648 = vsel %vm3636, %v3626, %v3629
        %v3649 = vsel %vm3639, %v3635, 1326507024
        %v3650 = vsel %vm3638, %v3632, %v3649
        %v3651 = vsel %vm3637, %v3648, %v3650
        %v3652 = vshll.u32 %v3612, 8
        %v3653 = vmul.u32.u64.compose %v3652, %v3651
        %v3654 = vextract.low.u32 %v3653
        %v3655 = vextract.high.u32 %v3653
        %v3656 = vmul.u32.u64.compose %v3652, %v3647
        %v3657 = vextract.low.u32 %v3656
        %v3658 = vextract.high.u32 %v3656
        %v3659 = vmul.u32 %v3652, %v3643
        %v3660 = vadd.s32 %v3655, %v3657
        %vm3661 = vc.u32 %v3655, %v3657
        %v3662 = vadd.s32 %v3658, 1
        %v3663 = vsel %vm3661, %v3662, %v3658
        %v3664 = vadd.s32 %v3659, %v3663
        %v3665 = vadd.s32 %v3664, 536870912
        %v3666 = vshrl.u32 %v3665, 30
        %v3667 = vshll.u32 %v3666, 30
        %v3668 = vsub.s32 %v3664, %v3667
        %vm3669 = vcmp.lt.s32.totalorder %v3668, 0
        %v3670 = vsub.s32 0, %v3668
        %v3671 = vsel %vm3669, %v3670, %v3668
        %v3672 = vclz %v3671
        %v3673 = vsub.s32 %v3672, 2
        %vm3674 = vcmp.gt.s32.totalorder 0, %v3673
        %v3675 = vsel %vm3674, 0, %v3673
        %v3676 = vsub.s32 32, %v3675
        %v3677 = vshll.u32 %v3668, %v3675
        %v3678 = vshrl.u32 %v3660, %v3676
        %v3679 = vor.u32 %v3677, %v3678
        %v3680 = vsub.s32 4294967266, %v3675
        %v3681 = vadd.s32 %v3680, 127
        %v3682 = vshll.u32 %v3681, 23
        %v3683 = vor.u32 4788187, %v3682
        %v3684 = vand.u32 2147483647, %v3683
        %v3686 = vcvt.s32.f32 %v3679
        %v3687 = vmul.f32 %v3686, %v3684
        %v3688 = vxor.u32 %v3687, 2147483648
        %v3689 = vsel %vm3606, %v3688, %v3687
        %v3690 = vsub.s32 4, %v3666
        %v3691 = vsel %vm3606, %v3690, %v3666
        %v3692 = vsel %vm3605, %v394, %v3689
        %v3693 = vsel %vm3605, 0, %v3691
        %v3694 = vcosq.f32.pop %v3692
        %v3695 = vsinq.f32.pop %v3692
        %vm3696 = vweird.f32 %v394
        %v3697 = vand.u32 %v3693, 3
        %vm3698 = vcmp.lt.s32.totalorder %v3697, 2
        %vm3699 = vcmp.eq.s32.totalorder %v3697, 0
        %v3700 = vxor.u32 %v3695, 2147483648
        %v3701 = vsel %vm3699, %v3694, %v3700
        %vm3702 = vcmp.eq.s32.totalorder %v3697, 2
        %v3703 = vxor.u32 %v3694, 2147483648
        %v3704 = vsel %vm3702, %v3703, %v3695
        %v3705 = vsel %vm3698, %v3701, %v3704
        %v3706 = vsel %vm3696, nan, %v3705
        %v3707 = vmul.f32 %v498, 2.0
        %v3708 = vmul.f32 %v602, 2.0
        %v3709 = vmul.f32 %v706, 2.0
        %v3710 = vmul.f32 %v810, 2.0
        %v3711 = vmul.f32 %v914, 2.0
        %v3712 = vmul.f32 %v1018, 2.0
        %v3713 = vmul.f32 %v1122, 2.0
        %v3714 = vmul.f32 %v1226, 2.0
        %v3715 = vmul.f32 %v1330, 2.0
        %v3716 = vmul.f32 %v1434, 2.0
        %v3717 = vmul.f32 %v1538, 2.0
        %v3718 = vmul.f32 %v1642, 2.0
        %v3719 = vmul.f32 %v1746, 2.0
        %v3720 = vmul.f32 %v1850, 2.0
        %v3721 = vmul.f32 %v1954, 2.0
        %v3722 = vmul.f32 %v2058, 2.0
        %v3723 = vmul.f32 %v3707, %v2161
        %v3724 = vmul.f32 %v3708, %v2264
        %v3725 = vmul.f32 %v3709, %v2367
        %v3726 = vmul.f32 %v3710, %v2470
        %v3727 = vmul.f32 %v3711, %v2573
        %v3728 = vmul.f32 %v3712, %v2676
        %v3729 = vmul.f32 %v3713, %v2779
        %v3730 = vmul.f32 %v3714, %v2882
        %v3731 = vmul.f32 %v3715, %v2985
        %v3732 = vmul.f32 %v3716, %v3088
        %v3733 = vmul.f32 %v3717, %v3191
        %v3734 = vmul.f32 %v3718, %v3294
        %v3735 = vmul.f32 %v3719, %v3397
        %v3736 = vmul.f32 %v3720, %v3500
        %v3737 = vmul.f32 %v3721, %v3603
        %v3738 = vmul.f32 %v3722, %v3706
        %v3739 = vmul.f32 %v2161, 2.0
        %v3740 = vmul.f32 %v2264, 2.0
        %v3741 = vmul.f32 %v2367, 2.0
        %v3742 = vmul.f32 %v2470, 2.0
        %v3743 = vmul.f32 %v2573, 2.0
        %v3744 = vmul.f32 %v2676, 2.0
        %v3745 = vmul.f32 %v2779, 2.0
        %v3746 = vmul.f32 %v2882, 2.0
        %v3747 = vmul.f32 %v2985, 2.0
        %v3748 = vmul.f32 %v3088, 2.0
        %v3749 = vmul.f32 %v3191, 2.0
        %v3750 = vmul.f32 %v3294, 2.0
        %v3751 = vmul.f32 %v3397, 2.0
        %v3752 = vmul.f32 %v3500, 2.0
        %v3753 = vmul.f32 %v3603, 2.0
        %v3754 = vmul.f32 %v3706, 2.0
        %v3755 = vmul.f32 %v3739, %v2161
        %v3756 = vmul.f32 %v3740, %v2264
        %v3757 = vmul.f32 %v3741, %v2367
        %v3758 = vmul.f32 %v3742, %v2470
        %v3759 = vmul.f32 %v3743, %v2573
        %v3760 = vmul.f32 %v3744, %v2676
        %v3761 = vmul.f32 %v3745, %v2779
        %v3762 = vmul.f32 %v3746, %v2882
        %v3763 = vmul.f32 %v3747, %v2985
        %v3764 = vmul.f32 %v3748, %v3088
        %v3765 = vmul.f32 %v3749, %v3191
        %v3766 = vmul.f32 %v3750, %v3294
        %v3767 = vmul.f32 %v3751, %v3397
        %v3768 = vmul.f32 %v3752, %v3500
        %v3769 = vmul.f32 %v3753, %v3603
        %v3770 = vmul.f32 %v3754, %v3706
        %v3771 = vsub.f32 %v3755, 1.0
        %v3772 = vsub.f32 %v3756, 1.0
        %v3773 = vsub.f32 %v3757, 1.0
        %v3774 = vsub.f32 %v3758, 1.0
        %v3775 = vsub.f32 %v3759, 1.0
        %v3776 = vsub.f32 %v3760, 1.0
        %v3777 = vsub.f32 %v3761, 1.0
        %v3778 = vsub.f32 %v3762, 1.0
        %v3779 = vsub.f32 %v3763, 1.0
        %v3780 = vsub.f32 %v3764, 1.0
        %v3781 = vsub.f32 %v3765, 1.0
        %v3782 = vsub.f32 %v3766, 1.0
        %v3783 = vsub.f32 %v3767, 1.0
        %v3784 = vsub.f32 %v3768, 1.0
        %v3785 = vsub.f32 %v3769, 1.0
        %v3786 = vsub.f32 %v3770, 1.0
        %v3787 = vmul.f32 %v3723, 2.0
        %v3788 = vmul.f32 %v3724, 2.0
        %v3789 = vmul.f32 %v3725, 2.0
        %v3790 = vmul.f32 %v3726, 2.0
        %v3791 = vmul.f32 %v3727, 2.0
        %v3792 = vmul.f32 %v3728, 2.0
        %v3793 = vmul.f32 %v3729, 2.0
        %v3794 = vmul.f32 %v3730, 2.0
        %v3795 = vmul.f32 %v3731, 2.0
        %v3796 = vmul.f32 %v3732, 2.0
        %v3797 = vmul.f32 %v3733, 2.0
        %v3798 = vmul.f32 %v3734, 2.0
        %v3799 = vmul.f32 %v3735, 2.0
        %v3800 = vmul.f32 %v3736, 2.0
        %v3801 = vmul.f32 %v3737, 2.0
        %v3802 = vmul.f32 %v3738, 2.0
        %v3803 = vmul.f32 %v3787, %v3771
        %v3804 = vmul.f32 %v3788, %v3772
        %v3805 = vmul.f32 %v3789, %v3773
        %v3806 = vmul.f32 %v3790, %v3774
        %v3807 = vmul.f32 %v3791, %v3775
        %v3808 = vmul.f32 %v3792, %v3776
        %v3809 = vmul.f32 %v3793, %v3777
        %v3810 = vmul.f32 %v3794, %v3778
        %v3811 = vmul.f32 %v3795, %v3779
        %v3812 = vmul.f32 %v3796, %v3780
        %v3813 = vmul.f32 %v3797, %v3781
        %v3814 = vmul.f32 %v3798, %v3782
        %v3815 = vmul.f32 %v3799, %v3783
        %v3816 = vmul.f32 %v3800, %v3784
        %v3817 = vmul.f32 %v3801, %v3785
        %v3818 = vmul.f32 %v3802, %v3786
        %v3819 = vmul.f32 %v3771, 2.0
        %v3820 = vmul.f32 %v3772, 2.0
        %v3821 = vmul.f32 %v3773, 2.0
        %v3822 = vmul.f32 %v3774, 2.0
        %v3823 = vmul.f32 %v3775, 2.0
        %v3824 = vmul.f32 %v3776, 2.0
        %v3825 = vmul.f32 %v3777, 2.0
        %v3826 = vmul.f32 %v3778, 2.0
        %v3827 = vmul.f32 %v3779, 2.0
        %v3828 = vmul.f32 %v3780, 2.0
        %v3829 = vmul.f32 %v3781, 2.0
        %v3830 = vmul.f32 %v3782, 2.0
        %v3831 = vmul.f32 %v3783, 2.0
        %v3832 = vmul.f32 %v3784, 2.0
        %v3833 = vmul.f32 %v3785, 2.0
        %v3834 = vmul.f32 %v3786, 2.0
        %v3835 = vmul.f32 %v3819, %v3771
        %v3836 = vmul.f32 %v3820, %v3772
        %v3837 = vmul.f32 %v3821, %v3773
        %v3838 = vmul.f32 %v3822, %v3774
        %v3839 = vmul.f32 %v3823, %v3775
        %v3840 = vmul.f32 %v3824, %v3776
        %v3841 = vmul.f32 %v3825, %v3777
        %v3842 = vmul.f32 %v3826, %v3778
        %v3843 = vmul.f32 %v3827, %v3779
        %v3844 = vmul.f32 %v3828, %v3780
        %v3845 = vmul.f32 %v3829, %v3781
        %v3846 = vmul.f32 %v3830, %v3782
        %v3847 = vmul.f32 %v3831, %v3783
        %v3848 = vmul.f32 %v3832, %v3784
        %v3849 = vmul.f32 %v3833, %v3785
        %v3850 = vmul.f32 %v3834, %v3786
        %v3851 = vsub.f32 %v3835, 1.0
        %v3852 = vsub.f32 %v3836, 1.0
        %v3853 = vsub.f32 %v3837, 1.0
        %v3854 = vsub.f32 %v3838, 1.0
        %v3855 = vsub.f32 %v3839, 1.0
        %v3856 = vsub.f32 %v3840, 1.0
        %v3857 = vsub.f32 %v3841, 1.0
        %v3858 = vsub.f32 %v3842, 1.0
        %v3859 = vsub.f32 %v3843, 1.0
        %v3860 = vsub.f32 %v3844, 1.0
        %v3861 = vsub.f32 %v3845, 1.0
        %v3862 = vsub.f32 %v3846, 1.0
        %v3863 = vsub.f32 %v3847, 1.0
        %v3864 = vsub.f32 %v3848, 1.0
        %v3865 = vsub.f32 %v3849, 1.0
        %v3866 = vsub.f32 %v3850, 1.0
        %v3867 = vmul.f32 %v3803, 2.0
        %v3868 = vmul.f32 %v3804, 2.0
        %v3869 = vmul.f32 %v3805, 2.0
        %v3870 = vmul.f32 %v3806, 2.0
        %v3871 = vmul.f32 %v3807, 2.0
        %v3872 = vmul.f32 %v3808, 2.0
        %v3873 = vmul.f32 %v3809, 2.0
        %v3874 = vmul.f32 %v3810, 2.0
        %v3875 = vmul.f32 %v3811, 2.0
        %v3876 = vmul.f32 %v3812, 2.0
        %v3877 = vmul.f32 %v3813, 2.0
        %v3878 = vmul.f32 %v3814, 2.0
        %v3879 = vmul.f32 %v3815, 2.0
        %v3880 = vmul.f32 %v3816, 2.0
        %v3881 = vmul.f32 %v3817, 2.0
        %v3882 = vmul.f32 %v3818, 2.0
        %v3883 = vmul.f32 %v3867, %v3851
        %v3884 = vmul.f32 %v3868, %v3852
        %v3885 = vmul.f32 %v3869, %v3853
        %v3886 = vmul.f32 %v3870, %v3854
        %v3887 = vmul.f32 %v3871, %v3855
        %v3888 = vmul.f32 %v3872, %v3856
        %v3889 = vmul.f32 %v3873, %v3857
        %v3890 = vmul.f32 %v3874, %v3858
        %v3891 = vmul.f32 %v3875, %v3859
        %v3892 = vmul.f32 %v3876, %v3860
        %v3893 = vmul.f32 %v3877, %v3861
        %v3894 = vmul.f32 %v3878, %v3862
        %v3895 = vmul.f32 %v3879, %v3863
        %v3896 = vmul.f32 %v3880, %v3864
        %v3897 = vmul.f32 %v3881, %v3865
        %v3898 = vmul.f32 %v3882, %v3866
        %v3899 = vmul.f32 %v3851, 2.0
        %v3900 = vmul.f32 %v3852, 2.0
        %v3901 = vmul.f32 %v3853, 2.0
        %v3902 = vmul.f32 %v3854, 2.0
        %v3903 = vmul.f32 %v3855, 2.0
        %v3904 = vmul.f32 %v3856, 2.0
        %v3905 = vmul.f32 %v3857, 2.0
        %v3906 = vmul.f32 %v3858, 2.0
        %v3907 = vmul.f32 %v3859, 2.0
        %v3908 = vmul.f32 %v3860, 2.0
        %v3909 = vmul.f32 %v3861, 2.0
        %v3910 = vmul.f32 %v3862, 2.0
        %v3911 = vmul.f32 %v3863, 2.0
        %v3912 = vmul.f32 %v3864, 2.0
        %v3913 = vmul.f32 %v3865, 2.0
        %v3914 = vmul.f32 %v3866, 2.0
        %v3915 = vmul.f32 %v3899, %v3851
        %v3916 = vmul.f32 %v3900, %v3852
        %v3917 = vmul.f32 %v3901, %v3853
        %v3918 = vmul.f32 %v3902, %v3854
        %v3919 = vmul.f32 %v3903, %v3855
        %v3920 = vmul.f32 %v3904, %v3856
        %v3921 = vmul.f32 %v3905, %v3857
        %v3922 = vmul.f32 %v3906, %v3858
        %v3923 = vmul.f32 %v3907, %v3859
        %v3924 = vmul.f32 %v3908, %v3860
        %v3925 = vmul.f32 %v3909, %v3861
        %v3926 = vmul.f32 %v3910, %v3862
        %v3927 = vmul.f32 %v3911, %v3863
        %v3928 = vmul.f32 %v3912, %v3864
        %v3929 = vmul.f32 %v3913, %v3865
        %v3930 = vmul.f32 %v3914, %v3866
        %v3931 = vsub.f32 %v3915, 1.0
        %v3932 = vsub.f32 %v3916, 1.0
        %v3933 = vsub.f32 %v3917, 1.0
        %v3934 = vsub.f32 %v3918, 1.0
        %v3935 = vsub.f32 %v3919, 1.0
        %v3936 = vsub.f32 %v3920, 1.0
        %v3937 = vsub.f32 %v3921, 1.0
        %v3938 = vsub.f32 %v3922, 1.0
        %v3939 = vsub.f32 %v3923, 1.0
        %v3940 = vsub.f32 %v3924, 1.0
        %v3941 = vsub.f32 %v3925, 1.0
        %v3942 = vsub.f32 %v3926, 1.0
        %v3943 = vsub.f32 %v3927, 1.0
        %v3944 = vsub.f32 %v3928, 1.0
        %v3945 = vsub.f32 %v3929, 1.0
        %v3946 = vsub.f32 %v3930, 1.0
        %v3947 = vmul.f32 %v3883, 2.0
        %v3948 = vmul.f32 %v3884, 2.0
        %v3949 = vmul.f32 %v3885, 2.0
        %v3950 = vmul.f32 %v3886, 2.0
        %v3951 = vmul.f32 %v3887, 2.0
        %v3952 = vmul.f32 %v3888, 2.0
        %v3953 = vmul.f32 %v3889, 2.0
        %v3954 = vmul.f32 %v3890, 2.0
        %v3955 = vmul.f32 %v3891, 2.0
        %v3956 = vmul.f32 %v3892, 2.0
        %v3957 = vmul.f32 %v3893, 2.0
        %v3958 = vmul.f32 %v3894, 2.0
        %v3959 = vmul.f32 %v3895, 2.0
        %v3960 = vmul.f32 %v3896, 2.0
        %v3961 = vmul.f32 %v3897, 2.0
        %v3962 = vmul.f32 %v3898, 2.0
        %v3963 = vmul.f32 %v3947, %v3931
        %v3964 = vmul.f32 %v3948, %v3932
        %v3965 = vmul.f32 %v3949, %v3933
        %v3966 = vmul.f32 %v3950, %v3934
        %v3967 = vmul.f32 %v3951, %v3935
        %v3968 = vmul.f32 %v3952, %v3936
        %v3969 = vmul.f32 %v3953, %v3937
        %v3970 = vmul.f32 %v3954, %v3938
        %v3971 = vmul.f32 %v3955, %v3939
        %v3972 = vmul.f32 %v3956, %v3940
        %v3973 = vmul.f32 %v3957, %v3941
        %v3974 = vmul.f32 %v3958, %v3942
        %v3975 = vmul.f32 %v3959, %v3943
        %v3976 = vmul.f32 %v3960, %v3944
        %v3977 = vmul.f32 %v3961, %v3945
        %v3978 = vmul.f32 %v3962, %v3946
        %v3979 = vmul.f32 %v3931, 2.0
        %v3980 = vmul.f32 %v3932, 2.0
        %v3981 = vmul.f32 %v3933, 2.0
        %v3982 = vmul.f32 %v3934, 2.0
        %v3983 = vmul.f32 %v3935, 2.0
        %v3984 = vmul.f32 %v3936, 2.0
        %v3985 = vmul.f32 %v3937, 2.0
        %v3986 = vmul.f32 %v3938, 2.0
        %v3987 = vmul.f32 %v3939, 2.0
        %v3988 = vmul.f32 %v3940, 2.0
        %v3989 = vmul.f32 %v3941, 2.0
        %v3990 = vmul.f32 %v3942, 2.0
        %v3991 = vmul.f32 %v3943, 2.0
        %v3992 = vmul.f32 %v3944, 2.0
        %v3993 = vmul.f32 %v3945, 2.0
        %v3994 = vmul.f32 %v3946, 2.0
        %v3995 = vmul.f32 %v3979, %v3931
        %v3996 = vmul.f32 %v3980, %v3932
        %v3997 = vmul.f32 %v3981, %v3933
        %v3998 = vmul.f32 %v3982, %v3934
        %v3999 = vmul.f32 %v3983, %v3935
        %v4000 = vmul.f32 %v3984, %v3936
        %v4001 = vmul.f32 %v3985, %v3937
        %v4002 = vmul.f32 %v3986, %v3938
        %v4003 = vmul.f32 %v3987, %v3939
        %v4004 = vmul.f32 %v3988, %v3940
        %v4005 = vmul.f32 %v3989, %v3941
        %v4006 = vmul.f32 %v3990, %v3942
        %v4007 = vmul.f32 %v3991, %v3943
        %v4008 = vmul.f32 %v3992, %v3944
        %v4009 = vmul.f32 %v3993, %v3945
        %v4010 = vmul.f32 %v3994, %v3946
        %v4011 = vsub.f32 %v3995, 1.0
        %v4012 = vsub.f32 %v3996, 1.0
        %v4013 = vsub.f32 %v3997, 1.0
        %v4014 = vsub.f32 %v3998, 1.0
        %v4015 = vsub.f32 %v3999, 1.0
        %v4016 = vsub.f32 %v4000, 1.0
        %v4017 = vsub.f32 %v4001, 1.0
        %v4018 = vsub.f32 %v4002, 1.0
        %v4019 = vsub.f32 %v4003, 1.0
        %v4020 = vsub.f32 %v4004, 1.0
        %v4021 = vsub.f32 %v4005, 1.0
        %v4022 = vsub.f32 %v4006, 1.0
        %v4023 = vsub.f32 %v4007, 1.0
        %v4024 = vsub.f32 %v4008, 1.0
        %v4025 = vsub.f32 %v4009, 1.0
        %v4026 = vsub.f32 %v4010, 1.0
        %v4027 = vmul.f32 %v3963, 2.0
        %v4028 = vmul.f32 %v3964, 2.0
        %v4029 = vmul.f32 %v3965, 2.0
        %v4030 = vmul.f32 %v3966, 2.0
        %v4031 = vmul.f32 %v3967, 2.0
        %v4032 = vmul.f32 %v3968, 2.0
        %v4033 = vmul.f32 %v3969, 2.0
        %v4034 = vmul.f32 %v3970, 2.0
        %v4035 = vmul.f32 %v3971, 2.0
        %v4036 = vmul.f32 %v3972, 2.0
        %v4037 = vmul.f32 %v3973, 2.0
        %v4038 = vmul.f32 %v3974, 2.0
        %v4039 = vmul.f32 %v3975, 2.0
        %v4040 = vmul.f32 %v3976, 2.0
        %v4041 = vmul.f32 %v3977, 2.0
        %v4042 = vmul.f32 %v3978, 2.0
        %v4043 = vmul.f32 %v4027, %v4011
        %v4044 = vmul.f32 %v4028, %v4012
        %v4045 = vmul.f32 %v4029, %v4013
        %v4046 = vmul.f32 %v4030, %v4014
        %v4047 = vmul.f32 %v4031, %v4015
        %v4048 = vmul.f32 %v4032, %v4016
        %v4049 = vmul.f32 %v4033, %v4017
        %v4050 = vmul.f32 %v4034, %v4018
        %v4051 = vmul.f32 %v4035, %v4019
        %v4052 = vmul.f32 %v4036, %v4020
        %v4053 = vmul.f32 %v4037, %v4021
        %v4054 = vmul.f32 %v4038, %v4022
        %v4055 = vmul.f32 %v4039, %v4023
        %v4056 = vmul.f32 %v4040, %v4024
        %v4057 = vmul.f32 %v4041, %v4025
        %v4058 = vmul.f32 %v4042, %v4026
        %v4059 = vmul.f32 %v4011, 2.0
        %v4060 = vmul.f32 %v4012, 2.0
        %v4061 = vmul.f32 %v4013, 2.0
        %v4062 = vmul.f32 %v4014, 2.0
        %v4063 = vmul.f32 %v4015, 2.0
        %v4064 = vmul.f32 %v4016, 2.0
        %v4065 = vmul.f32 %v4017, 2.0
        %v4066 = vmul.f32 %v4018, 2.0
        %v4067 = vmul.f32 %v4019, 2.0
        %v4068 = vmul.f32 %v4020, 2.0
        %v4069 = vmul.f32 %v4021, 2.0
        %v4070 = vmul.f32 %v4022, 2.0
        %v4071 = vmul.f32 %v4023, 2.0
        %v4072 = vmul.f32 %v4024, 2.0
        %v4073 = vmul.f32 %v4025, 2.0
        %v4074 = vmul.f32 %v4026, 2.0
        %v4075 = vmul.f32 %v4059, %v4011
        %v4076 = vmul.f32 %v4060, %v4012
        %v4077 = vmul.f32 %v4061, %v4013
        %v4078 = vmul.f32 %v4062, %v4014
        %v4079 = vmul.f32 %v4063, %v4015
        %v4080 = vmul.f32 %v4064, %v4016
        %v4081 = vmul.f32 %v4065, %v4017
        %v4082 = vmul.f32 %v4066, %v4018
        %v4083 = vmul.f32 %v4067, %v4019
        %v4084 = vmul.f32 %v4068, %v4020
        %v4085 = vmul.f32 %v4069, %v4021
        %v4086 = vmul.f32 %v4070, %v4022
        %v4087 = vmul.f32 %v4071, %v4023
        %v4088 = vmul.f32 %v4072, %v4024
        %v4089 = vmul.f32 %v4073, %v4025
        %v4090 = vmul.f32 %v4074, %v4026
        %v4091 = vsub.f32 %v4075, 1.0
        %v4092 = vsub.f32 %v4076, 1.0
        %v4093 = vsub.f32 %v4077, 1.0
        %v4094 = vsub.f32 %v4078, 1.0
        %v4095 = vsub.f32 %v4079, 1.0
        %v4096 = vsub.f32 %v4080, 1.0
        %v4097 = vsub.f32 %v4081, 1.0
        %v4098 = vsub.f32 %v4082, 1.0
        %v4099 = vsub.f32 %v4083, 1.0
        %v4100 = vsub.f32 %v4084, 1.0
        %v4101 = vsub.f32 %v4085, 1.0
        %v4102 = vsub.f32 %v4086, 1.0
        %v4103 = vsub.f32 %v4087, 1.0
        %v4104 = vsub.f32 %v4088, 1.0
        %v4105 = vsub.f32 %v4089, 1.0
        %v4106 = vsub.f32 %v4090, 1.0
        %4123 = vrot.lane.b32.xlu0 %v498, 2
        %v4124 = vpop.permute.xlu0 %4123
        %4125 = vrot.lane.b32.xlu0 %v602, 2
        %v4126 = vpop.permute.xlu0 %4125
        %4127 = vrot.lane.b32.xlu0 %v706, 2
        %v4128 = vpop.permute.xlu0 %4127
        %4129 = vrot.lane.b32.xlu0 %v810, 2
        %v4130 = vpop.permute.xlu0 %4129
        %4131 = vrot.lane.b32.xlu0 %v914, 2
        %v4132 = vpop.permute.xlu0 %4131
        %4133 = vrot.lane.b32.xlu0 %v1018, 2
        %v4134 = vpop.permute.xlu0 %4133
        %4135 = vrot.lane.b32.xlu0 %v1122, 2
        %v4136 = vpop.permute.xlu0 %4135
        %4137 = vrot.lane.b32.xlu0 %v1226, 2
        %v4138 = vpop.permute.xlu0 %4137
        %4139 = vrot.lane.b32.xlu0 %v1330, 2
        %v4140 = vpop.permute.xlu0 %4139
        %4141 = vrot.lane.b32.xlu0 %v1434, 2
        %v4142 = vpop.permute.xlu0 %4141
        %4143 = vrot.lane.b32.xlu0 %v1538, 2
        %v4144 = vpop.permute.xlu0 %4143
        %4145 = vrot.lane.b32.xlu0 %v1642, 2
        %v4146 = vpop.permute.xlu0 %4145
        %4147 = vrot.lane.b32.xlu0 %v1746, 2
        %v4148 = vpop.permute.xlu0 %4147
        %4149 = vrot.lane.b32.xlu0 %v1850, 2
        %v4150 = vpop.permute.xlu0 %4149
        %4151 = vrot.lane.b32.xlu0 %v1954, 2
        %v4152 = vpop.permute.xlu0 %4151
        %4153 = vrot.lane.b32.xlu0 %v2058, 2
        %v4154 = vpop.permute.xlu0 %4153
        %4187 = vrot.lane.b32.xlu0 %v2161, 4
        %v4188 = vpop.permute.xlu0 %4187
        %4189 = vrot.lane.b32.xlu0 %v2264, 4
        %v4190 = vpop.permute.xlu0 %4189
        %4191 = vrot.lane.b32.xlu0 %v2367, 4
        %v4192 = vpop.permute.xlu0 %4191
        %4193 = vrot.lane.b32.xlu0 %v2470, 4
        %v4194 = vpop.permute.xlu0 %4193
        %4195 = vrot.lane.b32.xlu0 %v2573, 4
        %v4196 = vpop.permute.xlu0 %4195
        %4197 = vrot.lane.b32.xlu0 %v2676, 4
        %v4198 = vpop.permute.xlu0 %4197
        %4199 = vrot.lane.b32.xlu0 %v2779, 4
        %v4200 = vpop.permute.xlu0 %4199
        %4201 = vrot.lane.b32.xlu0 %v2882, 4
        %v4202 = vpop.permute.xlu0 %4201
        %4203 = vrot.lane.b32.xlu0 %v2985, 4
        %v4204 = vpop.permute.xlu0 %4203
        %4205 = vrot.lane.b32.xlu0 %v3088, 4
        %v4206 = vpop.permute.xlu0 %4205
        %4207 = vrot.lane.b32.xlu0 %v3191, 4
        %v4208 = vpop.permute.xlu0 %4207
        %4209 = vrot.lane.b32.xlu0 %v3294, 4
        %v4210 = vpop.permute.xlu0 %4209
        %4211 = vrot.lane.b32.xlu0 %v3397, 4
        %v4212 = vpop.permute.xlu0 %4211
        %4213 = vrot.lane.b32.xlu0 %v3500, 4
        %v4214 = vpop.permute.xlu0 %4213
        %4215 = vrot.lane.b32.xlu0 %v3603, 4
        %v4216 = vpop.permute.xlu0 %4215
        %4217 = vrot.lane.b32.xlu0 %v3706, 4
        %v4218 = vpop.permute.xlu0 %4217
        %4251 = vrot.lane.b32.xlu0 %v3723, 6
        %v4252 = vpop.permute.xlu0 %4251
        %4253 = vrot.lane.b32.xlu0 %v3724, 6
        %v4254 = vpop.permute.xlu0 %4253
        %4255 = vrot.lane.b32.xlu0 %v3725, 6
        %v4256 = vpop.permute.xlu0 %4255
        %4257 = vrot.lane.b32.xlu0 %v3726, 6
        %v4258 = vpop.permute.xlu0 %4257
        %4259 = vrot.lane.b32.xlu0 %v3727, 6
        %v4260 = vpop.permute.xlu0 %4259
        %4261 = vrot.lane.b32.xlu0 %v3728, 6
        %v4262 = vpop.permute.xlu0 %4261
        %4263 = vrot.lane.b32.xlu0 %v3729, 6
        %v4264 = vpop.permute.xlu0 %4263
        %4265 = vrot.lane.b32.xlu0 %v3730, 6
        %v4266 = vpop.permute.xlu0 %4265
        %4267 = vrot.lane.b32.xlu0 %v3731, 6
        %v4268 = vpop.permute.xlu0 %4267
        %4269 = vrot.lane.b32.xlu0 %v3732, 6
        %v4270 = vpop.permute.xlu0 %4269
        %4271 = vrot.lane.b32.xlu0 %v3733, 6
        %v4272 = vpop.permute.xlu0 %4271
        %4273 = vrot.lane.b32.xlu0 %v3734, 6
        %v4274 = vpop.permute.xlu0 %4273
        %4275 = vrot.lane.b32.xlu0 %v3735, 6
        %v4276 = vpop.permute.xlu0 %4275
        %4277 = vrot.lane.b32.xlu0 %v3736, 6
        %v4278 = vpop.permute.xlu0 %4277
        %4279 = vrot.lane.b32.xlu0 %v3737, 6
        %v4280 = vpop.permute.xlu0 %4279
        %4281 = vrot.lane.b32.xlu0 %v3738, 6
        %v4282 = vpop.permute.xlu0 %4281
        %4315 = vrot.lane.b32.xlu0 %v3771, 8
        %v4316 = vpop.permute.xlu0 %4315
        %4317 = vrot.lane.b32.xlu0 %v3772, 8
        %v4318 = vpop.permute.xlu0 %4317
        %4319 = vrot.lane.b32.xlu0 %v3773, 8
        %v4320 = vpop.permute.xlu0 %4319
        %4321 = vrot.lane.b32.xlu0 %v3774, 8
        %v4322 = vpop.permute.xlu0 %4321
        %4323 = vrot.lane.b32.xlu0 %v3775, 8
        %v4324 = vpop.permute.xlu0 %4323
        %4325 = vrot.lane.b32.xlu0 %v3776, 8
        %v4326 = vpop.permute.xlu0 %4325
        %4327 = vrot.lane.b32.xlu0 %v3777, 8
        %v4328 = vpop.permute.xlu0 %4327
        %4329 = vrot.lane.b32.xlu0 %v3778, 8
        %v4330 = vpop.permute.xlu0 %4329
        %4331 = vrot.lane.b32.xlu0 %v3779, 8
        %v4332 = vpop.permute.xlu0 %4331
        %4333 = vrot.lane.b32.xlu0 %v3780, 8
        %v4334 = vpop.permute.xlu0 %4333
        %4335 = vrot.lane.b32.xlu0 %v3781, 8
        %v4336 = vpop.permute.xlu0 %4335
        %4337 = vrot.lane.b32.xlu0 %v3782, 8
        %v4338 = vpop.permute.xlu0 %4337
        %4339 = vrot.lane.b32.xlu0 %v3783, 8
        %v4340 = vpop.permute.xlu0 %4339
        %4341 = vrot.lane.b32.xlu0 %v3784, 8
        %v4342 = vpop.permute.xlu0 %4341
        %4343 = vrot.lane.b32.xlu0 %v3785, 8
        %v4344 = vpop.permute.xlu0 %4343
        %4345 = vrot.lane.b32.xlu0 %v3786, 8
        %v4346 = vpop.permute.xlu0 %4345
        %4379 = vrot.lane.b32.xlu0 %v3803, 10
        %v4380 = vpop.permute.xlu0 %4379
        %4381 = vrot.lane.b32.xlu0 %v3804, 10
        %v4382 = vpop.permute.xlu0 %4381
        %4383 = vrot.lane.b32.xlu0 %v3805, 10
        %v4384 = vpop.permute.xlu0 %4383
        %4385 = vrot.lane.b32.xlu0 %v3806, 10
        %v4386 = vpop.permute.xlu0 %4385
        %4387 = vrot.lane.b32.xlu0 %v3807, 10
        %v4388 = vpop.permute.xlu0 %4387
        %4389 = vrot.lane.b32.xlu0 %v3808, 10
        %v4390 = vpop.permute.xlu0 %4389
        %4391 = vrot.lane.b32.xlu0 %v3809, 10
        %v4392 = vpop.permute.xlu0 %4391
        %4393 = vrot.lane.b32.xlu0 %v3810, 10
        %v4394 = vpop.permute.xlu0 %4393
        %4395 = vrot.lane.b32.xlu0 %v3811, 10
        %v4396 = vpop.permute.xlu0 %4395
        %4397 = vrot.lane.b32.xlu0 %v3812, 10
        %v4398 = vpop.permute.xlu0 %4397
        %4399 = vrot.lane.b32.xlu0 %v3813, 10
        %v4400 = vpop.permute.xlu0 %4399
        %4401 = vrot.lane.b32.xlu0 %v3814, 10
        %v4402 = vpop.permute.xlu0 %4401
        %4403 = vrot.lane.b32.xlu0 %v3815, 10
        %v4404 = vpop.permute.xlu0 %4403
        %4405 = vrot.lane.b32.xlu0 %v3816, 10
        %v4406 = vpop.permute.xlu0 %4405
        %4407 = vrot.lane.b32.xlu0 %v3817, 10
        %v4408 = vpop.permute.xlu0 %4407
        %4409 = vrot.lane.b32.xlu0 %v3818, 10
        %v4410 = vpop.permute.xlu0 %4409
        %4443 = vrot.lane.b32.xlu0 %v3851, 12
        %v4444 = vpop.permute.xlu0 %4443
        %4445 = vrot.lane.b32.xlu0 %v3852, 12
        %v4446 = vpop.permute.xlu0 %4445
        %4447 = vrot.lane.b32.xlu0 %v3853, 12
        %v4448 = vpop.permute.xlu0 %4447
        %4449 = vrot.lane.b32.xlu0 %v3854, 12
        %v4450 = vpop.permute.xlu0 %4449
        %4451 = vrot.lane.b32.xlu0 %v3855, 12
        %v4452 = vpop.permute.xlu0 %4451
        %4453 = vrot.lane.b32.xlu0 %v3856, 12
        %v4454 = vpop.permute.xlu0 %4453
        %4455 = vrot.lane.b32.xlu0 %v3857, 12
        %v4456 = vpop.permute.xlu0 %4455
        %4457 = vrot.lane.b32.xlu0 %v3858, 12
        %v4458 = vpop.permute.xlu0 %4457
        %4459 = vrot.lane.b32.xlu0 %v3859, 12
        %v4460 = vpop.permute.xlu0 %4459
        %4461 = vrot.lane.b32.xlu0 %v3860, 12
        %v4462 = vpop.permute.xlu0 %4461
        %4463 = vrot.lane.b32.xlu0 %v3861, 12
        %v4464 = vpop.permute.xlu0 %4463
        %4465 = vrot.lane.b32.xlu0 %v3862, 12
        %v4466 = vpop.permute.xlu0 %4465
        %4467 = vrot.lane.b32.xlu0 %v3863, 12
        %v4468 = vpop.permute.xlu0 %4467
        %4469 = vrot.lane.b32.xlu0 %v3864, 12
        %v4470 = vpop.permute.xlu0 %4469
        %4471 = vrot.lane.b32.xlu0 %v3865, 12
        %v4472 = vpop.permute.xlu0 %4471
        %4473 = vrot.lane.b32.xlu0 %v3866, 12
        %v4474 = vpop.permute.xlu0 %4473
        %4507 = vrot.lane.b32.xlu0 %v3883, 14
        %v4508 = vpop.permute.xlu0 %4507
        %4509 = vrot.lane.b32.xlu0 %v3884, 14
        %v4510 = vpop.permute.xlu0 %4509
        %4511 = vrot.lane.b32.xlu0 %v3885, 14
        %v4512 = vpop.permute.xlu0 %4511
        %4513 = vrot.lane.b32.xlu0 %v3886, 14
        %v4514 = vpop.permute.xlu0 %4513
        %4515 = vrot.lane.b32.xlu0 %v3887, 14
        %v4516 = vpop.permute.xlu0 %4515
        %4517 = vrot.lane.b32.xlu0 %v3888, 14
        %v4518 = vpop.permute.xlu0 %4517
        %4519 = vrot.lane.b32.xlu0 %v3889, 14
        %v4520 = vpop.permute.xlu0 %4519
        %4521 = vrot.lane.b32.xlu0 %v3890, 14
        %v4522 = vpop.permute.xlu0 %4521
        %4523 = vrot.lane.b32.xlu0 %v3891, 14
        %v4524 = vpop.permute.xlu0 %4523
        %4525 = vrot.lane.b32.xlu0 %v3892, 14
        %v4526 = vpop.permute.xlu0 %4525
        %4527 = vrot.lane.b32.xlu0 %v3893, 14
        %v4528 = vpop.permute.xlu0 %4527
        %4529 = vrot.lane.b32.xlu0 %v3894, 14
        %v4530 = vpop.permute.xlu0 %4529
        %4531 = vrot.lane.b32.xlu0 %v3895, 14
        %v4532 = vpop.permute.xlu0 %4531
        %4533 = vrot.lane.b32.xlu0 %v3896, 14
        %v4534 = vpop.permute.xlu0 %4533
        %4535 = vrot.lane.b32.xlu0 %v3897, 14
        %v4536 = vpop.permute.xlu0 %4535
        %4537 = vrot.lane.b32.xlu0 %v3898, 14
        %v4538 = vpop.permute.xlu0 %4537
        %4571 = vrot.lane.b32.xlu0 %v3931, 16
        %v4572 = vpop.permute.xlu0 %4571
        %4573 = vrot.lane.b32.xlu0 %v3932, 16
        %v4574 = vpop.permute.xlu0 %4573
        %4575 = vrot.lane.b32.xlu0 %v3933, 16
        %v4576 = vpop.permute.xlu0 %4575
        %4577 = vrot.lane.b32.xlu0 %v3934, 16
        %v4578 = vpop.permute.xlu0 %4577
        %4579 = vrot.lane.b32.xlu0 %v3935, 16
        %v4580 = vpop.permute.xlu0 %4579
        %4581 = vrot.lane.b32.xlu0 %v3936, 16
        %v4582 = vpop.permute.xlu0 %4581
        %4583 = vrot.lane.b32.xlu0 %v3937, 16
        %v4584 = vpop.permute.xlu0 %4583
        %4585 = vrot.lane.b32.xlu0 %v3938, 16
        %v4586 = vpop.permute.xlu0 %4585
        %4587 = vrot.lane.b32.xlu0 %v3939, 16
        %v4588 = vpop.permute.xlu0 %4587
        %4589 = vrot.lane.b32.xlu0 %v3940, 16
        %v4590 = vpop.permute.xlu0 %4589
        %4591 = vrot.lane.b32.xlu0 %v3941, 16
        %v4592 = vpop.permute.xlu0 %4591
        %4593 = vrot.lane.b32.xlu0 %v3942, 16
        %v4594 = vpop.permute.xlu0 %4593
        %4595 = vrot.lane.b32.xlu0 %v3943, 16
        %v4596 = vpop.permute.xlu0 %4595
        %4597 = vrot.lane.b32.xlu0 %v3944, 16
        %v4598 = vpop.permute.xlu0 %4597
        %4599 = vrot.lane.b32.xlu0 %v3945, 16
        %v4600 = vpop.permute.xlu0 %4599
        %4601 = vrot.lane.b32.xlu0 %v3946, 16
        %v4602 = vpop.permute.xlu0 %4601
        %4635 = vrot.lane.b32.xlu0 %v3963, 18
        %v4636 = vpop.permute.xlu0 %4635
        %4637 = vrot.lane.b32.xlu0 %v3964, 18
        %v4638 = vpop.permute.xlu0 %4637
        %4639 = vrot.lane.b32.xlu0 %v3965, 18
        %v4640 = vpop.permute.xlu0 %4639
        %4641 = vrot.lane.b32.xlu0 %v3966, 18
        %v4642 = vpop.permute.xlu0 %4641
        %4643 = vrot.lane.b32.xlu0 %v3967, 18
        %v4644 = vpop.permute.xlu0 %4643
        %4645 = vrot.lane.b32.xlu0 %v3968, 18
        %v4646 = vpop.permute.xlu0 %4645
        %4647 = vrot.lane.b32.xlu0 %v3969, 18
        %v4648 = vpop.permute.xlu0 %4647
        %4649 = vrot.lane.b32.xlu0 %v3970, 18
        %v4650 = vpop.permute.xlu0 %4649
        %4651 = vrot.lane.b32.xlu0 %v3971, 18
        %v4652 = vpop.permute.xlu0 %4651
        %4653 = vrot.lane.b32.xlu0 %v3972, 18
        %v4654 = vpop.permute.xlu0 %4653
        %4655 = vrot.lane.b32.xlu0 %v3973, 18
        %v4656 = vpop.permute.xlu0 %4655
        %4657 = vrot.lane.b32.xlu0 %v3974, 18
        %v4658 = vpop.permute.xlu0 %4657
        %4659 = vrot.lane.b32.xlu0 %v3975, 18
        %v4660 = vpop.permute.xlu0 %4659
        %4661 = vrot.lane.b32.xlu0 %v3976, 18
        %v4662 = vpop.permute.xlu0 %4661
        %4663 = vrot.lane.b32.xlu0 %v3977, 18
        %v4664 = vpop.permute.xlu0 %4663
        %4665 = vrot.lane.b32.xlu0 %v3978, 18
        %v4666 = vpop.permute.xlu0 %4665
        %4699 = vrot.lane.b32.xlu0 %v4011, 20
        %v4700 = vpop.permute.xlu0 %4699
        %4701 = vrot.lane.b32.xlu0 %v4012, 20
        %v4702 = vpop.permute.xlu0 %4701
        %4703 = vrot.lane.b32.xlu0 %v4013, 20
        %v4704 = vpop.permute.xlu0 %4703
        %4705 = vrot.lane.b32.xlu0 %v4014, 20
        %v4706 = vpop.permute.xlu0 %4705
        %4707 = vrot.lane.b32.xlu0 %v4015, 20
        %v4708 = vpop.permute.xlu0 %4707
        %4709 = vrot.lane.b32.xlu0 %v4016, 20
        %v4710 = vpop.permute.xlu0 %4709
        %4711 = vrot.lane.b32.xlu0 %v4017, 20
        %v4712 = vpop.permute.xlu0 %4711
        %4713 = vrot.lane.b32.xlu0 %v4018, 20
        %v4714 = vpop.permute.xlu0 %4713
        %4715 = vrot.lane.b32.xlu0 %v4019, 20
        %v4716 = vpop.permute.xlu0 %4715
        %4717 = vrot.lane.b32.xlu0 %v4020, 20
        %v4718 = vpop.permute.xlu0 %4717
        %4719 = vrot.lane.b32.xlu0 %v4021, 20
        %v4720 = vpop.permute.xlu0 %4719
        %4721 = vrot.lane.b32.xlu0 %v4022, 20
        %v4722 = vpop.permute.xlu0 %4721
        %4723 = vrot.lane.b32.xlu0 %v4023, 20
        %v4724 = vpop.permute.xlu0 %4723
        %4725 = vrot.lane.b32.xlu0 %v4024, 20
        %v4726 = vpop.permute.xlu0 %4725
        %4727 = vrot.lane.b32.xlu0 %v4025, 20
        %v4728 = vpop.permute.xlu0 %4727
        %4729 = vrot.lane.b32.xlu0 %v4026, 20
        %v4730 = vpop.permute.xlu0 %4729
        %4763 = vrot.lane.b32.xlu0 %v4043, 22
        %v4764 = vpop.permute.xlu0 %4763
        %4765 = vrot.lane.b32.xlu0 %v4044, 22
        %v4766 = vpop.permute.xlu0 %4765
        %4767 = vrot.lane.b32.xlu0 %v4045, 22
        %v4768 = vpop.permute.xlu0 %4767
        %4769 = vrot.lane.b32.xlu0 %v4046, 22
        %v4770 = vpop.permute.xlu0 %4769
        %4771 = vrot.lane.b32.xlu0 %v4047, 22
        %v4772 = vpop.permute.xlu0 %4771
        %4773 = vrot.lane.b32.xlu0 %v4048, 22
        %v4774 = vpop.permute.xlu0 %4773
        %4775 = vrot.lane.b32.xlu0 %v4049, 22
        %v4776 = vpop.permute.xlu0 %4775
        %4777 = vrot.lane.b32.xlu0 %v4050, 22
        %v4778 = vpop.permute.xlu0 %4777
        %4779 = vrot.lane.b32.xlu0 %v4051, 22
        %v4780 = vpop.permute.xlu0 %4779
        %4781 = vrot.lane.b32.xlu0 %v4052, 22
        %v4782 = vpop.permute.xlu0 %4781
        %4783 = vrot.lane.b32.xlu0 %v4053, 22
        %v4784 = vpop.permute.xlu0 %4783
        %4785 = vrot.lane.b32.xlu0 %v4054, 22
        %v4786 = vpop.permute.xlu0 %4785
        %4787 = vrot.lane.b32.xlu0 %v4055, 22
        %v4788 = vpop.permute.xlu0 %4787
        %4789 = vrot.lane.b32.xlu0 %v4056, 22
        %v4790 = vpop.permute.xlu0 %4789
        %4791 = vrot.lane.b32.xlu0 %v4057, 22
        %v4792 = vpop.permute.xlu0 %4791
        %4793 = vrot.lane.b32.xlu0 %v4058, 22
        %v4794 = vpop.permute.xlu0 %4793
        %4827 = vrot.lane.b32.xlu0 %v4091, 24
        %v4828 = vpop.permute.xlu0 %4827
        %4829 = vrot.lane.b32.xlu0 %v4092, 24
        %v4830 = vpop.permute.xlu0 %4829
        %4831 = vrot.lane.b32.xlu0 %v4093, 24
        %v4832 = vpop.permute.xlu0 %4831
        %4833 = vrot.lane.b32.xlu0 %v4094, 24
        %v4834 = vpop.permute.xlu0 %4833
        %4835 = vrot.lane.b32.xlu0 %v4095, 24
        %v4836 = vpop.permute.xlu0 %4835
        %4837 = vrot.lane.b32.xlu0 %v4096, 24
        %v4838 = vpop.permute.xlu0 %4837
        %4839 = vrot.lane.b32.xlu0 %v4097, 24
        %v4840 = vpop.permute.xlu0 %4839
        %4841 = vrot.lane.b32.xlu0 %v4098, 24
        %v4842 = vpop.permute.xlu0 %4841
        %4843 = vrot.lane.b32.xlu0 %v4099, 24
        %v4844 = vpop.permute.xlu0 %4843
        %4845 = vrot.lane.b32.xlu0 %v4100, 24
        %v4846 = vpop.permute.xlu0 %4845
        %4847 = vrot.lane.b32.xlu0 %v4101, 24
        %v4848 = vpop.permute.xlu0 %4847
        %4849 = vrot.lane.b32.xlu0 %v4102, 24
        %v4850 = vpop.permute.xlu0 %4849
        %4851 = vrot.lane.b32.xlu0 %v4103, 24
        %v4852 = vpop.permute.xlu0 %4851
        %4853 = vrot.lane.b32.xlu0 %v4104, 24
        %v4854 = vpop.permute.xlu0 %4853
        %4855 = vrot.lane.b32.xlu0 %v4105, 24
        %v4856 = vpop.permute.xlu0 %4855
        %4857 = vrot.lane.b32.xlu0 %v4106, 24
        %v4858 = vpop.permute.xlu0 %4857
        %vm4875 = vcmask 15360
        %v4876 = vsel %vm4875, %v379, %v4124
        %v4877 = vsel %vm4875, %v380, %v4126
        %v4878 = vsel %vm4875, %v381, %v4128
        %v4879 = vsel %vm4875, %v382, %v4130
        %v4880 = vsel %vm4875, %v383, %v4132
        %v4881 = vsel %vm4875, %v384, %v4134
        %v4882 = vsel %vm4875, %v385, %v4136
        %v4883 = vsel %vm4875, %v386, %v4138
        %v4884 = vsel %vm4875, %v387, %v4140
        %v4885 = vsel %vm4875, %v388, %v4142
        %v4886 = vsel %vm4875, %v389, %v4144
        %v4887 = vsel %vm4875, %v390, %v4146
        %v4888 = vsel %vm4875, %v391, %v4148
        %v4889 = vsel %vm4875, %v392, %v4150
        %v4890 = vsel %vm4875, %v393, %v4152
        %v4891 = vsel %vm4875, %v394, %v4154
        %vm4892 = vcmask 31744
        %v4893 = vsel %vm4892, %v4876, %v4188
        %v4894 = vsel %vm4892, %v4877, %v4190
        %v4895 = vsel %vm4892, %v4878, %v4192
        %v4896 = vsel %vm4892, %v4879, %v4194
        %v4897 = vsel %vm4892, %v4880, %v4196
        %v4898 = vsel %vm4892, %v4881, %v4198
        %v4899 = vsel %vm4892, %v4882, %v4200
        %v4900 = vsel %vm4892, %v4883, %v4202
        %v4901 = vsel %vm4892, %v4884, %v4204
        %v4902 = vsel %vm4892, %v4885, %v4206
        %v4903 = vsel %vm4892, %v4886, %v4208
        %v4904 = vsel %vm4892, %v4887, %v4210
        %v4905 = vsel %vm4892, %v4888, %v4212
        %v4906 = vsel %vm4892, %v4889, %v4214
        %v4907 = vsel %vm4892, %v4890, %v4216
        %v4908 = vsel %vm4892, %v4891, %v4218
        %vm4909 = vcmask 48128
        %v4910 = vsel %vm4909, %v4893, %v4252
        %v4911 = vsel %vm4909, %v4894, %v4254
        %v4912 = vsel %vm4909, %v4895, %v4256
        %v4913 = vsel %vm4909, %v4896, %v4258
        %v4914 = vsel %vm4909, %v4897, %v4260
        %v4915 = vsel %vm4909, %v4898, %v4262
        %v4916 = vsel %vm4909, %v4899, %v4264
        %v4917 = vsel %vm4909, %v4900, %v4266
        %v4918 = vsel %vm4909, %v4901, %v4268
        %v4919 = vsel %vm4909, %v4902, %v4270
        %v4920 = vsel %vm4909, %v4903, %v4272
        %v4921 = vsel %vm4909, %v4904, %v4274
        %v4922 = vsel %vm4909, %v4905, %v4276
        %v4923 = vsel %vm4909, %v4906, %v4278
        %v4924 = vsel %vm4909, %v4907, %v4280
        %v4925 = vsel %vm4909, %v4908, %v4282
        %vm4926 = vcmask 64512
        %v4927 = vsel %vm4926, %v4910, %v4316
        %v4928 = vsel %vm4926, %v4911, %v4318
        %v4929 = vsel %vm4926, %v4912, %v4320
        %v4930 = vsel %vm4926, %v4913, %v4322
        %v4931 = vsel %vm4926, %v4914, %v4324
        %v4932 = vsel %vm4926, %v4915, %v4326
        %v4933 = vsel %vm4926, %v4916, %v4328
        %v4934 = vsel %vm4926, %v4917, %v4330
        %v4935 = vsel %vm4926, %v4918, %v4332
        %v4936 = vsel %vm4926, %v4919, %v4334
        %v4937 = vsel %vm4926, %v4920, %v4336
        %v4938 = vsel %vm4926, %v4921, %v4338
        %v4939 = vsel %vm4926, %v4922, %v4340
        %v4940 = vsel %vm4926, %v4923, %v4342
        %v4941 = vsel %vm4926, %v4924, %v4344
        %v4942 = vsel %vm4926, %v4925, %v4346
        %vm4943 = vcmask 80896
        %v4944 = vsel %vm4943, %v4927, %v4380
        %v4945 = vsel %vm4943, %v4928, %v4382
        %v4946 = vsel %vm4943, %v4929, %v4384
        %v4947 = vsel %vm4943, %v4930, %v4386
        %v4948 = vsel %vm4943, %v4931, %v4388
        %v4949 = vsel %vm4943, %v4932, %v4390
        %v4950 = vsel %vm4943, %v4933, %v4392
        %v4951 = vsel %vm4943, %v4934, %v4394
        %v4952 = vsel %vm4943, %v4935, %v4396
        %v4953 = vsel %vm4943, %v4936, %v4398
        %v4954 = vsel %vm4943, %v4937, %v4400
        %v4955 = vsel %vm4943, %v4938, %v4402
        %v4956 = vsel %vm4943, %v4939, %v4404
        %v4957 = vsel %vm4943, %v4940, %v4406
        %v4958 = vsel %vm4943, %v4941, %v4408
        %v4959 = vsel %vm4943, %v4942, %v4410
        %vm4960 = vcmask 97280
        %v4961 = vsel %vm4960, %v4944, %v4444
        %v4962 = vsel %vm4960, %v4945, %v4446
        %v4963 = vsel %vm4960, %v4946, %v4448
        %v4964 = vsel %vm4960, %v4947, %v4450
        %v4965 = vsel %vm4960, %v4948, %v4452
        %v4966 = vsel %vm4960, %v4949, %v4454
        %v4967 = vsel %vm4960, %v4950, %v4456
        %v4968 = vsel %vm4960, %v4951, %v4458
        %v4969 = vsel %vm4960, %v4952, %v4460
        %v4970 = vsel %vm4960, %v4953, %v4462
        %v4971 = vsel %vm4960, %v4954, %v4464
        %v4972 = vsel %vm4960, %v4955, %v4466
        %v4973 = vsel %vm4960, %v4956, %v4468
        %v4974 = vsel %vm4960, %v4957, %v4470
        %v4975 = vsel %vm4960, %v4958, %v4472
        %v4976 = vsel %vm4960, %v4959, %v4474
        %vm4977 = vcmask 113664
        %v4978 = vsel %vm4977, %v4961, %v4508
        %v4979 = vsel %vm4977, %v4962, %v4510
        %v4980 = vsel %vm4977, %v4963, %v4512
        %v4981 = vsel %vm4977, %v4964, %v4514
        %v4982 = vsel %vm4977, %v4965, %v4516
        %v4983 = vsel %vm4977, %v4966, %v4518
        %v4984 = vsel %vm4977, %v4967, %v4520
        %v4985 = vsel %vm4977, %v4968, %v4522
        %v4986 = vsel %vm4977, %v4969, %v4524
        %v4987 = vsel %vm4977, %v4970, %v4526
        %v4988 = vsel %vm4977, %v4971, %v4528
        %v4989 = vsel %vm4977, %v4972, %v4530
        %v4990 = vsel %vm4977, %v4973, %v4532
        %v4991 = vsel %vm4977, %v4974, %v4534
        %v4992 = vsel %vm4977, %v4975, %v4536
        %v4993 = vsel %vm4977, %v4976, %v4538
        %vm4994 = vcmask 130048
        %v4995 = vsel %vm4994, %v4978, %v4572
        %v4996 = vsel %vm4994, %v4979, %v4574
        %v4997 = vsel %vm4994, %v4980, %v4576
        %v4998 = vsel %vm4994, %v4981, %v4578
        %v4999 = vsel %vm4994, %v4982, %v4580
        %v5000 = vsel %vm4994, %v4983, %v4582
        %v5001 = vsel %vm4994, %v4984, %v4584
        %v5002 = vsel %vm4994, %v4985, %v4586
        %v5003 = vsel %vm4994, %v4986, %v4588
        %v5004 = vsel %vm4994, %v4987, %v4590
        %v5005 = vsel %vm4994, %v4988, %v4592
        %v5006 = vsel %vm4994, %v4989, %v4594
        %v5007 = vsel %vm4994, %v4990, %v4596
        %v5008 = vsel %vm4994, %v4991, %v4598
        %v5009 = vsel %vm4994, %v4992, %v4600
        %v5010 = vsel %vm4994, %v4993, %v4602
        %vm5011 = vcmask 146432
        %v5012 = vsel %vm5011, %v4995, %v4636
        %v5013 = vsel %vm5011, %v4996, %v4638
        %v5014 = vsel %vm5011, %v4997, %v4640
        %v5015 = vsel %vm5011, %v4998, %v4642
        %v5016 = vsel %vm5011, %v4999, %v4644
        %v5017 = vsel %vm5011, %v5000, %v4646
        %v5018 = vsel %vm5011, %v5001, %v4648
        %v5019 = vsel %vm5011, %v5002, %v4650
        %v5020 = vsel %vm5011, %v5003, %v4652
        %v5021 = vsel %vm5011, %v5004, %v4654
        %v5022 = vsel %vm5011, %v5005, %v4656
        %v5023 = vsel %vm5011, %v5006, %v4658
        %v5024 = vsel %vm5011, %v5007, %v4660
        %v5025 = vsel %vm5011, %v5008, %v4662
        %v5026 = vsel %vm5011, %v5009, %v4664
        %v5027 = vsel %vm5011, %v5010, %v4666
        %vm5028 = vcmask 162816
        %v5029 = vsel %vm5028, %v5012, %v4700
        %v5030 = vsel %vm5028, %v5013, %v4702
        %v5031 = vsel %vm5028, %v5014, %v4704
        %v5032 = vsel %vm5028, %v5015, %v4706
        %v5033 = vsel %vm5028, %v5016, %v4708
        %v5034 = vsel %vm5028, %v5017, %v4710
        %v5035 = vsel %vm5028, %v5018, %v4712
        %v5036 = vsel %vm5028, %v5019, %v4714
        %v5037 = vsel %vm5028, %v5020, %v4716
        %v5038 = vsel %vm5028, %v5021, %v4718
        %v5039 = vsel %vm5028, %v5022, %v4720
        %v5040 = vsel %vm5028, %v5023, %v4722
        %v5041 = vsel %vm5028, %v5024, %v4724
        %v5042 = vsel %vm5028, %v5025, %v4726
        %v5043 = vsel %vm5028, %v5026, %v4728
        %v5044 = vsel %vm5028, %v5027, %v4730
        %vm5045 = vcmask 179200
        %v5046 = vsel %vm5045, %v5029, %v4764
        %v5047 = vsel %vm5045, %v5030, %v4766
        %v5048 = vsel %vm5045, %v5031, %v4768
        %v5049 = vsel %vm5045, %v5032, %v4770
        %v5050 = vsel %vm5045, %v5033, %v4772
        %v5051 = vsel %vm5045, %v5034, %v4774
        %v5052 = vsel %vm5045, %v5035, %v4776
        %v5053 = vsel %vm5045, %v5036, %v4778
        %v5054 = vsel %vm5045, %v5037, %v4780
        %v5055 = vsel %vm5045, %v5038, %v4782
        %v5056 = vsel %vm5045, %v5039, %v4784
        %v5057 = vsel %vm5045, %v5040, %v4786
        %v5058 = vsel %vm5045, %v5041, %v4788
        %v5059 = vsel %vm5045, %v5042, %v4790
        %v5060 = vsel %vm5045, %v5043, %v4792
        %v5061 = vsel %vm5045, %v5044, %v4794
        %vm5062 = vcmask 195584
        %v5063 = vsel %vm5062, %v5046, %v4828
        %v5064 = vsel %vm5062, %v5047, %v4830
        %v5065 = vsel %vm5062, %v5048, %v4832
        %v5066 = vsel %vm5062, %v5049, %v4834
        %v5067 = vsel %vm5062, %v5050, %v4836
        %v5068 = vsel %vm5062, %v5051, %v4838
        %v5069 = vsel %vm5062, %v5052, %v4840
        %v5070 = vsel %vm5062, %v5053, %v4842
        %v5071 = vsel %vm5062, %v5054, %v4844
        %v5072 = vsel %vm5062, %v5055, %v4846
        %v5073 = vsel %vm5062, %v5056, %v4848
        %v5074 = vsel %vm5062, %v5057, %v4850
        %v5075 = vsel %vm5062, %v5058, %v4852
        %v5076 = vsel %vm5062, %v5059, %v4854
        %v5077 = vsel %vm5062, %v5060, %v4856
        %v5078 = vsel %vm5062, %v5061, %v4858
        %vm5079 = vcmask 211968
        %v5080 = vsel %vm5079, %v5063, 0.0
        %v5081 = vsel %vm5079, %v5064, 0.0
        %v5082 = vsel %vm5079, %v5065, 0.0
        %v5083 = vsel %vm5079, %v5066, 0.0
        %v5084 = vsel %vm5079, %v5067, 0.0
        %v5085 = vsel %vm5079, %v5068, 0.0
        %v5086 = vsel %vm5079, %v5069, 0.0
        %v5087 = vsel %vm5079, %v5070, 0.0
        %v5088 = vsel %vm5079, %v5071, 0.0
        %v5089 = vsel %vm5079, %v5072, 0.0
        %v5090 = vsel %vm5079, %v5073, 0.0
        %v5091 = vsel %vm5079, %v5074, 0.0
        %v5092 = vsel %vm5079, %v5075, 0.0
        %v5093 = vsel %vm5079, %v5076, 0.0
        %v5094 = vsel %vm5079, %v5077, 0.0
        %v5095 = vsel %vm5079, %v5078, 0.0
        %v5096 = vpack.c.bf16 %v5081, %v5080
        %v5097 = vpack.c.bf16 %v5083, %v5082
        %v5098 = vpack.c.bf16 %v5085, %v5084
        %v5099 = vpack.c.bf16 %v5087, %v5086
        %v5100 = vpack.c.bf16 %v5089, %v5088
        %v5101 = vpack.c.bf16 %v5091, %v5090
        %v5102 = vpack.c.bf16 %v5093, %v5092
        %v5103 = vpack.c.bf16 %v5095, %v5094
        %v5104 = vld [vmem:[#allocation2] sm:$0xff]
        %v5105 = vld [vmem:[#allocation2 + $0x8] sm:$0xff]
        %v5106 = vld [vmem:[#allocation2 + $0x10] sm:$0xff]
        %v5107 = vld [vmem:[#allocation2 + $0x18] sm:$0xff]
        %v5108 = vld [vmem:[%s2] sm:$0x3]
        %v5110 = vlaneseq
        %v5111 = vshrl.u32 %v5110, 7
        %v5112 = vsub.s32 0, %v5111
        %v5113 = vrot.slane %v5108, %v5112
        %v5114 = vlaneseq
        %v5115 = vshrl.u32 %v5114, 7
        %v5116 = vsub.s32 1, %v5115
        %v5117 = vrot.slane %v5108, %v5116
        %v5124 = vunpack.c.l.b16 %v5104
        %v5125 = vunpack.c.h.b16 %v5104
        %v5126 = vunpack.c.l.b16 %v5105
        %v5127 = vunpack.c.h.b16 %v5105
        %v5128 = vunpack.c.l.b16 %v5106
        %v5129 = vunpack.c.h.b16 %v5106
        %v5130 = vunpack.c.l.b16 %v5107
        %v5131 = vunpack.c.h.b16 %v5107
        %v5132 = vpack.c.b16 %v5126, %v5124
        %v5133 = vpack.c.b16 %v5127, %v5125
        %v5134 = vpack.c.b16 %v5130, %v5128
        %v5135 = vpack.c.b16 %v5131, %v5129
        %vm5140 = vcmask 261120
        %v5142 = vsel %vm5140, %v5096, 0
        %v5145 = vsel %vm5140, %v5097, 0
        %v5148 = vsel %vm5140, %v5098, 0
        %v5151 = vsel %vm5140, %v5099, 0
        %v5154 = vsel %vm5140, %v5100, 0
        %v5157 = vsel %vm5140, %v5101, 0
        %v5160 = vsel %vm5140, %v5102, 0
        %v5163 = vsel %vm5140, %v5103, 0
        %5165 = vmatprep.subr.bf16.mxu0 %v5133
        %5166 = vmatpush1.bf16.msra.mxu0 %v5132
        %5167 = vmatprep.subr.bf16.mxu0 %v5135
        %5168 = vmatpush1.bf16.msra.mxu0 %v5134
        %5169 = vmatprep.subr.bf16.mxu0 0
        %5170 = vmatpush1.bf16.msra.mxu0 0
        %5171 = vmatprep.subr.bf16.mxu0 0
        %5172 = vmatpush1.bf16.msra.mxu0 0
        %5173 = vmatprep.subr.bf16.mxu0 0
        %5174 = vmatpush1.bf16.msra.mxu0 0
        %5175 = vmatprep.subr.bf16.mxu0 0
        %5176 = vmatpush1.bf16.msra.mxu0 0
        %5177 = vmatprep.subr.bf16.mxu0 0
        %5178 = vmatpush1.bf16.msra.mxu0 0
        %5179 = vmatprep.subr.bf16.mxu0 0
        %5180 = vmatpush1.bf16.msra.mxu0 0
        %5181 = vmatprep.subr.bf16.mxu0 0
        %5182 = vmatpush1.bf16.msra.mxu0 0
        %5183 = vmatprep.subr.bf16.mxu0 0
        %5184 = vmatpush1.bf16.msra.mxu0 0
        %5185 = vmatprep.subr.bf16.mxu0 0
        %5186 = vmatpush1.bf16.msra.mxu0 0
        %5187 = vmatprep.subr.bf16.mxu0 0
        %5188 = vmatpush1.bf16.msra.mxu0 0
        %5189 = vmatprep.subr.bf16.mxu0 0
        %5190 = vmatpush1.bf16.msra.mxu0 0
        %5191 = vmatprep.subr.bf16.mxu0 0
        %5192 = vmatpush1.bf16.msra.mxu0 0
        %5193 = vmatprep.subr.bf16.mxu0 0
        %5194 = vmatpush1.bf16.msra.mxu0 0
        %5195 = vmatprep.subr.bf16.mxu0 0
        %5196 = vmatpush1.bf16.msra.mxu0 0
        %5197 = vmatprep.mubr.bf16.mxu0 0
        %5198 = vmatmul.mubr.bf16.gmra.mrb[0].mxu0 %v5142
        %v5199 = vpop.f32.mrb[0].mxu0
        %v5200 = vadd.f32 %v5113, %v5199
        %v5201 = vpop.f32.mrb[0].mxu0
        %v5202 = vadd.f32 %v5117, %v5201
        %v5203 = vpop.f32.mrb[0].mxu0
        %v5204 = vadd.f32 %v5113, %v5203
        %v5205 = vpop.f32.mrb[0].mxu0
        %v5206 = vadd.f32 %v5117, %v5205
        %5207 = vmatprep.mubr.bf16.mxu0 0
        %5208 = vmatmul.mubr.bf16.gmra.mrb[0].mxu0 %v5145
        %v5209 = vpop.f32.mrb[0].mxu0
        %v5210 = vadd.f32 %v5113, %v5209
        %v5211 = vpop.f32.mrb[0].mxu0
        %v5212 = vadd.f32 %v5117, %v5211
        %v5213 = vpop.f32.mrb[0].mxu0
        %v5214 = vadd.f32 %v5113, %v5213
        %v5215 = vpop.f32.mrb[0].mxu0
        %v5216 = vadd.f32 %v5117, %v5215
        %5217 = vmatprep.mubr.bf16.mxu0 0
        %5218 = vmatmul.mubr.bf16.gmra.mrb[0].mxu0 %v5148
        %v5219 = vpop.f32.mrb[0].mxu0
        %v5220 = vadd.f32 %v5113, %v5219
        %v5221 = vpop.f32.mrb[0].mxu0
        %v5222 = vadd.f32 %v5117, %v5221
        %v5223 = vpop.f32.mrb[0].mxu0
        %v5224 = vadd.f32 %v5113, %v5223
        %v5225 = vpop.f32.mrb[0].mxu0
        %v5226 = vadd.f32 %v5117, %v5225
        %5227 = vmatprep.mubr.bf16.mxu0 0
        %5228 = vmatmul.mubr.bf16.gmra.mrb[0].mxu0 %v5151
        %v5229 = vpop.f32.mrb[0].mxu0
        %v5230 = vadd.f32 %v5113, %v5229
        %v5231 = vpop.f32.mrb[0].mxu0
        %v5232 = vadd.f32 %v5117, %v5231
        %v5233 = vpop.f32.mrb[0].mxu0
        %v5234 = vadd.f32 %v5113, %v5233
        %v5235 = vpop.f32.mrb[0].mxu0
        %v5236 = vadd.f32 %v5117, %v5235
        %5237 = vmatprep.mubr.bf16.mxu0 0
        %5238 = vmatmul.mubr.bf16.gmra.mrb[0].mxu0 %v5154
        %v5239 = vpop.f32.mrb[0].mxu0
        %v5240 = vadd.f32 %v5113, %v5239
        %v5241 = vpop.f32.mrb[0].mxu0
        %v5242 = vadd.f32 %v5117, %v5241
        %v5243 = vpop.f32.mrb[0].mxu0
        %v5244 = vadd.f32 %v5113, %v5243
        %v5245 = vpop.f32.mrb[0].mxu0
        %v5246 = vadd.f32 %v5117, %v5245
        %5247 = vmatprep.mubr.bf16.mxu0 0
        %5248 = vmatmul.mubr.bf16.gmra.mrb[0].mxu0 %v5157
        %v5249 = vpop.f32.mrb[0].mxu0
        %v5250 = vadd.f32 %v5113, %v5249
        %v5251 = vpop.f32.mrb[0].mxu0
        %v5252 = vadd.f32 %v5117, %v5251
        %v5253 = vpop.f32.mrb[0].mxu0
        %v5254 = vadd.f32 %v5113, %v5253
        %v5255 = vpop.f32.mrb[0].mxu0
        %v5256 = vadd.f32 %v5117, %v5255
        %5257 = vmatprep.mubr.bf16.mxu0 0
        %5258 = vmatmul.mubr.bf16.gmra.mrb[0].mxu0 %v5160
        %v5259 = vpop.f32.mrb[0].mxu0
        %v5260 = vadd.f32 %v5113, %v5259
        %v5261 = vpop.f32.mrb[0].mxu0
        %v5262 = vadd.f32 %v5117, %v5261
        %v5263 = vpop.f32.mrb[0].mxu0
        %v5264 = vadd.f32 %v5113, %v5263
        %v5265 = vpop.f32.mrb[0].mxu0
        %v5266 = vadd.f32 %v5117, %v5265
        %5267 = vmatprep.mubr.bf16.mxu0 0
        %5268 = vmatmul.mubr.bf16.gmra.mrb[0].mxu0 %v5163
        %v5269 = vpop.f32.mrb[0].mxu0
        %v5270 = vadd.f32 %v5113, %v5269
        %v5271 = vpop.f32.mrb[0].mxu0
        %v5272 = vadd.f32 %v5117, %v5271
        %v5273 = vpop.f32.mrb[0].mxu0
        %v5274 = vadd.f32 %v5113, %v5273
        %v5275 = vpop.f32.mrb[0].mxu0
        %v5276 = vadd.f32 %v5117, %v5275
        %5277 = vdwg.mxu0
        %v5278 = vmax.f32 %v5200, 0.0
        %v5279 = vmax.f32 %v5202, 0.0
        %v5280 = vmax.f32 %v5204, 0.0
        %v5281 = vmax.f32 %v5206, 0.0
        %v5282 = vmax.f32 %v5210, 0.0
        %v5283 = vmax.f32 %v5212, 0.0
        %v5284 = vmax.f32 %v5214, 0.0
        %v5285 = vmax.f32 %v5216, 0.0
        %v5286 = vmax.f32 %v5220, 0.0
        %v5287 = vmax.f32 %v5222, 0.0
        %v5288 = vmax.f32 %v5224, 0.0
        %v5289 = vmax.f32 %v5226, 0.0
        %v5290 = vmax.f32 %v5230, 0.0
        %v5291 = vmax.f32 %v5232, 0.0
        %v5292 = vmax.f32 %v5234, 0.0
        %v5293 = vmax.f32 %v5236, 0.0
        %v5294 = vmax.f32 %v5240, 0.0
        %v5295 = vmax.f32 %v5242, 0.0
        %v5296 = vmax.f32 %v5244, 0.0
        %v5297 = vmax.f32 %v5246, 0.0
        %v5298 = vmax.f32 %v5250, 0.0
        %v5299 = vmax.f32 %v5252, 0.0
        %v5300 = vmax.f32 %v5254, 0.0
        %v5301 = vmax.f32 %v5256, 0.0
        %v5302 = vmax.f32 %v5260, 0.0
        %v5303 = vmax.f32 %v5262, 0.0
        %v5304 = vmax.f32 %v5264, 0.0
        %v5305 = vmax.f32 %v5266, 0.0
        %v5306 = vmax.f32 %v5270, 0.0
        %v5307 = vmax.f32 %v5272, 0.0
        %v5308 = vmax.f32 %v5274, 0.0
        %v5309 = vmax.f32 %v5276, 0.0
        %v5310 = vpack.c.bf16 %v5280, %v5278
        %v5311 = vpack.c.bf16 %v5281, %v5279
        %v5312 = vpack.c.bf16 %v5284, %v5282
        %v5313 = vpack.c.bf16 %v5285, %v5283
        %v5314 = vpack.c.bf16 %v5288, %v5286
        %v5315 = vpack.c.bf16 %v5289, %v5287
        %v5316 = vpack.c.bf16 %v5292, %v5290
        %v5317 = vpack.c.bf16 %v5293, %v5291
        %v5318 = vpack.c.bf16 %v5296, %v5294
        %v5319 = vpack.c.bf16 %v5297, %v5295
        %v5320 = vpack.c.bf16 %v5300, %v5298
        %v5321 = vpack.c.bf16 %v5301, %v5299
        %v5322 = vpack.c.bf16 %v5304, %v5302
        %v5323 = vpack.c.bf16 %v5305, %v5303
        %v5324 = vpack.c.bf16 %v5308, %v5306
        %v5325 = vpack.c.bf16 %v5309, %v5307
        %v5326 = vld [vmem:[%s3] sm:$0xff]
        %v5327 = vld [vmem:[%s3 + $0x8] sm:$0xff]
        %v5328 = vld [vmem:[%s3 + $0x10] sm:$0xff]
        %v5329 = vld [vmem:[%s3 + $0x18] sm:$0xff]
        %v5330 = vld [vmem:[%s3 + $0x20] sm:$0xff]
        %v5331 = vld [vmem:[%s3 + $0x28] sm:$0xff]
        %v5332 = vld [vmem:[%s3 + $0x30] sm:$0xff]
        %v5333 = vld [vmem:[%s3 + $0x38] sm:$0xff]
        %v5334 = vld [vmem:[%s3 + $0x40] sm:$0xff]
        %v5335 = vld [vmem:[%s3 + $0x48] sm:$0xff]
        %v5336 = vld [vmem:[%s3 + $0x50] sm:$0xff]
        %v5337 = vld [vmem:[%s3 + $0x58] sm:$0xff]
        %v5338 = vld [vmem:[%s3 + $0x60] sm:$0xff]
        %v5339 = vld [vmem:[%s3 + $0x68] sm:$0xff]
        %v5340 = vld [vmem:[%s3 + $0x70] sm:$0xff]
        %v5341 = vld [vmem:[%s3 + $0x78] sm:$0xff]
        %v5342 = vld [vmem:[%s3 + $0x80] sm:$0xff]
        %v5343 = vld [vmem:[%s3 + $0x88] sm:$0xff]
        %v5344 = vld [vmem:[%s3 + $0x90] sm:$0xff]
        %v5345 = vld [vmem:[%s3 + $0x98] sm:$0xff]
        %v5346 = vld [vmem:[%s3 + $0xa0] sm:$0xff]
        %v5347 = vld [vmem:[%s3 + $0xa8] sm:$0xff]
        %v5348 = vld [vmem:[%s3 + $0xb0] sm:$0xff]
        %v5349 = vld [vmem:[%s3 + $0xb8] sm:$0xff]
        %v5350 = vld [vmem:[%s3 + $0xc0] sm:$0xff]
        %v5351 = vld [vmem:[%s3 + $0xc8] sm:$0xff]
        %v5352 = vld [vmem:[%s3 + $0xd0] sm:$0xff]
        %v5353 = vld [vmem:[%s3 + $0xd8] sm:$0xff]
        %v5354 = vld [vmem:[%s3 + $0xe0] sm:$0xff]
        %v5355 = vld [vmem:[%s3 + $0xe8] sm:$0xff]
        %v5356 = vld [vmem:[%s3 + $0xf0] sm:$0xff]
        %v5357 = vld [vmem:[%s3 + $0xf8] sm:$0xff]
        %v5358 = vld [vmem:[%s4] sm:$0x3]
        %v5360 = vlaneseq
        %v5361 = vshrl.u32 %v5360, 7
        %v5362 = vsub.s32 0, %v5361
        %v5363 = vrot.slane %v5358, %v5362
        %v5364 = vlaneseq
        %v5365 = vshrl.u32 %v5364, 7
        %v5366 = vsub.s32 1, %v5365
        %v5367 = vrot.slane %v5358, %v5366
        %v5402 = vunpack.c.l.b16 %v5326
        %v5403 = vunpack.c.h.b16 %v5326
        %v5404 = vunpack.c.l.b16 %v5327
        %v5405 = vunpack.c.h.b16 %v5327
        %v5406 = vunpack.c.l.b16 %v5328
        %v5407 = vunpack.c.h.b16 %v5328
        %v5408 = vunpack.c.l.b16 %v5329
        %v5409 = vunpack.c.h.b16 %v5329
        %v5410 = vunpack.c.l.b16 %v5330
        %v5411 = vunpack.c.h.b16 %v5330
        %v5412 = vunpack.c.l.b16 %v5331
        %v5413 = vunpack.c.h.b16 %v5331
        %v5414 = vunpack.c.l.b16 %v5332
        %v5415 = vunpack.c.h.b16 %v5332
        %v5416 = vunpack.c.l.b16 %v5333
        %v5417 = vunpack.c.h.b16 %v5333
        %v5418 = vunpack.c.l.b16 %v5334
        %v5419 = vunpack.c.h.b16 %v5334
        %v5420 = vunpack.c.l.b16 %v5335
        %v5421 = vunpack.c.h.b16 %v5335
        %v5422 = vunpack.c.l.b16 %v5336
        %v5423 = vunpack.c.h.b16 %v5336
        %v5424 = vunpack.c.l.b16 %v5337
        %v5425 = vunpack.c.h.b16 %v5337
        %v5426 = vunpack.c.l.b16 %v5338
        %v5427 = vunpack.c.h.b16 %v5338
        %v5428 = vunpack.c.l.b16 %v5339
        %v5429 = vunpack.c.h.b16 %v5339
        %v5430 = vunpack.c.l.b16 %v5340
        %v5431 = vunpack.c.h.b16 %v5340
        %v5432 = vunpack.c.l.b16 %v5341
        %v5433 = vunpack.c.h.b16 %v5341
        %v5434 = vunpack.c.l.b16 %v5342
        %v5435 = vunpack.c.h.b16 %v5342
        %v5436 = vunpack.c.l.b16 %v5343
        %v5437 = vunpack.c.h.b16 %v5343
        %v5438 = vunpack.c.l.b16 %v5344
        %v5439 = vunpack.c.h.b16 %v5344
        %v5440 = vunpack.c.l.b16 %v5345
        %v5441 = vunpack.c.h.b16 %v5345
        %v5442 = vunpack.c.l.b16 %v5346
        %v5443 = vunpack.c.h.b16 %v5346
        %v5444 = vunpack.c.l.b16 %v5347
        %v5445 = vunpack.c.h.b16 %v5347
        %v5446 = vunpack.c.l.b16 %v5348
        %v5447 = vunpack.c.h.b16 %v5348
        %v5448 = vunpack.c.l.b16 %v5349
        %v5449 = vunpack.c.h.b16 %v5349
        %v5450 = vunpack.c.l.b16 %v5350
        %v5451 = vunpack.c.h.b16 %v5350
        %v5452 = vunpack.c.l.b16 %v5351
        %v5453 = vunpack.c.h.b16 %v5351
        %v5454 = vunpack.c.l.b16 %v5352
        %v5455 = vunpack.c.h.b16 %v5352
        %v5456 = vunpack.c.l.b16 %v5353
        %v5457 = vunpack.c.h.b16 %v5353
        %v5458 = vunpack.c.l.b16 %v5354
        %v5459 = vunpack.c.h.b16 %v5354
        %v5460 = vunpack.c.l.b16 %v5355
        %v5461 = vunpack.c.h.b16 %v5355
        %v5462 = vunpack.c.l.b16 %v5356
        %v5463 = vunpack.c.h.b16 %v5356
        %v5464 = vunpack.c.l.b16 %v5357
        %v5465 = vunpack.c.h.b16 %v5357
        %v5466 = vpack.c.b16 %v5404, %v5402
        %v5467 = vpack.c.b16 %v5405, %v5403
        %v5468 = vpack.c.b16 %v5408, %v5406
        %v5469 = vpack.c.b16 %v5409, %v5407
        %v5470 = vpack.c.b16 %v5412, %v5410
        %v5471 = vpack.c.b16 %v5413, %v5411
        %v5472 = vpack.c.b16 %v5416, %v5414
        %v5473 = vpack.c.b16 %v5417, %v5415
        %v5474 = vpack.c.b16 %v5420, %v5418
        %v5475 = vpack.c.b16 %v5421, %v5419
        %v5476 = vpack.c.b16 %v5424, %v5422
        %v5477 = vpack.c.b16 %v5425, %v5423
        %v5478 = vpack.c.b16 %v5428, %v5426
        %v5479 = vpack.c.b16 %v5429, %v5427
        %v5480 = vpack.c.b16 %v5432, %v5430
        %v5481 = vpack.c.b16 %v5433, %v5431
        %v5482 = vpack.c.b16 %v5436, %v5434
        %v5483 = vpack.c.b16 %v5437, %v5435
        %v5484 = vpack.c.b16 %v5440, %v5438
        %v5485 = vpack.c.b16 %v5441, %v5439
        %v5486 = vpack.c.b16 %v5444, %v5442
        %v5487 = vpack.c.b16 %v5445, %v5443
        %v5488 = vpack.c.b16 %v5448, %v5446
        %v5489 = vpack.c.b16 %v5449, %v5447
        %v5490 = vpack.c.b16 %v5452, %v5450
        %v5491 = vpack.c.b16 %v5453, %v5451
        %v5492 = vpack.c.b16 %v5456, %v5454
        %v5493 = vpack.c.b16 %v5457, %v5455
        %v5494 = vpack.c.b16 %v5460, %v5458
        %v5495 = vpack.c.b16 %v5461, %v5459
        %v5496 = vpack.c.b16 %v5464, %v5462
        %v5497 = vpack.c.b16 %v5465, %v5463
        %5530 = vmatprep.subr.bf16.mxu0 %v5467
        %5531 = vmatpush1.bf16.msra.mxu0 %v5466
        %5532 = vmatprep.subr.bf16.mxu0 %v5469
        %5533 = vmatpush1.bf16.msra.mxu0 %v5468
        %5534 = vmatprep.subr.bf16.mxu0 %v5471
        %5535 = vmatpush1.bf16.msra.mxu0 %v5470
        %5536 = vmatprep.subr.bf16.mxu0 %v5473
        %5537 = vmatpush1.bf16.msra.mxu0 %v5472
        %5538 = vmatprep.subr.bf16.mxu0 %v5475
        %5539 = vmatpush1.bf16.msra.mxu0 %v5474
        %5540 = vmatprep.subr.bf16.mxu0 %v5477
        %5541 = vmatpush1.bf16.msra.mxu0 %v5476
        %5542 = vmatprep.subr.bf16.mxu0 %v5479
        %5543 = vmatpush1.bf16.msra.mxu0 %v5478
        %5544 = vmatprep.subr.bf16.mxu0 %v5481
        %5545 = vmatpush1.bf16.msra.mxu0 %v5480
        %5546 = vmatprep.subr.bf16.mxu0 %v5483
        %5547 = vmatpush1.bf16.msra.mxu0 %v5482
        %5548 = vmatprep.subr.bf16.mxu0 %v5485
        %5549 = vmatpush1.bf16.msra.mxu0 %v5484
        %5550 = vmatprep.subr.bf16.mxu0 %v5487
        %5551 = vmatpush1.bf16.msra.mxu0 %v5486
        %5552 = vmatprep.subr.bf16.mxu0 %v5489
        %5553 = vmatpush1.bf16.msra.mxu0 %v5488
        %5554 = vmatprep.subr.bf16.mxu0 %v5491
        %5555 = vmatpush1.bf16.msra.mxu0 %v5490
        %5556 = vmatprep.subr.bf16.mxu0 %v5493
        %5557 = vmatpush1.bf16.msra.mxu0 %v5492
        %5558 = vmatprep.subr.bf16.mxu0 %v5495
        %5559 = vmatpush1.bf16.msra.mxu0 %v5494
        %5560 = vmatprep.subr.bf16.mxu0 %v5497
        %5561 = vmatpush1.bf16.msra.mxu0 %v5496
        %5562 = vmatprep.mubr.bf16.mxu0 %v5311
        %5563 = vmatmul.mubr.bf16.gmra.mrb[0].mxu0 %v5310
        %v5564 = vpop.f32.mrb[0].mxu0
        %v5565 = vadd.f32 %v5363, %v5564
        %v5566 = vpop.f32.mrb[0].mxu0
        %v5567 = vadd.f32 %v5367, %v5566
        %v5568 = vpop.f32.mrb[0].mxu0
        %v5569 = vadd.f32 %v5363, %v5568
        %v5570 = vpop.f32.mrb[0].mxu0
        %v5571 = vadd.f32 %v5367, %v5570
        %5572 = vmatprep.mubr.bf16.mxu0 %v5313
        %5573 = vmatmul.mubr.bf16.gmra.mrb[0].mxu0 %v5312
        %v5574 = vpop.f32.mrb[0].mxu0
        %v5575 = vadd.f32 %v5363, %v5574
        %v5576 = vpop.f32.mrb[0].mxu0
        %v5577 = vadd.f32 %v5367, %v5576
        %v5578 = vpop.f32.mrb[0].mxu0
        %v5579 = vadd.f32 %v5363, %v5578
        %v5580 = vpop.f32.mrb[0].mxu0
        %v5581 = vadd.f32 %v5367, %v5580
        %5582 = vmatprep.mubr.bf16.mxu0 %v5315
        %5583 = vmatmul.mubr.bf16.gmra.mrb[0].mxu0 %v5314
        %v5584 = vpop.f32.mrb[0].mxu0
        %v5585 = vadd.f32 %v5363, %v5584
        %v5586 = vpop.f32.mrb[0].mxu0
        %v5587 = vadd.f32 %v5367, %v5586
        %v5588 = vpop.f32.mrb[0].mxu0
        %v5589 = vadd.f32 %v5363, %v5588
        %v5590 = vpop.f32.mrb[0].mxu0
        %v5591 = vadd.f32 %v5367, %v5590
        %5592 = vmatprep.mubr.bf16.mxu0 %v5317
        %5593 = vmatmul.mubr.bf16.gmra.mrb[0].mxu0 %v5316
        %v5594 = vpop.f32.mrb[0].mxu0
        %v5595 = vadd.f32 %v5363, %v5594
        %v5596 = vpop.f32.mrb[0].mxu0
        %v5597 = vadd.f32 %v5367, %v5596
        %v5598 = vpop.f32.mrb[0].mxu0
        %v5599 = vadd.f32 %v5363, %v5598
        %v5600 = vpop.f32.mrb[0].mxu0
        %v5601 = vadd.f32 %v5367, %v5600
        %5602 = vmatprep.mubr.bf16.mxu0 %v5319
        %5603 = vmatmul.mubr.bf16.gmra.mrb[0].mxu0 %v5318
        %v5604 = vpop.f32.mrb[0].mxu0
        %v5605 = vadd.f32 %v5363, %v5604
        %v5606 = vpop.f32.mrb[0].mxu0
        %v5607 = vadd.f32 %v5367, %v5606
        %v5608 = vpop.f32.mrb[0].mxu0
        %v5609 = vadd.f32 %v5363, %v5608
        %v5610 = vpop.f32.mrb[0].mxu0
        %v5611 = vadd.f32 %v5367, %v5610
        %5612 = vmatprep.mubr.bf16.mxu0 %v5321
        %5613 = vmatmul.mubr.bf16.gmra.mrb[0].mxu0 %v5320
        %v5614 = vpop.f32.mrb[0].mxu0
        %v5615 = vadd.f32 %v5363, %v5614
        %v5616 = vpop.f32.mrb[0].mxu0
        %v5617 = vadd.f32 %v5367, %v5616
        %v5618 = vpop.f32.mrb[0].mxu0
        %v5619 = vadd.f32 %v5363, %v5618
        %v5620 = vpop.f32.mrb[0].mxu0
        %v5621 = vadd.f32 %v5367, %v5620
        %5622 = vmatprep.mubr.bf16.mxu0 %v5323
        %5623 = vmatmul.mubr.bf16.gmra.mrb[0].mxu0 %v5322
        %v5624 = vpop.f32.mrb[0].mxu0
        %v5625 = vadd.f32 %v5363, %v5624
        %v5626 = vpop.f32.mrb[0].mxu0
        %v5627 = vadd.f32 %v5367, %v5626
        %v5628 = vpop.f32.mrb[0].mxu0
        %v5629 = vadd.f32 %v5363, %v5628
        %v5630 = vpop.f32.mrb[0].mxu0
        %v5631 = vadd.f32 %v5367, %v5630
        %5632 = vmatprep.mubr.bf16.mxu0 %v5325
        %5633 = vmatmul.mubr.bf16.gmra.mrb[0].mxu0 %v5324
        %v5634 = vpop.f32.mrb[0].mxu0
        %v5635 = vadd.f32 %v5363, %v5634
        %v5636 = vpop.f32.mrb[0].mxu0
        %v5637 = vadd.f32 %v5367, %v5636
        %v5638 = vpop.f32.mrb[0].mxu0
        %v5639 = vadd.f32 %v5363, %v5638
        %v5640 = vpop.f32.mrb[0].mxu0
        %v5641 = vadd.f32 %v5367, %v5640
        %5642 = vdwg.mxu0
        %v5643 = vmax.f32 %v5565, 0.0
        %v5644 = vmax.f32 %v5567, 0.0
        %v5645 = vmax.f32 %v5569, 0.0
        %v5646 = vmax.f32 %v5571, 0.0
        %v5647 = vmax.f32 %v5575, 0.0
        %v5648 = vmax.f32 %v5577, 0.0
        %v5649 = vmax.f32 %v5579, 0.0
        %v5650 = vmax.f32 %v5581, 0.0
        %v5651 = vmax.f32 %v5585, 0.0
        %v5652 = vmax.f32 %v5587, 0.0
        %v5653 = vmax.f32 %v5589, 0.0
        %v5654 = vmax.f32 %v5591, 0.0
        %v5655 = vmax.f32 %v5595, 0.0
        %v5656 = vmax.f32 %v5597, 0.0
        %v5657 = vmax.f32 %v5599, 0.0
        %v5658 = vmax.f32 %v5601, 0.0
        %v5659 = vmax.f32 %v5605, 0.0
        %v5660 = vmax.f32 %v5607, 0.0
        %v5661 = vmax.f32 %v5609, 0.0
        %v5662 = vmax.f32 %v5611, 0.0
        %v5663 = vmax.f32 %v5615, 0.0
        %v5664 = vmax.f32 %v5617, 0.0
        %v5665 = vmax.f32 %v5619, 0.0
        %v5666 = vmax.f32 %v5621, 0.0
        %v5667 = vmax.f32 %v5625, 0.0
        %v5668 = vmax.f32 %v5627, 0.0
        %v5669 = vmax.f32 %v5629, 0.0
        %v5670 = vmax.f32 %v5631, 0.0
        %v5671 = vmax.f32 %v5635, 0.0
        %v5672 = vmax.f32 %v5637, 0.0
        %v5673 = vmax.f32 %v5639, 0.0
        %v5674 = vmax.f32 %v5641, 0.0
        %v5675 = vpack.c.bf16 %v5645, %v5643
        %v5676 = vpack.c.bf16 %v5646, %v5644
        %v5677 = vpack.c.bf16 %v5649, %v5647
        %v5678 = vpack.c.bf16 %v5650, %v5648
        %v5679 = vpack.c.bf16 %v5653, %v5651
        %v5680 = vpack.c.bf16 %v5654, %v5652
        %v5681 = vpack.c.bf16 %v5657, %v5655
        %v5682 = vpack.c.bf16 %v5658, %v5656
        %v5683 = vpack.c.bf16 %v5661, %v5659
        %v5684 = vpack.c.bf16 %v5662, %v5660
        %v5685 = vpack.c.bf16 %v5665, %v5663
        %v5686 = vpack.c.bf16 %v5666, %v5664
        %v5687 = vpack.c.bf16 %v5669, %v5667
        %v5688 = vpack.c.bf16 %v5670, %v5668
        %v5689 = vpack.c.bf16 %v5673, %v5671
        %v5690 = vpack.c.bf16 %v5674, %v5672
        %v5691 = vld [vmem:[#allocation5] sm:$0xff]
        %v5692 = vld [vmem:[#allocation5 + $0x8] sm:$0xff]
        %v5693 = vld [vmem:[#allocation5 + $0x10] sm:$0xff]
        %v5694 = vld [vmem:[#allocation5 + $0x18] sm:$0xff]
        %v5695 = vld [vmem:[#allocation5 + $0x20] sm:$0xff]
        %v5696 = vld [vmem:[#allocation5 + $0x28] sm:$0xff]
        %v5697 = vld [vmem:[#allocation5 + $0x30] sm:$0xff]
        %v5698 = vld [vmem:[#allocation5 + $0x38] sm:$0xff]
        %v5699 = vld [vmem:[#allocation5 + $0x40] sm:$0xff]
        %v5700 = vld [vmem:[#allocation5 + $0x48] sm:$0xff]
        %v5701 = vld [vmem:[#allocation5 + $0x50] sm:$0xff]
        %v5702 = vld [vmem:[#allocation5 + $0x58] sm:$0xff]
        %v5703 = vld [vmem:[#allocation5 + $0x60] sm:$0xff]
        %v5704 = vld [vmem:[#allocation5 + $0x68] sm:$0xff]
        %v5705 = vld [vmem:[#allocation5 + $0x70] sm:$0xff]
        %v5706 = vld [vmem:[#allocation5 + $0x78] sm:$0xff]
        %v5707 = vld [vmem:[#allocation5 + $0x80] sm:$0xff]
        %v5708 = vld [vmem:[#allocation5 + $0x88] sm:$0xff]
        %v5709 = vld [vmem:[#allocation5 + $0x90] sm:$0xff]
        %v5710 = vld [vmem:[#allocation5 + $0x98] sm:$0xff]
        %v5711 = vld [vmem:[#allocation5 + $0xa0] sm:$0xff]
        %v5712 = vld [vmem:[#allocation5 + $0xa8] sm:$0xff]
        %v5713 = vld [vmem:[#allocation5 + $0xb0] sm:$0xff]
        %v5714 = vld [vmem:[#allocation5 + $0xb8] sm:$0xff]
        %v5715 = vld [vmem:[#allocation5 + $0xc0] sm:$0xff]
        %v5716 = vld [vmem:[#allocation5 + $0xc8] sm:$0xff]
        %v5717 = vld [vmem:[#allocation5 + $0xd0] sm:$0xff]
        %v5718 = vld [vmem:[#allocation5 + $0xd8] sm:$0xff]
        %v5719 = vld [vmem:[#allocation5 + $0xe0] sm:$0xff]
        %v5720 = vld [vmem:[#allocation5 + $0xe8] sm:$0xff]
        %v5721 = vld [vmem:[#allocation5 + $0xf0] sm:$0xff]
        %v5722 = vld [vmem:[#allocation5 + $0xf8] sm:$0xff]
        %v5723 = vld [vmem:[%s6] sm:$0x3]
        %v5725 = vlaneseq
        %v5726 = vshrl.u32 %v5725, 7
        %v5727 = vsub.s32 0, %v5726
        %v5728 = vrot.slane %v5723, %v5727
        %v5729 = vlaneseq
        %v5730 = vshrl.u32 %v5729, 7
        %v5731 = vsub.s32 1, %v5730
        %v5732 = vrot.slane %v5723, %v5731
        %v5767 = vunpack.c.l.b16 %v5691
        %v5768 = vunpack.c.h.b16 %v5691
        %v5769 = vunpack.c.l.b16 %v5692
        %v5770 = vunpack.c.h.b16 %v5692
        %v5771 = vunpack.c.l.b16 %v5693
        %v5772 = vunpack.c.h.b16 %v5693
        %v5773 = vunpack.c.l.b16 %v5694
        %v5774 = vunpack.c.h.b16 %v5694
        %v5775 = vunpack.c.l.b16 %v5695
        %v5776 = vunpack.c.h.b16 %v5695
        %v5777 = vunpack.c.l.b16 %v5696
        %v5778 = vunpack.c.h.b16 %v5696
        %v5779 = vunpack.c.l.b16 %v5697
        %v5780 = vunpack.c.h.b16 %v5697
        %v5781 = vunpack.c.l.b16 %v5698
        %v5782 = vunpack.c.h.b16 %v5698
        %v5783 = vunpack.c.l.b16 %v5699
        %v5784 = vunpack.c.h.b16 %v5699
        %v5785 = vunpack.c.l.b16 %v5700
        %v5786 = vunpack.c.h.b16 %v5700
        %v5787 = vunpack.c.l.b16 %v5701
        %v5788 = vunpack.c.h.b16 %v5701
        %v5789 = vunpack.c.l.b16 %v5702
        %v5790 = vunpack.c.h.b16 %v5702
        %v5791 = vunpack.c.l.b16 %v5703
        %v5792 = vunpack.c.h.b16 %v5703
        %v5793 = vunpack.c.l.b16 %v5704
        %v5794 = vunpack.c.h.b16 %v5704
        %v5795 = vunpack.c.l.b16 %v5705
        %v5796 = vunpack.c.h.b16 %v5705
        %v5797 = vunpack.c.l.b16 %v5706
        %v5798 = vunpack.c.h.b16 %v5706
        %v5799 = vunpack.c.l.b16 %v5707
        %v5800 = vunpack.c.h.b16 %v5707
        %v5801 = vunpack.c.l.b16 %v5708
        %v5802 = vunpack.c.h.b16 %v5708
        %v5803 = vunpack.c.l.b16 %v5709
        %v5804 = vunpack.c.h.b16 %v5709
        %v5805 = vunpack.c.l.b16 %v5710
        %v5806 = vunpack.c.h.b16 %v5710
        %v5807 = vunpack.c.l.b16 %v5711
        %v5808 = vunpack.c.h.b16 %v5711
        %v5809 = vunpack.c.l.b16 %v5712
        %v5810 = vunpack.c.h.b16 %v5712
        %v5811 = vunpack.c.l.b16 %v5713
        %v5812 = vunpack.c.h.b16 %v5713
        %v5813 = vunpack.c.l.b16 %v5714
        %v5814 = vunpack.c.h.b16 %v5714
        %v5815 = vunpack.c.l.b16 %v5715
        %v5816 = vunpack.c.h.b16 %v5715
        %v5817 = vunpack.c.l.b16 %v5716
        %v5818 = vunpack.c.h.b16 %v5716
        %v5819 = vunpack.c.l.b16 %v5717
        %v5820 = vunpack.c.h.b16 %v5717
        %v5821 = vunpack.c.l.b16 %v5718
        %v5822 = vunpack.c.h.b16 %v5718
        %v5823 = vunpack.c.l.b16 %v5719
        %v5824 = vunpack.c.h.b16 %v5719
        %v5825 = vunpack.c.l.b16 %v5720
        %v5826 = vunpack.c.h.b16 %v5720
        %v5827 = vunpack.c.l.b16 %v5721
        %v5828 = vunpack.c.h.b16 %v5721
        %v5829 = vunpack.c.l.b16 %v5722
        %v5830 = vunpack.c.h.b16 %v5722
        %v5831 = vpack.c.b16 %v5769, %v5767
        %v5832 = vpack.c.b16 %v5770, %v5768
        %v5833 = vpack.c.b16 %v5773, %v5771
        %v5834 = vpack.c.b16 %v5774, %v5772
        %v5835 = vpack.c.b16 %v5777, %v5775
        %v5836 = vpack.c.b16 %v5778, %v5776
        %v5837 = vpack.c.b16 %v5781, %v5779
        %v5838 = vpack.c.b16 %v5782, %v5780
        %v5839 = vpack.c.b16 %v5785, %v5783
        %v5840 = vpack.c.b16 %v5786, %v5784
        %v5841 = vpack.c.b16 %v5789, %v5787
        %v5842 = vpack.c.b16 %v5790, %v5788
        %v5843 = vpack.c.b16 %v5793, %v5791
        %v5844 = vpack.c.b16 %v5794, %v5792
        %v5845 = vpack.c.b16 %v5797, %v5795
        %v5846 = vpack.c.b16 %v5798, %v5796
        %v5847 = vpack.c.b16 %v5801, %v5799
        %v5848 = vpack.c.b16 %v5802, %v5800
        %v5849 = vpack.c.b16 %v5805, %v5803
        %v5850 = vpack.c.b16 %v5806, %v5804
        %v5851 = vpack.c.b16 %v5809, %v5807
        %v5852 = vpack.c.b16 %v5810, %v5808
        %v5853 = vpack.c.b16 %v5813, %v5811
        %v5854 = vpack.c.b16 %v5814, %v5812
        %v5855 = vpack.c.b16 %v5817, %v5815
        %v5856 = vpack.c.b16 %v5818, %v5816
        %v5857 = vpack.c.b16 %v5821, %v5819
        %v5858 = vpack.c.b16 %v5822, %v5820
        %v5859 = vpack.c.b16 %v5825, %v5823
        %v5860 = vpack.c.b16 %v5826, %v5824
        %v5861 = vpack.c.b16 %v5829, %v5827
        %v5862 = vpack.c.b16 %v5830, %v5828
        %5895 = vmatprep.subr.bf16.mxu0 %v5832
        %5896 = vmatpush1.bf16.msra.mxu0 %v5831
        %5897 = vmatprep.subr.bf16.mxu0 %v5834
        %5898 = vmatpush1.bf16.msra.mxu0 %v5833
        %5899 = vmatprep.subr.bf16.mxu0 %v5836
        %5900 = vmatpush1.bf16.msra.mxu0 %v5835
        %5901 = vmatprep.subr.bf16.mxu0 %v5838
        %5902 = vmatpush1.bf16.msra.mxu0 %v5837
        %5903 = vmatprep.subr.bf16.mxu0 %v5840
        %5904 = vmatpush1.bf16.msra.mxu0 %v5839
        %5905 = vmatprep.subr.bf16.mxu0 %v5842
        %5906 = vmatpush1.bf16.msra.mxu0 %v5841
        %5907 = vmatprep.subr.bf16.mxu0 %v5844
        %5908 = vmatpush1.bf16.msra.mxu0 %v5843
        %5909 = vmatprep.subr.bf16.mxu0 %v5846
        %5910 = vmatpush1.bf16.msra.mxu0 %v5845
        %5911 = vmatprep.subr.bf16.mxu0 %v5848
        %5912 = vmatpush1.bf16.msra.mxu0 %v5847
        %5913 = vmatprep.subr.bf16.mxu0 %v5850
        %5914 = vmatpush1.bf16.msra.mxu0 %v5849
        %5915 = vmatprep.subr.bf16.mxu0 %v5852
        %5916 = vmatpush1.bf16.msra.mxu0 %v5851
        %5917 = vmatprep.subr.bf16.mxu0 %v5854
        %5918 = vmatpush1.bf16.msra.mxu0 %v5853
        %5919 = vmatprep.subr.bf16.mxu0 %v5856
        %5920 = vmatpush1.bf16.msra.mxu0 %v5855
        %5921 = vmatprep.subr.bf16.mxu0 %v5858
        %5922 = vmatpush1.bf16.msra.mxu0 %v5857
        %5923 = vmatprep.subr.bf16.mxu0 %v5860
        %5924 = vmatpush1.bf16.msra.mxu0 %v5859
        %5925 = vmatprep.subr.bf16.mxu0 %v5862
        %5926 = vmatpush1.bf16.msra.mxu0 %v5861
        %5927 = vmatprep.mubr.bf16.mxu0 %v5676
        %5928 = vmatmul.mubr.bf16.gmra.mrb[0].mxu0 %v5675
        %v5929 = vpop.f32.mrb[0].mxu0
        %v5930 = vadd.f32 %v5728, %v5929
        %v5931 = vpop.f32.mrb[0].mxu0
        %v5932 = vadd.f32 %v5732, %v5931
        %v5933 = vpop.f32.mrb[0].mxu0
        %v5934 = vadd.f32 %v5728, %v5933
        %v5935 = vpop.f32.mrb[0].mxu0
        %v5936 = vadd.f32 %v5732, %v5935
        %5937 = vmatprep.mubr.bf16.mxu0 %v5678
        %5938 = vmatmul.mubr.bf16.gmra.mrb[0].mxu0 %v5677
        %v5939 = vpop.f32.mrb[0].mxu0
        %v5940 = vadd.f32 %v5728, %v5939
        %v5941 = vpop.f32.mrb[0].mxu0
        %v5942 = vadd.f32 %v5732, %v5941
        %v5943 = vpop.f32.mrb[0].mxu0
        %v5944 = vadd.f32 %v5728, %v5943
        %v5945 = vpop.f32.mrb[0].mxu0
        %v5946 = vadd.f32 %v5732, %v5945
        %5947 = vmatprep.mubr.bf16.mxu0 %v5680
        %5948 = vmatmul.mubr.bf16.gmra.mrb[0].mxu0 %v5679
        %v5949 = vpop.f32.mrb[0].mxu0
        %v5950 = vadd.f32 %v5728, %v5949
        %v5951 = vpop.f32.mrb[0].mxu0
        %v5952 = vadd.f32 %v5732, %v5951
        %v5953 = vpop.f32.mrb[0].mxu0
        %v5954 = vadd.f32 %v5728, %v5953
        %v5955 = vpop.f32.mrb[0].mxu0
        %v5956 = vadd.f32 %v5732, %v5955
        %5957 = vmatprep.mubr.bf16.mxu0 %v5682
        %5958 = vmatmul.mubr.bf16.gmra.mrb[0].mxu0 %v5681
        %v5959 = vpop.f32.mrb[0].mxu0
        %v5960 = vadd.f32 %v5728, %v5959
        %v5961 = vpop.f32.mrb[0].mxu0
        %v5962 = vadd.f32 %v5732, %v5961
        %v5963 = vpop.f32.mrb[0].mxu0
        %v5964 = vadd.f32 %v5728, %v5963
        %v5965 = vpop.f32.mrb[0].mxu0
        %v5966 = vadd.f32 %v5732, %v5965
        %5967 = vmatprep.mubr.bf16.mxu0 %v5684
        %5968 = vmatmul.mubr.bf16.gmra.mrb[0].mxu0 %v5683
        %v5969 = vpop.f32.mrb[0].mxu0
        %v5970 = vadd.f32 %v5728, %v5969
        %v5971 = vpop.f32.mrb[0].mxu0
        %v5972 = vadd.f32 %v5732, %v5971
        %v5973 = vpop.f32.mrb[0].mxu0
        %v5974 = vadd.f32 %v5728, %v5973
        %v5975 = vpop.f32.mrb[0].mxu0
        %v5976 = vadd.f32 %v5732, %v5975
        %5977 = vmatprep.mubr.bf16.mxu0 %v5686
        %5978 = vmatmul.mubr.bf16.gmra.mrb[0].mxu0 %v5685
        %v5979 = vpop.f32.mrb[0].mxu0
        %v5980 = vadd.f32 %v5728, %v5979
        %v5981 = vpop.f32.mrb[0].mxu0
        %v5982 = vadd.f32 %v5732, %v5981
        %v5983 = vpop.f32.mrb[0].mxu0
        %v5984 = vadd.f32 %v5728, %v5983
        %v5985 = vpop.f32.mrb[0].mxu0
        %v5986 = vadd.f32 %v5732, %v5985
        %5987 = vmatprep.mubr.bf16.mxu0 %v5688
        %5988 = vmatmul.mubr.bf16.gmra.mrb[0].mxu0 %v5687
        %v5989 = vpop.f32.mrb[0].mxu0
        %v5990 = vadd.f32 %v5728, %v5989
        %v5991 = vpop.f32.mrb[0].mxu0
        %v5992 = vadd.f32 %v5732, %v5991
        %v5993 = vpop.f32.mrb[0].mxu0
        %v5994 = vadd.f32 %v5728, %v5993
        %v5995 = vpop.f32.mrb[0].mxu0
        %v5996 = vadd.f32 %v5732, %v5995
        %5997 = vmatprep.mubr.bf16.mxu0 %v5690
        %5998 = vmatmul.mubr.bf16.gmra.mrb[0].mxu0 %v5689
        %v5999 = vpop.f32.mrb[0].mxu0
        %v6000 = vadd.f32 %v5728, %v5999
        %v6001 = vpop.f32.mrb[0].mxu0
        %v6002 = vadd.f32 %v5732, %v6001
        %v6003 = vpop.f32.mrb[0].mxu0
        %v6004 = vadd.f32 %v5728, %v6003
        %v6005 = vpop.f32.mrb[0].mxu0
        %v6006 = vadd.f32 %v5732, %v6005
        %6007 = vdwg.mxu0
        %v6008 = vmax.f32 %v5930, 0.0
        %v6009 = vmax.f32 %v5932, 0.0
        %v6010 = vmax.f32 %v5934, 0.0
        %v6011 = vmax.f32 %v5936, 0.0
        %v6012 = vmax.f32 %v5940, 0.0
        %v6013 = vmax.f32 %v5942, 0.0
        %v6014 = vmax.f32 %v5944, 0.0
        %v6015 = vmax.f32 %v5946, 0.0
        %v6016 = vmax.f32 %v5950, 0.0
        %v6017 = vmax.f32 %v5952, 0.0
        %v6018 = vmax.f32 %v5954, 0.0
        %v6019 = vmax.f32 %v5956, 0.0
        %v6020 = vmax.f32 %v5960, 0.0
        %v6021 = vmax.f32 %v5962, 0.0
        %v6022 = vmax.f32 %v5964, 0.0
        %v6023 = vmax.f32 %v5966, 0.0
        %v6024 = vmax.f32 %v5970, 0.0
        %v6025 = vmax.f32 %v5972, 0.0
        %v6026 = vmax.f32 %v5974, 0.0
        %v6027 = vmax.f32 %v5976, 0.0
        %v6028 = vmax.f32 %v5980, 0.0
        %v6029 = vmax.f32 %v5982, 0.0
        %v6030 = vmax.f32 %v5984, 0.0
        %v6031 = vmax.f32 %v5986, 0.0
        %v6032 = vmax.f32 %v5990, 0.0
        %v6033 = vmax.f32 %v5992, 0.0
        %v6034 = vmax.f32 %v5994, 0.0
        %v6035 = vmax.f32 %v5996, 0.0
        %v6036 = vmax.f32 %v6000, 0.0
        %v6037 = vmax.f32 %v6002, 0.0
        %v6038 = vmax.f32 %v6004, 0.0
        %v6039 = vmax.f32 %v6006, 0.0
        %v6040 = vpack.c.bf16 %v6010, %v6008
        %v6041 = vpack.c.bf16 %v6011, %v6009
        %v6042 = vpack.c.bf16 %v6014, %v6012
        %v6043 = vpack.c.bf16 %v6015, %v6013
        %v6044 = vpack.c.bf16 %v6018, %v6016
        %v6045 = vpack.c.bf16 %v6019, %v6017
        %v6046 = vpack.c.bf16 %v6022, %v6020
        %v6047 = vpack.c.bf16 %v6023, %v6021
        %v6048 = vpack.c.bf16 %v6026, %v6024
        %v6049 = vpack.c.bf16 %v6027, %v6025
        %v6050 = vpack.c.bf16 %v6030, %v6028
        %v6051 = vpack.c.bf16 %v6031, %v6029
        %v6052 = vpack.c.bf16 %v6034, %v6032
        %v6053 = vpack.c.bf16 %v6035, %v6033
        %v6054 = vpack.c.bf16 %v6038, %v6036
        %v6055 = vpack.c.bf16 %v6039, %v6037
        %v6056 = vld [vmem:[#allocation7] sm:$0xf]
        %v6057 = vld [vmem:[#allocation7 + $0x4] sm:$0xf]
        %v6058 = vld [vmem:[#allocation7 + $0x8] sm:$0xf]
        %v6059 = vld [vmem:[#allocation7 + $0xc] sm:$0xf]
        %v6060 = vld [vmem:[#allocation7 + $0x10] sm:$0xf]
        %v6061 = vld [vmem:[#allocation7 + $0x14] sm:$0xf]
        %v6062 = vld [vmem:[#allocation7 + $0x18] sm:$0xf]
        %v6063 = vld [vmem:[#allocation7 + $0x1c] sm:$0xf]
        %v6064 = vld [vmem:[#allocation7 + $0x20] sm:$0xf]
        %v6065 = vld [vmem:[#allocation7 + $0x24] sm:$0xf]
        %v6066 = vld [vmem:[#allocation7 + $0x28] sm:$0xf]
        %v6067 = vld [vmem:[#allocation7 + $0x2c] sm:$0xf]
        %v6068 = vld [vmem:[#allocation7 + $0x30] sm:$0xf]
        %v6069 = vld [vmem:[#allocation7 + $0x34] sm:$0xf]
        %v6070 = vld [vmem:[#allocation7 + $0x38] sm:$0xf]
        %v6071 = vld [vmem:[#allocation7 + $0x3c] sm:$0xf]
        %v6072 = vld [vmem:[#allocation7 + $0x40] sm:$0xf]
        %v6073 = vld [vmem:[#allocation7 + $0x44] sm:$0xf]
        %v6074 = vld [vmem:[#allocation7 + $0x48] sm:$0xf]
        %v6075 = vld [vmem:[#allocation7 + $0x4c] sm:$0xf]
        %v6076 = vld [vmem:[#allocation7 + $0x50] sm:$0xf]
        %v6077 = vld [vmem:[#allocation7 + $0x54] sm:$0xf]
        %v6078 = vld [vmem:[#allocation7 + $0x58] sm:$0xf]
        %v6079 = vld [vmem:[#allocation7 + $0x5c] sm:$0xf]
        %v6080 = vld [vmem:[#allocation7 + $0x60] sm:$0xf]
        %v6081 = vld [vmem:[#allocation7 + $0x64] sm:$0xf]
        %v6082 = vld [vmem:[#allocation7 + $0x68] sm:$0xf]
        %v6083 = vld [vmem:[#allocation7 + $0x6c] sm:$0xf]
        %v6084 = vld [vmem:[#allocation7 + $0x70] sm:$0xf]
        %v6085 = vld [vmem:[#allocation7 + $0x74] sm:$0xf]
        %v6086 = vld [vmem:[#allocation7 + $0x78] sm:$0xf]
        %v6087 = vld [vmem:[#allocation7 + $0x7c] sm:$0xf]
        %v6088 = vld [vmem:[%s8] sm:$0x1]
        %v6090 = vlaneseq
        %v6091 = vshrl.u32 %v6090, 7
        %v6092 = vsub.s32 0, %v6091
        %v6093 = vrot.slane %v6088, %v6092
        %v6127 = vunpack.c.l.b16 %v6056
        %v6128 = vunpack.c.l.b16 %v6057
        %v6129 = vunpack.c.l.b16 %v6058
        %v6130 = vunpack.c.l.b16 %v6059
        %v6131 = vunpack.c.l.b16 %v6060
        %v6132 = vunpack.c.l.b16 %v6061
        %v6133 = vunpack.c.l.b16 %v6062
        %v6134 = vunpack.c.l.b16 %v6063
        %v6135 = vunpack.c.l.b16 %v6064
        %v6136 = vunpack.c.l.b16 %v6065
        %v6137 = vunpack.c.l.b16 %v6066
        %v6138 = vunpack.c.l.b16 %v6067
        %v6139 = vunpack.c.l.b16 %v6068
        %v6140 = vunpack.c.l.b16 %v6069
        %v6141 = vunpack.c.l.b16 %v6070
        %v6142 = vunpack.c.l.b16 %v6071
        %v6143 = vunpack.c.l.b16 %v6072
        %v6144 = vunpack.c.l.b16 %v6073
        %v6145 = vunpack.c.l.b16 %v6074
        %v6146 = vunpack.c.l.b16 %v6075
        %v6147 = vunpack.c.l.b16 %v6076
        %v6148 = vunpack.c.l.b16 %v6077
        %v6149 = vunpack.c.l.b16 %v6078
        %v6150 = vunpack.c.l.b16 %v6079
        %v6151 = vunpack.c.l.b16 %v6080
        %v6152 = vunpack.c.l.b16 %v6081
        %v6153 = vunpack.c.l.b16 %v6082
        %v6154 = vunpack.c.l.b16 %v6083
        %v6155 = vunpack.c.l.b16 %v6084
        %v6156 = vunpack.c.l.b16 %v6085
        %v6157 = vunpack.c.l.b16 %v6086
        %v6158 = vunpack.c.l.b16 %v6087
        %v6159 = vpack.c.b16 %v6128, %v6127
        %v6160 = vpack.c.b16 %v6130, %v6129
        %v6161 = vpack.c.b16 %v6132, %v6131
        %v6162 = vpack.c.b16 %v6134, %v6133
        %v6163 = vpack.c.b16 %v6136, %v6135
        %v6164 = vpack.c.b16 %v6138, %v6137
        %v6165 = vpack.c.b16 %v6140, %v6139
        %v6166 = vpack.c.b16 %v6142, %v6141
        %v6167 = vpack.c.b16 %v6144, %v6143
        %v6168 = vpack.c.b16 %v6146, %v6145
        %v6169 = vpack.c.b16 %v6148, %v6147
        %v6170 = vpack.c.b16 %v6150, %v6149
        %v6171 = vpack.c.b16 %v6152, %v6151
        %v6172 = vpack.c.b16 %v6154, %v6153
        %v6173 = vpack.c.b16 %v6156, %v6155
        %v6174 = vpack.c.b16 %v6158, %v6157
        %6191 = vmatprep.subr.bf16.mxu0 0
        %6192 = vmatpush1.bf16.msra.mxu0 %v6159
        %6193 = vmatprep.subr.bf16.mxu0 0
        %6194 = vmatpush1.bf16.msra.mxu0 %v6160
        %6195 = vmatprep.subr.bf16.mxu0 0
        %6196 = vmatpush1.bf16.msra.mxu0 %v6161
        %6197 = vmatprep.subr.bf16.mxu0 0
        %6198 = vmatpush1.bf16.msra.mxu0 %v6162
        %6199 = vmatprep.subr.bf16.mxu0 0
        %6200 = vmatpush1.bf16.msra.mxu0 %v6163
        %6201 = vmatprep.subr.bf16.mxu0 0
        %6202 = vmatpush1.bf16.msra.mxu0 %v6164
        %6203 = vmatprep.subr.bf16.mxu0 0
        %6204 = vmatpush1.bf16.msra.mxu0 %v6165
        %6205 = vmatprep.subr.bf16.mxu0 0
        %6206 = vmatpush1.bf16.msra.mxu0 %v6166
        %6207 = vmatprep.subr.bf16.mxu0 0
        %6208 = vmatpush1.bf16.msra.mxu0 %v6167
        %6209 = vmatprep.subr.bf16.mxu0 0
        %6210 = vmatpush1.bf16.msra.mxu0 %v6168
        %6211 = vmatprep.subr.bf16.mxu0 0
        %6212 = vmatpush1.bf16.msra.mxu0 %v6169
        %6213 = vmatprep.subr.bf16.mxu0 0
        %6214 = vmatpush1.bf16.msra.mxu0 %v6170
        %6215 = vmatprep.subr.bf16.mxu0 0
        %6216 = vmatpush1.bf16.msra.mxu0 %v6171
        %6217 = vmatprep.subr.bf16.mxu0 0
        %6218 = vmatpush1.bf16.msra.mxu0 %v6172
        %6219 = vmatprep.subr.bf16.mxu0 0
        %6220 = vmatpush1.bf16.msra.mxu0 %v6173
        %6221 = vmatprep.subr.bf16.mxu0 0
        %6222 = vmatpush1.bf16.msra.mxu0 %v6174
        %6223 = vmatprep.mubr.bf16.mxu0 %v6041
        %6224 = vmatmul.mubr.bf16.gmra.mrb[0].mxu0 %v6040
        %v6225 = vpop.f32.mrb[0].mxu0
        %v6226 = vadd.f32 %v6093, %v6225
        %v6227 = vpop.f32.mrb[0].mxu0
        %v6228 = vpop.f32.mrb[0].mxu0
        %v6229 = vadd.f32 %v6093, %v6228
        %v6230 = vpop.f32.mrb[0].mxu0
        %6231 = vmatprep.mubr.bf16.mxu0 %v6043
        %6232 = vmatmul.mubr.bf16.gmra.mrb[0].mxu0 %v6042
        %v6233 = vpop.f32.mrb[0].mxu0
        %v6234 = vadd.f32 %v6093, %v6233
        %v6235 = vpop.f32.mrb[0].mxu0
        %v6236 = vpop.f32.mrb[0].mxu0
        %v6237 = vadd.f32 %v6093, %v6236
        %v6238 = vpop.f32.mrb[0].mxu0
        %6239 = vmatprep.mubr.bf16.mxu0 %v6045
        %6240 = vmatmul.mubr.bf16.gmra.mrb[0].mxu0 %v6044
        %v6241 = vpop.f32.mrb[0].mxu0
        %v6242 = vadd.f32 %v6093, %v6241
        %v6243 = vpop.f32.mrb[0].mxu0
        %v6244 = vpop.f32.mrb[0].mxu0
        %v6245 = vadd.f32 %v6093, %v6244
        %v6246 = vpop.f32.mrb[0].mxu0
        %6247 = vmatprep.mubr.bf16.mxu0 %v6047
        %6248 = vmatmul.mubr.bf16.gmra.mrb[0].mxu0 %v6046
        %v6249 = vpop.f32.mrb[0].mxu0
        %v6250 = vadd.f32 %v6093, %v6249
        %v6251 = vpop.f32.mrb[0].mxu0
        %v6252 = vpop.f32.mrb[0].mxu0
        %v6253 = vadd.f32 %v6093, %v6252
        %v6254 = vpop.f32.mrb[0].mxu0
        %6255 = vmatprep.mubr.bf16.mxu0 %v6049
        %6256 = vmatmul.mubr.bf16.gmra.mrb[0].mxu0 %v6048
        %v6257 = vpop.f32.mrb[0].mxu0
        %v6258 = vadd.f32 %v6093, %v6257
        %v6259 = vpop.f32.mrb[0].mxu0
        %v6260 = vpop.f32.mrb[0].mxu0
        %v6261 = vadd.f32 %v6093, %v6260
        %v6262 = vpop.f32.mrb[0].mxu0
        %6263 = vmatprep.mubr.bf16.mxu0 %v6051
        %6264 = vmatmul.mubr.bf16.gmra.mrb[0].mxu0 %v6050
        %v6265 = vpop.f32.mrb[0].mxu0
        %v6266 = vadd.f32 %v6093, %v6265
        %v6267 = vpop.f32.mrb[0].mxu0
        %v6268 = vpop.f32.mrb[0].mxu0
        %v6269 = vadd.f32 %v6093, %v6268
        %v6270 = vpop.f32.mrb[0].mxu0
        %6271 = vmatprep.mubr.bf16.mxu0 %v6053
        %6272 = vmatmul.mubr.bf16.gmra.mrb[0].mxu0 %v6052
        %v6273 = vpop.f32.mrb[0].mxu0
        %v6274 = vadd.f32 %v6093, %v6273
        %v6275 = vpop.f32.mrb[0].mxu0
        %v6276 = vpop.f32.mrb[0].mxu0
        %v6277 = vadd.f32 %v6093, %v6276
        %v6278 = vpop.f32.mrb[0].mxu0
        %6279 = vmatprep.mubr.bf16.mxu0 %v6055
        %6280 = vmatmul.mubr.bf16.gmra.mrb[0].mxu0 %v6054
        %v6281 = vpop.f32.mrb[0].mxu0
        %v6282 = vadd.f32 %v6093, %v6281
        %v6283 = vpop.f32.mrb[0].mxu0
        %v6284 = vpop.f32.mrb[0].mxu0
        %v6285 = vadd.f32 %v6093, %v6284
        %v6286 = vpop.f32.mrb[0].mxu0
        %6287 = vdwg.mxu0
        %v6288 = vxor.u32 %v6226, 2147483648
        %v6289 = vxor.u32 %v6229, 2147483648
        %v6290 = vxor.u32 %v6234, 2147483648
        %v6291 = vxor.u32 %v6237, 2147483648
        %v6292 = vxor.u32 %v6242, 2147483648
        %v6293 = vxor.u32 %v6245, 2147483648
        %v6294 = vxor.u32 %v6250, 2147483648
        %v6295 = vxor.u32 %v6253, 2147483648
        %v6296 = vxor.u32 %v6258, 2147483648
        %v6297 = vxor.u32 %v6261, 2147483648
        %v6298 = vxor.u32 %v6266, 2147483648
        %v6299 = vxor.u32 %v6269, 2147483648
        %v6300 = vxor.u32 %v6274, 2147483648
        %v6301 = vxor.u32 %v6277, 2147483648
        %v6302 = vxor.u32 %v6282, 2147483648
        %v6303 = vxor.u32 %v6285, 2147483648
        %v6304 = vmul.f32 %v6288, 1.442695
        %v6305 = vpow.pop %v6304
        %v6306 = vmul.f32 %v6289, 1.442695
        %v6307 = vpow.pop %v6306
        %v6308 = vmul.f32 %v6290, 1.442695
        %v6309 = vpow.pop %v6308
        %v6310 = vmul.f32 %v6291, 1.442695
        %v6311 = vpow.pop %v6310
        %v6312 = vmul.f32 %v6292, 1.442695
        %v6313 = vpow.pop %v6312
        %v6314 = vmul.f32 %v6293, 1.442695
        %v6315 = vpow.pop %v6314
        %v6316 = vmul.f32 %v6294, 1.442695
        %v6317 = vpow.pop %v6316
        %v6318 = vmul.f32 %v6295, 1.442695
        %v6319 = vpow.pop %v6318
        %v6320 = vmul.f32 %v6296, 1.442695
        %v6321 = vpow.pop %v6320
        %v6322 = vmul.f32 %v6297, 1.442695
        %v6323 = vpow.pop %v6322
        %v6324 = vmul.f32 %v6298, 1.442695
        %v6325 = vpow.pop %v6324
        %v6326 = vmul.f32 %v6299, 1.442695
        %v6327 = vpow.pop %v6326
        %v6328 = vmul.f32 %v6300, 1.442695
        %v6329 = vpow.pop %v6328
        %v6330 = vmul.f32 %v6301, 1.442695
        %v6331 = vpow.pop %v6330
        %v6332 = vmul.f32 %v6302, 1.442695
        %v6333 = vpow.pop %v6332
        %v6334 = vmul.f32 %v6303, 1.442695
        %v6335 = vpow.pop %v6334
        %v6336 = vadd.f32 %v6305, 1.0
        %v6337 = vadd.f32 %v6307, 1.0
        %v6338 = vadd.f32 %v6309, 1.0
        %v6339 = vadd.f32 %v6311, 1.0
        %v6340 = vadd.f32 %v6313, 1.0
        %v6341 = vadd.f32 %v6315, 1.0
        %v6342 = vadd.f32 %v6317, 1.0
        %v6343 = vadd.f32 %v6319, 1.0
        %v6344 = vadd.f32 %v6321, 1.0
        %v6345 = vadd.f32 %v6323, 1.0
        %v6346 = vadd.f32 %v6325, 1.0
        %v6347 = vadd.f32 %v6327, 1.0
        %v6348 = vadd.f32 %v6329, 1.0
        %v6349 = vadd.f32 %v6331, 1.0
        %v6350 = vadd.f32 %v6333, 1.0
        %v6351 = vadd.f32 %v6335, 1.0
        %v6352 = vrcp.pop %v6336
        %v6353 = vmul.f32 1.0, %v6352
        %v6354 = vrcp.pop %v6337
        %v6355 = vmul.f32 1.0, %v6354
        %v6356 = vrcp.pop %v6338
        %v6357 = vmul.f32 1.0, %v6356
        %v6358 = vrcp.pop %v6339
        %v6359 = vmul.f32 1.0, %v6358
        %v6360 = vrcp.pop %v6340
        %v6361 = vmul.f32 1.0, %v6360
        %v6362 = vrcp.pop %v6341
        %v6363 = vmul.f32 1.0, %v6362
        %v6364 = vrcp.pop %v6342
        %v6365 = vmul.f32 1.0, %v6364
        %v6366 = vrcp.pop %v6343
        %v6367 = vmul.f32 1.0, %v6366
        %v6368 = vrcp.pop %v6344
        %v6369 = vmul.f32 1.0, %v6368
        %v6370 = vrcp.pop %v6345
        %v6371 = vmul.f32 1.0, %v6370
        %v6372 = vrcp.pop %v6346
        %v6373 = vmul.f32 1.0, %v6372
        %v6374 = vrcp.pop %v6347
        %v6375 = vmul.f32 1.0, %v6374
        %v6376 = vrcp.pop %v6348
        %v6377 = vmul.f32 1.0, %v6376
        %v6378 = vrcp.pop %v6349
        %v6379 = vmul.f32 1.0, %v6378
        %v6380 = vrcp.pop %v6350
        %v6381 = vmul.f32 1.0, %v6380
        %v6382 = vrcp.pop %v6351
        %v6383 = vmul.f32 1.0, %v6382
        %6384 = vst [vmem:[%s370] sm:$0xff] %v6353
        %6385 = vst [vmem:[%s370 + $0x8] sm:$0xff] %v6355
        %6386 = vst [vmem:[%s370 + $0x10] sm:$0xff] %v6357
        %6387 = vst [vmem:[%s370 + $0x18] sm:$0xff] %v6359
        %6388 = vst [vmem:[%s370 + $0x20] sm:$0xff] %v6361
        %6389 = vst [vmem:[%s370 + $0x28] sm:$0xff] %v6363
        %6390 = vst [vmem:[%s370 + $0x30] sm:$0xff] %v6365
        %6391 = vst [vmem:[%s370 + $0x38] sm:$0xff] %v6367
        %6392 = vst [vmem:[%s370 + $0x40] sm:$0xff] %v6369
        %6393 = vst [vmem:[%s370 + $0x48] sm:$0xff] %v6371
        %6394 = vst [vmem:[%s370 + $0x50] sm:$0xff] %v6373
        %6395 = vst [vmem:[%s370 + $0x58] sm:$0xff] %v6375
        %6396 = vst [vmem:[%s370 + $0x60] sm:$0xff] %v6377
        %6397 = vst [vmem:[%s370 + $0x68] sm:$0xff] %v6379
        %6398 = vst [vmem:[%s370 + $0x70] sm:$0xff] %v6381
        %6399 = vst [vmem:[%s370 + $0x78] sm:$0xff] %v6383
        %s6400 = sand.u32 %s227, 1
        %s6401 = scalar_lea.sflag [#allocation4], %s6400
        %s6402 = sand.u32 %s227, 1
        %s6403 = smul.addr %s6402, 128
        %s6404 = scalar_lea.vmem [#allocation8], %s6403
        // Predicated region
        $region69: #{tpu_custom_call.1} parent=55 // pred_check
          %p6405 = pneg %p237
        $region70: #{tpu_custom_call.1} parent=55 // pred_check_branch
          %6407 = sbr.rel (%p6405) target = $region72
        $region71: #{tpu_custom_call.1} parent=55 // pred_region
          %s6408 = smul.u32 16, %s25
          %s6410 = ssub.s32 2048, 2048
          %6411 = vsyncadd %s6401, %s6410
          %s6412 = smul.addr %s6408, 128
          %s6413 = scalar_lea.hbm %s9, %s6412
          %s6414 = sshll.u32 %s6404, 4
          %s6415 = int_to_ptr.vmem [resolvable:$true] %s6414
          %6420 = dma.vmem_to_hbm [thread:$0]  %s6415, 2048, %s6413, %s6401, 128, 128, 8
        $region72: #{tpu_custom_call.1} parent=55 // pred_fallthru
          _
      $region56: #{tpu_custom_call.1} parent=5 // pred_fallthru
        _
      %p6421 = scmp.le.s32.totalorder 2, %s20
      // Predicated region
      $region73: #{tpu_custom_call.1} parent=5 // pred_check
        %p6422 = pneg %p6421
      $region74: #{tpu_custom_call.1} parent=5 // pred_check_branch
        %6424 = sbr.rel (%p6422) target = $region76
      $region75: #{tpu_custom_call.1} parent=5 // pred_region
        %s6425 = ssub.s32 %s20, 2
        // Predicated region
        $region77: #{tpu_custom_call.1} parent=75 // pred_check
          %p6426 = pneg %p243
        $region78: #{tpu_custom_call.1} parent=75 // pred_check_branch
          %6428 = sbr.rel (%p6426) target = $region80
        $region79: #{tpu_custom_call.1} parent=75 // pred_region
          %s6429 = sand.u32 %s228, 1
          %s6430 = scalar_lea.sflag [#allocation4], %s6429
          %s6431 = sand.u32 %s228, 1
          %s6432 = smul.addr %s6431, 128
          %s6433 = scalar_lea.vmem [#allocation8], %s6432
          %6434 = dma.done %s6430, 2048
        $region80: #{tpu_custom_call.1} parent=75 // pred_fallthru
          _
      $region76: #{tpu_custom_call.1} parent=5 // pred_fallthru
        _
    $region6: #{tpu_custom_call.1} parent=1 // loop_footer
      %s24 = sadd.s32 1, %s20
    $region7: #{tpu_custom_call.1} parent=1 // loop_footer_branch
      %19 = sbr.rel target = $region3
    $region8: #{tpu_custom_call.1} parent=1 // loop_exit
      _
    %6435 = vsyncpa [#allocation3], 1
    %s6436 = scalar_lea.sflag [#allocation3], 1
    %6437 = vsyncpa %s6436, 1
    %6438 = vsyncpa [#allocation6], 1
    %6439 = vsyncpa [#allocation4], 1
    %s6440 = scalar_lea.sflag [#allocation4], 1
    %6441 = vsyncpa %s6440, 1

</llo_original>
